<compile_context>
chip_gen: v7x
topology: tpu7x:2x2x1
jax: 0.10.0
libtpu: 0.0.40
codegen_flags: <defaults>
</compile_context>

<pallas_src>
import functools

import jax
import jax.numpy as jnp
from jax import lax
from jax.experimental import pallas as pl
from jax.experimental.pallas import tpu as pltpu

EPS = 1e-5
C = 128          # lane-padded channel width
OFF = 2          # row offset of valid data inside the scratch buffers (>= max pad)
LBUF = 24        # scratch buffer length (>= OFF + 16 + max pad, multiple of 8)
NEG_SLOPE = 0.2


# --------------------------------- kernel -----------------------------------

def _generator_kernel(x_ref, w1_ref, b1_ref, w2_ref, b2_ref,
                      rw_ref, rg_ref, rb_ref,
                      dw1_ref, dg1_ref, db1_ref, dw2_ref,
                      o_ref, buf_a, buf_b, *, n_res, conv_dim, in_channels):
    f32 = jnp.float32
    bf16 = jnp.bfloat16
    N = x_ref.shape[0]
    D = 2 * conv_dim

    # One-time memset: every row that is never (re)written stays exactly zero,
    # so padded reads of downstream layers see true zero halos without any
    # per-layer zero stores.
    buf_a[...] = jnp.zeros(buf_a.shape, buf_a.dtype)
    buf_b[...] = jnp.zeros(buf_b.shape, buf_b.dtype)

    # trace-time bookkeeping: number of potentially-nonzero rows at [OFF, ...)
    dirty = {id(buf_a): 0, id(buf_b): 0}

    iota_cache = {}

    def lane_iota(rows):
        # hoist/reuse the lane-index iota per row count (no CSE of broadcasts)
        if rows not in iota_cache:
            iota_cache[rows] = lax.broadcasted_iota(jnp.int32, (rows, C), 1)
        return iota_cache[rows]

    def bcat(parts):
        return parts[0] if len(parts) == 1 else jnp.concatenate(parts, axis=0)

    def gather_patch(src_ref, start, Lout, K, Cin):
        # Tap k = source rows shifted by k, batched over N along sublanes.
        # The producer already replicated its channels at lane offsets
        # 0, Cin, 2*Cin, ..., so the patch is just K-1 lane selects and feeds
        # the MXU as a single 128-wide contraction.
        taps = [bcat([src_ref[n, pl.ds(start + k, Lout), :] for n in range(N)])
                for k in range(K)]
        lane = lane_iota(N * Lout)
        patch = taps[K - 1]
        for k in range(K - 2, -1, -1):
            patch = jnp.where(lane < (k + 1) * Cin, taps[k], patch)
        return patch.astype(bf16)        # single cast per layer, right before MXU

    def conv_layer(src_ref, dst_ref, *, L_in, K, Cin, pad, w, bias=None,
                   gamma=None, beta=None, act="none", res_ref=None,
                   src_is_input=False, dst_is_output=False):
        Lout = L_in + 2 * pad - K + 1
        rows = N * Lout
        start = (0 if src_is_input else OFF) - pad   # never negative (OFF >= pad)

        # ---- convolution: ONE (N*Lout, 128) x (128, 128) MXU matmul ----
        patch = gather_patch(src_ref, start, Lout, K, Cin)
        y = jnp.dot(patch, w, preferred_element_type=f32)
        if bias is not None:
            y = y + bias

        # ---- BatchNorm1d, training mode (batch stats), fused single pass ----
        if gamma is not None:
            inv = 1.0 / float(rows)
            mean = y.sum(axis=0, keepdims=True) * inv
            var = jnp.maximum((y * y).sum(axis=0, keepdims=True) * inv
                              - mean * mean, 0.0)          # biased var (training)
            scale = lax.rsqrt(var + EPS) * gamma
            shift = beta - mean * scale
            y = y * scale + shift

        # ---- activation ----
        if act == "leaky":
            y = jnp.maximum(y, NEG_SLOPE * y)
        elif act == "relu":
            y = jnp.maximum(y, 0.0)
        elif act == "tanh":
            y = jnp.tanh(y)

        # ---- residual (read BEFORE any store: dst may alias res_ref) ----
        if res_ref is not None:
            res = bcat([res_ref[n, pl.ds(OFF, Lout), :] for n in range(N)])
            y = y + res

        # ---- store ----
        if dst_is_output:
            for n in range(N):
                dst_ref[n] = y[n * Lout:(n + 1) * Lout].astype(dst_ref.dtype)
        else:
            for n in range(N):
                dst_ref[n, pl.ds(OFF, Lout), :] = y[n * Lout:(n + 1) * Lout]
            stale = dirty[id(dst_ref)] - Lout
            if stale > 0:                 # re-zero tail rows left by a longer write
                for n in range(N):
                    dst_ref[n, pl.ds(OFF + Lout, stale), :] = jnp.zeros(
                        (stale, C), dst_ref.dtype)
            dirty[id(dst_ref)] = Lout
        return Lout

    L = x_ref.shape[1]

    # conv1 + LeakyReLU(0.2)
    L = conv_layer(x_ref, buf_a, L_in=L, K=2, Cin=in_channels, pad=0,
                   w=w1_ref[...], bias=b1_ref[...], act="leaky",
                   src_is_input=True)
    # conv2 + LeakyReLU(0.2)
    L = conv_layer(buf_a, buf_b, L_in=L, K=2, Cin=conv_dim, pad=0,
                   w=w2_ref[...], bias=b2_ref[...], act="leaky")
    # residual blocks ("out" lives in buf_b throughout)
    for r in range(n_res):
        conv_layer(buf_b, buf_a, L_in=L, K=3, Cin=D, pad=1,
                   w=rw_ref[2 * r], gamma=rg_ref[2 * r], beta=rb_ref[2 * r],
                   act="relu")
        conv_layer(buf_a, buf_b, L_in=L, K=3, Cin=D, pad=1,
                   w=rw_ref[2 * r + 1], gamma=rg_ref[2 * r + 1],
                   beta=rb_ref[2 * r + 1], act="none", res_ref=buf_b)
    # deconv1 (stride 1, pad 1) == conv(flipped kernel, pad 3-1-1=1) + BN + ReLU
    L = conv_layer(buf_b, buf_a, L_in=L, K=3, Cin=D, pad=1,
                   w=dw1_ref[...], gamma=dg1_ref[...], beta=db1_ref[...],
                   act="relu")
    # deconv2 (stride 1, pad 0) == conv(flipped kernel, pad 3-1-0=2) + tanh
    conv_layer(buf_a, o_ref, L_in=L, K=3, Cin=conv_dim, pad=2,
               w=dw2_ref[...], act="tanh", dst_is_output=True)


# ----------------------------- parameter packing -----------------------------

def _pack_conv_w(w_oik, rep_offsets):
    """torch Conv1d weight (Cout, Cin, K) -> (128, 128) bf16.

    Row  k*Cin + ci  <-> tap k, input channel ci (matches the patch layout).
    Cols off + co    <-> output channel co, replicated at every lane offset in
    rep_offsets (the offsets the consumer layer's taps read from)."""
    Cout, Cin, K = w_oik.shape
    w = jnp.transpose(w_oik, (2, 1, 0))                       # (K, Cin, Cout)
    mat = jnp.zeros((C, C), jnp.float32)
    for k in range(K):
        for off in rep_offsets:
            mat = mat.at[k * Cin:(k + 1) * Cin, off:off + Cout].set(w[k])
    return mat.astype(jnp.bfloat16)


def _pack_deconv_w(w_iok, rep_offsets):
    """torch ConvTranspose1d weight (Cin, Cout, K): stride-1 deconv == conv with
    the flipped kernel, so build the equivalent conv weight and pack it."""
    w_conv = jnp.transpose(w_iok[:, :, ::-1], (1, 0, 2))      # (Cout, Cin, K)
    return _pack_conv_w(w_conv, rep_offsets)


def _pack_vec(v, rep_offsets):
    """(Cout,) -> (1, 128) f32, replicated at rep_offsets, exact zero elsewhere."""
    n = v.shape[-1]
    out = jnp.zeros((1, C), jnp.float32)
    for off in rep_offsets:
        out = out.at[0, off:off + n].set(v)
    return out


def init_generator_params(key, conv_dim=16, n_res_blocks=4, in_channels=24):
    f32 = jnp.float32
    Cd, D = conv_dim, 2 * conv_dim
    keys = iter(jax.random.split(key, 32))
    p = {}

    # replication = lane offsets the *consumer* layer's taps read from
    rep_for_conv2 = tuple(k * Cd for k in range(2))   # conv1 -> conv2 (K=2, Cin=Cd)
    rep_for_res = tuple(k * D for k in range(3))      # -> res / deconv1 (K=3, Cin=D)
    rep_for_dec2 = tuple(k * Cd for k in range(3))    # deconv1 -> deconv2 (K=3, Cin=Cd)

    # conv1: Conv1d(24, Cd, 2); per spec weight ~ randn (scaled), bias = 0
    p["w1"] = _pack_conv_w(
        jax.random.normal(next(keys), (Cd, in_channels, 2), f32) * 0.2,
        rep_for_conv2)
    p["b1"] = _pack_vec(jnp.zeros((Cd,), f32), rep_for_conv2)

    # conv2: Conv1d(Cd, D, 2), bias=True
    p["w2"] = _pack_conv_w(
        jax.random.normal(next(keys), (D, Cd, 2), f32) * 0.2, rep_for_res)
    p["b2"] = _pack_vec(jax.random.normal(next(keys), (D,), f32) * 0.05,
                        rep_for_res)

    # residual blocks: 2 x [Conv1d(D, D, 3, p=1, bias=False) + BN] each
    rw, rg, rb = [], [], []
    for _ in range(n_res_blocks):
        for _j in range(2):
            rw.append(_pack_conv_w(
                jax.random.normal(next(keys), (D, D, 3), f32) * 0.1, rep_for_res))
            rg.append(_pack_vec(jnp.ones((D,), f32), rep_for_res))
            rb.append(_pack_vec(jnp.zeros((D,), f32), rep_for_res))
    p["rw"] = jnp.stack(rw)                                   # (2*nres, 128, 128) bf16
    p["rg"] = jnp.stack(rg)                                   # (2*nres, 1, 128) f32
    p["rb"] = jnp.stack(rb)

    # deconv1: ConvTranspose1d(D, Cd, 3, s=1, p=1, bias=False) + BN
    p["dw1"] = _pack_deconv_w(
        jax.random.normal(next(keys), (D, Cd, 3), f32) * 0.1, rep_for_dec2)
    p["dg1"] = _pack_vec(jnp.ones((Cd,), f32), rep_for_dec2)
    p["db1"] = _pack_vec(jnp.zeros((Cd,), f32), rep_for_dec2)

    # deconv2: ConvTranspose1d(Cd, 24, 3, s=1, p=0, bias=False), no BN, no replication
    p["dw2"] = _pack_deconv_w(
        jax.random.normal(next(keys), (Cd, in_channels, 3), f32) * 0.1, (0,))
    return p


# ------------------------------- forward pass --------------------------------

def generator_forward(x_nchw, p, conv_dim=16):
    """x_nchw: (N, 24, L) as in PyTorch.  Returns (N, 24, L)."""
    f32 = jnp.float32
    N, Cin, L = x_nchw.shape
    x = jnp.transpose(x_nchw, (0, 2, 1)).astype(f32)          # (N, L, Cin)
    # conv1 consumes its input with K=2 taps at lane offsets {0, Cin}; replicate
    # the channels once here (in-kernel producers replicate for free through the
    # packed weight columns).
    x = jnp.concatenate([x, x], axis=-1)                      # (N, L, 2*Cin)
    x = jnp.pad(x, ((0, 0), (0, 0), (0, C - 2 * Cin)))        # lane-pad to 128

    n_res = p["rw"].shape[0] // 2
    kernel = functools.partial(_generator_kernel, n_res=n_res,
                               conv_dim=conv_dim, in_channels=Cin)

    out = pl.pallas_call(
        kernel,
        out_shape=jax.ShapeDtypeStruct((N, L, C), f32),
        grid=(1,),
        in_specs=[
            pl.BlockSpec((N, L, C), lambda i: (0, 0, 0)),         # x
            pl.BlockSpec(p["w1"].shape, lambda i: (0, 0)),        # conv1 w
            pl.BlockSpec(p["b1"].shape, lambda i: (0, 0)),        # conv1 b
            pl.BlockSpec(p["w2"].shape, lambda i: (0, 0)),        # conv2 w
            pl.BlockSpec(p["b2"].shape, lambda i: (0, 0)),        # conv2 b
            pl.BlockSpec(p["rw"].shape, lambda i: (0, 0, 0)),     # res weights
            pl.BlockSpec(p["rg"].shape, lambda i: (0, 0, 0)),     # res gammas
            pl.BlockSpec(p["rb"].shape, lambda i: (0, 0, 0)),     # res betas
            pl.BlockSpec(p["dw1"].shape, lambda i: (0, 0)),       # deconv1 w
            pl.BlockSpec(p["dg1"].shape, lambda i: (0, 0)),       # deconv1 gamma
            pl.BlockSpec(p["db1"].shape, lambda i: (0, 0)),       # deconv1 beta
            pl.BlockSpec(p["dw2"].shape, lambda i: (0, 0)),       # deconv2 w
        ],
        out_specs=pl.BlockSpec((N, L, C), lambda i: (0, 0, 0)),
        scratch_shapes=[pltpu.VMEM((N, LBUF, C), f32),            # ping
                        pltpu.VMEM((N, LBUF, C), f32)],           # pong
        compiler_params=pltpu.CompilerParams(
            dimension_semantics=("arbitrary",)),
    )(x, p["w1"], p["b1"], p["w2"], p["b2"],
      p["rw"], p["rg"], p["rb"],
      p["dw1"], p["dg1"], p["db1"], p["dw2"])

    out = out[:, :, :Cin]                                     # drop padded lanes
    return jnp.transpose(out, (0, 2, 1))                      # -> (N, 24, L)


if __name__ == "__main__":
    key = jax.random.PRNGKey(0)
    k_param, k_x = jax.random.split(key)

    N, C_IN, L = 2, 24, 16                       # x_delta: (N, 24, L) NCW
    x_delta = jax.random.normal(k_x, (N, C_IN, L), jnp.float32)

    params = init_generator_params(k_param, conv_dim=16, n_res_blocks=4,
                                   in_channels=C_IN)

    y = generator_forward(x_delta, params, conv_dim=16)
    y = jax.block_until_ready(y)

    assert y.shape == (N, C_IN, L), y.shape      # conv1/conv2 -2, deconv2 +2
    assert bool(jnp.all(jnp.isfinite(y)))
    assert bool(jnp.all(jnp.abs(y) <= 1.0))      # tanh output range
    print("KERNEL_OK")
</pallas_src>

<mosaic_0001>
module attributes {stable_mosaic.version = 11 : i64} {
  func.func @_generator_kernel(%arg0: i32, %arg1: memref<2x16x128xf32, #tpu.memory_space<vmem>>, %arg2: memref<128x128xbf16, #tpu.memory_space<vmem>>, %arg3: memref<1x128xf32, #tpu.memory_space<vmem>>, %arg4: memref<128x128xbf16, #tpu.memory_space<vmem>>, %arg5: memref<1x128xf32, #tpu.memory_space<vmem>>, %arg6: memref<8x128x128xbf16, #tpu.memory_space<vmem>>, %arg7: memref<8x1x128xf32, #tpu.memory_space<vmem>>, %arg8: memref<8x1x128xf32, #tpu.memory_space<vmem>>, %arg9: memref<128x128xbf16, #tpu.memory_space<vmem>>, %arg10: memref<1x128xf32, #tpu.memory_space<vmem>>, %arg11: memref<1x128xf32, #tpu.memory_space<vmem>>, %arg12: memref<128x128xbf16, #tpu.memory_space<vmem>>, %arg13: memref<2x16x128xf32, #tpu.memory_space<vmem>>, %arg14: memref<2x24x128xf32, #tpu.memory_space<vmem>>, %arg15: memref<2x24x128xf32, #tpu.memory_space<vmem>>) attributes {dimension_semantics = [#tpu.dimension_semantics<arbitrary>], iteration_bounds = array<i64: 1>, scalar_prefetch = 0 : i64, scratch_operands = 2 : i64, tpu.core_type = #tpu.core_type<tc>, window_params = [{pipeline_mode = #tpu.pipeline_mode<synchronous>, transform_indices = @transform_0, window_bounds = array<i64: 2, 16, 128>}, {pipeline_mode = #tpu.pipeline_mode<synchronous>, transform_indices = @transform_1, window_bounds = array<i64: 128, 128>}, {pipeline_mode = #tpu.pipeline_mode<synchronous>, transform_indices = @transform_2, window_bounds = array<i64: 1, 128>}, {pipeline_mode = #tpu.pipeline_mode<synchronous>, transform_indices = @transform_3, window_bounds = array<i64: 128, 128>}, {pipeline_mode = #tpu.pipeline_mode<synchronous>, transform_indices = @transform_4, window_bounds = array<i64: 1, 128>}, {pipeline_mode = #tpu.pipeline_mode<synchronous>, transform_indices = @transform_5, window_bounds = array<i64: 8, 128, 128>}, {pipeline_mode = #tpu.pipeline_mode<synchronous>, transform_indices = @transform_6, window_bounds = array<i64: 8, 1, 128>}, {pipeline_mode = #tpu.pipeline_mode<synchronous>, transform_indices = @transform_7, window_bounds = array<i64: 8, 1, 128>}, {pipeline_mode = #tpu.pipeline_mode<synchronous>, transform_indices = @transform_8, window_bounds = array<i64: 128, 128>}, {pipeline_mode = #tpu.pipeline_mode<synchronous>, transform_indices = @transform_9, window_bounds = array<i64: 1, 128>}, {pipeline_mode = #tpu.pipeline_mode<synchronous>, transform_indices = @transform_10, window_bounds = array<i64: 1, 128>}, {pipeline_mode = #tpu.pipeline_mode<synchronous>, transform_indices = @transform_11, window_bounds = array<i64: 128, 128>}, {pipeline_mode = #tpu.pipeline_mode<synchronous>, transform_indices = @transform_12, window_bounds = array<i64: 2, 16, 128>}]} {
    %cst = arith.constant 0.000000e+00 : f32
    %0 = vector.broadcast %cst : f32 to vector<2x24x128xf32>
    %c0 = arith.constant 0 : index
    %c0_0 = arith.constant 0 : index
    %c0_1 = arith.constant 0 : index
    %1 = vector.load %arg14[%c0, %c0_0, %c0_1] : memref<2x24x128xf32, #tpu.memory_space<vmem>>, vector<2x24x128xf32>
    tpu.vector_store %arg14[%c0, %c0_0, %c0_1], %0 {strides = array<i32>} : memref<2x24x128xf32, #tpu.memory_space<vmem>>, vector<2x24x128xf32>,
    %cst_2 = arith.constant 0.000000e+00 : f32
    %2 = vector.broadcast %cst_2 : f32 to vector<2x24x128xf32>
    %c0_3 = arith.constant 0 : index
    %c0_4 = arith.constant 0 : index
    %c0_5 = arith.constant 0 : index
    %3 = vector.load %arg15[%c0_3, %c0_4, %c0_5] : memref<2x24x128xf32, #tpu.memory_space<vmem>>, vector<2x24x128xf32>
    tpu.vector_store %arg15[%c0_3, %c0_4, %c0_5], %2 {strides = array<i32>} : memref<2x24x128xf32, #tpu.memory_space<vmem>>, vector<2x24x128xf32>,
    %c0_6 = arith.constant 0 : index
    %c0_7 = arith.constant 0 : index
    %4 = vector.load %arg2[%c0_6, %c0_7] : memref<128x128xbf16, #tpu.memory_space<vmem>>, vector<128x128xbf16>
    %c0_8 = arith.constant 0 : index
    %c0_9 = arith.constant 0 : index
    %5 = vector.load %arg3[%c0_8, %c0_9] : memref<1x128xf32, #tpu.memory_space<vmem>>, vector<1x128xf32>
    %c0_10 = arith.constant 0 : index
    %c0_11 = arith.constant 0 : index
    %c0_12 = arith.constant 0 : index
    %6 = vector.load %arg1[%c0_10, %c0_11, %c0_12] : memref<2x16x128xf32, #tpu.memory_space<vmem>>, vector<1x15x128xf32>
    %7 = vector.shape_cast %6 : vector<1x15x128xf32> to vector<15x128xf32>
    %c1 = arith.constant 1 : index
    %c0_13 = arith.constant 0 : index
    %c0_14 = arith.constant 0 : index
    %8 = vector.load %arg1[%c1, %c0_13, %c0_14] : memref<2x16x128xf32, #tpu.memory_space<vmem>>, vector<1x15x128xf32>
    %9 = vector.shape_cast %8 : vector<1x15x128xf32> to vector<15x128xf32>
    %10 = tpu.concatenate %7, %9 in 0 : vector<15x128xf32>, vector<15x128xf32> -> vector<30x128xf32>
    %c0_15 = arith.constant 0 : index
    %c1_16 = arith.constant 1 : index
    %c0_17 = arith.constant 0 : index
    %11 = vector.load %arg1[%c0_15, %c1_16, %c0_17] : memref<2x16x128xf32, #tpu.memory_space<vmem>>, vector<1x15x128xf32>
    %12 = vector.shape_cast %11 : vector<1x15x128xf32> to vector<15x128xf32>
    %c1_18 = arith.constant 1 : index
    %c1_19 = arith.constant 1 : index
    %c0_20 = arith.constant 0 : index
    %13 = vector.load %arg1[%c1_18, %c1_19, %c0_20] : memref<2x16x128xf32, #tpu.memory_space<vmem>>, vector<1x15x128xf32>
    %14 = vector.shape_cast %13 : vector<1x15x128xf32> to vector<15x128xf32>
    %15 = tpu.concatenate %12, %14 in 0 : vector<15x128xf32>, vector<15x128xf32> -> vector<30x128xf32>
    %16 = tpu.iota {dimensions = array<i32: 1>} : vector<30x128xi32>
    %c24_i32 = arith.constant 24 : i32
    %17 = vector.broadcast %c24_i32 : i32 to vector<30x128xi32>
    %18 = arith.cmpi slt, %16, %17 : vector<30x128xi32>
    %19 = arith.select %18, %10, %15 : vector<30x128xi1>, vector<30x128xf32>
    %20 = arith.truncf %19 : vector<30x128xf32> to vector<30x128xbf16>
    %cst_21 = arith.constant dense<0.000000e+00> : vector<30x128xf32>
    %21 = tpu.matmul %20, %4, %cst_21 {dimension_numbers = #tpu.dot_dimension_numbers<[1], [0], [0], [1], [0, 0, 1, 1], [], []>} : vector<30x128xbf16>, vector<128x128xbf16>, vector<30x128xf32> -> vector<30x128xf32>
    %22 = vector.broadcast %5 : vector<1x128xf32> to vector<30x128xf32>
    %23 = arith.addf %21, %22 : vector<30x128xf32>
    %cst_22 = arith.constant 2.000000e-01 : f32
    %24 = vector.broadcast %cst_22 : f32 to vector<30x128xf32>
    %25 = arith.mulf %24, %23 : vector<30x128xf32>
    %26 = arith.maximumf %23, %25 : vector<30x128xf32>
    %27 = vector.extract_strided_slice %26 {offsets = [0, 0], sizes = [15, 128], strides = [1, 1]} : vector<30x128xf32> to vector<15x128xf32>
    %c0_23 = arith.constant 0 : index
    %c2 = arith.constant 2 : index
    %c0_24 = arith.constant 0 : index
    %28 = vector.load %arg14[%c0_23, %c2, %c0_24] : memref<2x24x128xf32, #tpu.memory_space<vmem>>, vector<1x15x128xf32>
    %29 = vector.shape_cast %28 : vector<1x15x128xf32> to vector<15x128xf32>
    %30 = vector.shape_cast %27 : vector<15x128xf32> to vector<1x15x128xf32>
    tpu.vector_store %arg14[%c0_23, %c2, %c0_24], %30 {strides = array<i32>} : memref<2x24x128xf32, #tpu.memory_space<vmem>>, vector<1x15x128xf32>,
    %31 = vector.extract_strided_slice %26 {offsets = [15, 0], sizes = [15, 128], strides = [1, 1]} : vector<30x128xf32> to vector<15x128xf32>
    %c1_25 = arith.constant 1 : index
    %c2_26 = arith.constant 2 : index
    %c0_27 = arith.constant 0 : index
    %32 = vector.load %arg14[%c1_25, %c2_26, %c0_27] : memref<2x24x128xf32, #tpu.memory_space<vmem>>, vector<1x15x128xf32>
    %33 = vector.shape_cast %32 : vector<1x15x128xf32> to vector<15x128xf32>
    %34 = vector.shape_cast %31 : vector<15x128xf32> to vector<1x15x128xf32>
    tpu.vector_store %arg14[%c1_25, %c2_26, %c0_27], %34 {strides = array<i32>} : memref<2x24x128xf32, #tpu.memory_space<vmem>>, vector<1x15x128xf32>,
    %c0_28 = arith.constant 0 : index
    %c0_29 = arith.constant 0 : index
    %35 = vector.load %arg4[%c0_28, %c0_29] : memref<128x128xbf16, #tpu.memory_space<vmem>>, vector<128x128xbf16>
    %c0_30 = arith.constant 0 : index
    %c0_31 = arith.constant 0 : index
    %36 = vector.load %arg5[%c0_30, %c0_31] : memref<1x128xf32, #tpu.memory_space<vmem>>, vector<1x128xf32>
    %c0_32 = arith.constant 0 : index
    %c2_33 = arith.constant 2 : index
    %c0_34 = arith.constant 0 : index
    %37 = vector.load %arg14[%c0_32, %c2_33, %c0_34] : memref<2x24x128xf32, #tpu.memory_space<vmem>>, vector<1x14x128xf32>
    %38 = vector.shape_cast %37 : vector<1x14x128xf32> to vector<14x128xf32>
    %c1_35 = arith.constant 1 : index
    %c2_36 = arith.constant 2 : index
    %c0_37 = arith.constant 0 : index
    %39 = vector.load %arg14[%c1_35, %c2_36, %c0_37] : memref<2x24x128xf32, #tpu.memory_space<vmem>>, vector<1x14x128xf32>
    %40 = vector.shape_cast %39 : vector<1x14x128xf32> to vector<14x128xf32>
    %41 = tpu.concatenate %38, %40 in 0 : vector<14x128xf32>, vector<14x128xf32> -> vector<28x128xf32>
    %c0_38 = arith.constant 0 : index
    %c3 = arith.constant 3 : index
    %c0_39 = arith.constant 0 : index
    %42 = vector.load %arg14[%c0_38, %c3, %c0_39] : memref<2x24x128xf32, #tpu.memory_space<vmem>>, vector<1x14x128xf32>
    %43 = vector.shape_cast %42 : vector<1x14x128xf32> to vector<14x128xf32>
    %c1_40 = arith.constant 1 : index
    %c3_41 = arith.constant 3 : index
    %c0_42 = arith.constant 0 : index
    %44 = vector.load %arg14[%c1_40, %c3_41, %c0_42] : memref<2x24x128xf32, #tpu.memory_space<vmem>>, vector<1x14x128xf32>
    %45 = vector.shape_cast %44 : vector<1x14x128xf32> to vector<14x128xf32>
    %46 = tpu.concatenate %43, %45 in 0 : vector<14x128xf32>, vector<14x128xf32> -> vector<28x128xf32>
    %47 = tpu.iota {dimensions = array<i32: 1>} : vector<28x128xi32>
    %c16_i32 = arith.constant 16 : i32
    %48 = vector.broadcast %c16_i32 : i32 to vector<28x128xi32>
    %49 = arith.cmpi slt, %47, %48 : vector<28x128xi32>
    %50 = arith.select %49, %41, %46 : vector<28x128xi1>, vector<28x128xf32>
    %51 = arith.truncf %50 : vector<28x128xf32> to vector<28x128xbf16>
    %cst_43 = arith.constant dense<0.000000e+00> : vector<28x128xf32>
    %52 = tpu.matmul %51, %35, %cst_43 {dimension_numbers = #tpu.dot_dimension_numbers<[1], [0], [0], [1], [0, 0, 1, 1], [], []>} : vector<28x128xbf16>, vector<128x128xbf16>, vector<28x128xf32> -> vector<28x128xf32>
    %53 = vector.broadcast %36 : vector<1x128xf32> to vector<28x128xf32>
    %54 = arith.addf %52, %53 : vector<28x128xf32>
    %cst_44 = arith.constant 2.000000e-01 : f32
    %55 = vector.broadcast %cst_44 : f32 to vector<28x128xf32>
    %56 = arith.mulf %55, %54 : vector<28x128xf32>
    %57 = arith.maximumf %54, %56 : vector<28x128xf32>
    %58 = vector.extract_strided_slice %57 {offsets = [0, 0], sizes = [14, 128], strides = [1, 1]} : vector<28x128xf32> to vector<14x128xf32>
    %c0_45 = arith.constant 0 : index
    %c2_46 = arith.constant 2 : index
    %c0_47 = arith.constant 0 : index
    %59 = vector.load %arg15[%c0_45, %c2_46, %c0_47] : memref<2x24x128xf32, #tpu.memory_space<vmem>>, vector<1x14x128xf32>
    %60 = vector.shape_cast %59 : vector<1x14x128xf32> to vector<14x128xf32>
    %61 = vector.shape_cast %58 : vector<14x128xf32> to vector<1x14x128xf32>
    tpu.vector_store %arg15[%c0_45, %c2_46, %c0_47], %61 {strides = array<i32>} : memref<2x24x128xf32, #tpu.memory_space<vmem>>, vector<1x14x128xf32>,
    %62 = vector.extract_strided_slice %57 {offsets = [14, 0], sizes = [14, 128], strides = [1, 1]} : vector<28x128xf32> to vector<14x128xf32>
    %c1_48 = arith.constant 1 : index
    %c2_49 = arith.constant 2 : index
    %c0_50 = arith.constant 0 : index
    %63 = vector.load %arg15[%c1_48, %c2_49, %c0_50] : memref<2x24x128xf32, #tpu.memory_space<vmem>>, vector<1x14x128xf32>
    %64 = vector.shape_cast %63 : vector<1x14x128xf32> to vector<14x128xf32>
    %65 = vector.shape_cast %62 : vector<14x128xf32> to vector<1x14x128xf32>
    tpu.vector_store %arg15[%c1_48, %c2_49, %c0_50], %65 {strides = array<i32>} : memref<2x24x128xf32, #tpu.memory_space<vmem>>, vector<1x14x128xf32>,
    %c0_51 = arith.constant 0 : index
    %c0_52 = arith.constant 0 : index
    %c0_53 = arith.constant 0 : index
    %66 = vector.load %arg6[%c0_51, %c0_52, %c0_53] : memref<8x128x128xbf16, #tpu.memory_space<vmem>>, vector<1x128x128xbf16>
    %67 = vector.shape_cast %66 : vector<1x128x128xbf16> to vector<128x128xbf16>
    %c0_54 = arith.constant 0 : index
    %c0_55 = arith.constant 0 : index
    %c0_56 = arith.constant 0 : index
    %68 = vector.load %arg7[%c0_54, %c0_55, %c0_56] : memref<8x1x128xf32, #tpu.memory_space<vmem>>, vector<1x1x128xf32>
    %69 = vector.shape_cast %68 : vector<1x1x128xf32> to vector<1x128xf32>
    %c0_57 = arith.constant 0 : index
    %c0_58 = arith.constant 0 : index
    %c0_59 = arith.constant 0 : index
    %70 = vector.load %arg8[%c0_57, %c0_58, %c0_59] : memref<8x1x128xf32, #tpu.memory_space<vmem>>, vector<1x1x128xf32>
    %71 = vector.shape_cast %70 : vector<1x1x128xf32> to vector<1x128xf32>
    %c0_60 = arith.constant 0 : index
    %c1_61 = arith.constant 1 : index
    %c0_62 = arith.constant 0 : index
    %72 = vector.load %arg15[%c0_60, %c1_61, %c0_62] : memref<2x24x128xf32, #tpu.memory_space<vmem>>, vector<1x14x128xf32>
    %73 = vector.shape_cast %72 : vector<1x14x128xf32> to vector<14x128xf32>
    %c1_63 = arith.constant 1 : index
    %c1_64 = arith.constant 1 : index
    %c0_65 = arith.constant 0 : index
    %74 = vector.load %arg15[%c1_63, %c1_64, %c0_65] : memref<2x24x128xf32, #tpu.memory_space<vmem>>, vector<1x14x128xf32>
    %75 = vector.shape_cast %74 : vector<1x14x128xf32> to vector<14x128xf32>
    %76 = tpu.concatenate %73, %75 in 0 : vector<14x128xf32>, vector<14x128xf32> -> vector<28x128xf32>
    %c0_66 = arith.constant 0 : index
    %c2_67 = arith.constant 2 : index
    %c0_68 = arith.constant 0 : index
    %77 = vector.load %arg15[%c0_66, %c2_67, %c0_68] : memref<2x24x128xf32, #tpu.memory_space<vmem>>, vector<1x14x128xf32>
    %78 = vector.shape_cast %77 : vector<1x14x128xf32> to vector<14x128xf32>
    %c1_69 = arith.constant 1 : index
    %c2_70 = arith.constant 2 : index
    %c0_71 = arith.constant 0 : index
    %79 = vector.load %arg15[%c1_69, %c2_70, %c0_71] : memref<2x24x128xf32, #tpu.memory_space<vmem>>, vector<1x14x128xf32>
    %80 = vector.shape_cast %79 : vector<1x14x128xf32> to vector<14x128xf32>
    %81 = tpu.concatenate %78, %80 in 0 : vector<14x128xf32>, vector<14x128xf32> -> vector<28x128xf32>
    %c0_72 = arith.constant 0 : index
    %c3_73 = arith.constant 3 : index
    %c0_74 = arith.constant 0 : index
    %82 = vector.load %arg15[%c0_72, %c3_73, %c0_74] : memref<2x24x128xf32, #tpu.memory_space<vmem>>, vector<1x14x128xf32>
    %83 = vector.shape_cast %82 : vector<1x14x128xf32> to vector<14x128xf32>
    %c1_75 = arith.constant 1 : index
    %c3_76 = arith.constant 3 : index
    %c0_77 = arith.constant 0 : index
    %84 = vector.load %arg15[%c1_75, %c3_76, %c0_77] : memref<2x24x128xf32, #tpu.memory_space<vmem>>, vector<1x14x128xf32>
    %85 = vector.shape_cast %84 : vector<1x14x128xf32> to vector<14x128xf32>
    %86 = tpu.concatenate %83, %85 in 0 : vector<14x128xf32>, vector<14x128xf32> -> vector<28x128xf32>
    %c64_i32 = arith.constant 64 : i32
    %87 = vector.broadcast %c64_i32 : i32 to vector<28x128xi32>
    %88 = arith.cmpi slt, %47, %87 : vector<28x128xi32>
    %89 = arith.select %88, %81, %86 : vector<28x128xi1>, vector<28x128xf32>
    %c32_i32 = arith.constant 32 : i32
    %90 = vector.broadcast %c32_i32 : i32 to vector<28x128xi32>
    %91 = arith.cmpi slt, %47, %90 : vector<28x128xi32>
    %92 = arith.select %91, %76, %89 : vector<28x128xi1>, vector<28x128xf32>
    %93 = arith.truncf %92 : vector<28x128xf32> to vector<28x128xbf16>
    %cst_78 = arith.constant dense<0.000000e+00> : vector<28x128xf32>
    %94 = tpu.matmul %93, %67, %cst_78 {dimension_numbers = #tpu.dot_dimension_numbers<[1], [0], [0], [1], [0, 0, 1, 1], [], []>} : vector<28x128xbf16>, vector<128x128xbf16>, vector<28x128xf32> -> vector<28x128xf32>
    %cst_79 = arith.constant dense<0.000000e+00> : vector<128xf32>
    %95 = vector.multi_reduction <add>, %94, %cst_79 [0] : vector<28x128xf32> to vector<128xf32>
    %96 = vector.shape_cast %95 : vector<128xf32> to vector<1x128xf32>
    %cst_80 = arith.constant 0.0357142873 : f32
    %97 = vector.broadcast %cst_80 : f32 to vector<1x128xf32>
    %98 = arith.mulf %96, %97 : vector<1x128xf32>
    %99 = arith.mulf %94, %94 : vector<28x128xf32>
    %cst_81 = arith.constant dense<0.000000e+00> : vector<128xf32>
    %100 = vector.multi_reduction <add>, %99, %cst_81 [0] : vector<28x128xf32> to vector<128xf32>
    %101 = vector.shape_cast %100 : vector<128xf32> to vector<1x128xf32>
    %cst_82 = arith.constant 0.0357142873 : f32
    %102 = vector.broadcast %cst_82 : f32 to vector<1x128xf32>
    %103 = arith.mulf %101, %102 : vector<1x128xf32>
    %104 = arith.mulf %98, %98 : vector<1x128xf32>
    %105 = arith.subf %103, %104 : vector<1x128xf32>
    %cst_83 = arith.constant 0.000000e+00 : f32
    %106 = vector.broadcast %cst_83 : f32 to vector<1x128xf32>
    %107 = arith.maximumf %105, %106 : vector<1x128xf32>
    %cst_84 = arith.constant 9.99999974E-6 : f32
    %108 = vector.broadcast %cst_84 : f32 to vector<1x128xf32>
    %109 = arith.addf %107, %108 : vector<1x128xf32>
    %110 = math.rsqrt %109 : vector<1x128xf32>
    %111 = arith.mulf %110, %69 : vector<1x128xf32>
    %112 = arith.mulf %98, %111 : vector<1x128xf32>
    %113 = arith.subf %71, %112 : vector<1x128xf32>
    %114 = vector.broadcast %111 : vector<1x128xf32> to vector<28x128xf32>
    %115 = arith.mulf %94, %114 : vector<28x128xf32>
    %116 = vector.broadcast %113 : vector<1x128xf32> to vector<28x128xf32>
    %117 = arith.addf %115, %116 : vector<28x128xf32>
    %cst_85 = arith.constant 0.000000e+00 : f32
    %118 = vector.broadcast %cst_85 : f32 to vector<28x128xf32>
    %119 = arith.maximumf %117, %118 : vector<28x128xf32>
    %120 = vector.extract_strided_slice %119 {offsets = [0, 0], sizes = [14, 128], strides = [1, 1]} : vector<28x128xf32> to vector<14x128xf32>
    %c0_86 = arith.constant 0 : index
    %c2_87 = arith.constant 2 : index
    %c0_88 = arith.constant 0 : index
    %121 = vector.load %arg14[%c0_86, %c2_87, %c0_88] : memref<2x24x128xf32, #tpu.memory_space<vmem>>, vector<1x14x128xf32>
    %122 = vector.shape_cast %121 : vector<1x14x128xf32> to vector<14x128xf32>
    %123 = vector.shape_cast %120 : vector<14x128xf32> to vector<1x14x128xf32>
    tpu.vector_store %arg14[%c0_86, %c2_87, %c0_88], %123 {strides = array<i32>} : memref<2x24x128xf32, #tpu.memory_space<vmem>>, vector<1x14x128xf32>,
    %124 = vector.extract_strided_slice %119 {offsets = [14, 0], sizes = [14, 128], strides = [1, 1]} : vector<28x128xf32> to vector<14x128xf32>
    %c1_89 = arith.constant 1 : index
    %c2_90 = arith.constant 2 : index
    %c0_91 = arith.constant 0 : index
    %125 = vector.load %arg14[%c1_89, %c2_90, %c0_91] : memref<2x24x128xf32, #tpu.memory_space<vmem>>, vector<1x14x128xf32>
    %126 = vector.shape_cast %125 : vector<1x14x128xf32> to vector<14x128xf32>
    %127 = vector.shape_cast %124 : vector<14x128xf32> to vector<1x14x128xf32>
    tpu.vector_store %arg14[%c1_89, %c2_90, %c0_91], %127 {strides = array<i32>} : memref<2x24x128xf32, #tpu.memory_space<vmem>>, vector<1x14x128xf32>,
    %cst_92 = arith.constant 0.000000e+00 : f32
    %128 = vector.broadcast %cst_92 : f32 to vector<1x128xf32>
    %c0_93 = arith.constant 0 : index
    %c16 = arith.constant 16 : index
    %c0_94 = arith.constant 0 : index
    %129 = vector.load %arg14[%c0_93, %c16, %c0_94] : memref<2x24x128xf32, #tpu.memory_space<vmem>>, vector<1x1x128xf32>
    %130 = vector.shape_cast %129 : vector<1x1x128xf32> to vector<1x128xf32>
    %131 = vector.shape_cast %128 : vector<1x128xf32> to vector<1x1x128xf32>
    tpu.vector_store %arg14[%c0_93, %c16, %c0_94], %131 {strides = array<i32>} : memref<2x24x128xf32, #tpu.memory_space<vmem>>, vector<1x1x128xf32>,
    %cst_95 = arith.constant 0.000000e+00 : f32
    %132 = vector.broadcast %cst_95 : f32 to vector<1x128xf32>
    %c1_96 = arith.constant 1 : index
    %c16_97 = arith.constant 16 : index
    %c0_98 = arith.constant 0 : index
    %133 = vector.load %arg14[%c1_96, %c16_97, %c0_98] : memref<2x24x128xf32, #tpu.memory_space<vmem>>, vector<1x1x128xf32>
    %134 = vector.shape_cast %133 : vector<1x1x128xf32> to vector<1x128xf32>
    %135 = vector.shape_cast %132 : vector<1x128xf32> to vector<1x1x128xf32>
    tpu.vector_store %arg14[%c1_96, %c16_97, %c0_98], %135 {strides = array<i32>} : memref<2x24x128xf32, #tpu.memory_space<vmem>>, vector<1x1x128xf32>,
    %c1_99 = arith.constant 1 : index
    %c0_100 = arith.constant 0 : index
    %c0_101 = arith.constant 0 : index
    %136 = vector.load %arg6[%c1_99, %c0_100, %c0_101] : memref<8x128x128xbf16, #tpu.memory_space<vmem>>, vector<1x128x128xbf16>
    %137 = vector.shape_cast %136 : vector<1x128x128xbf16> to vector<128x128xbf16>
    %c1_102 = arith.constant 1 : index
    %c0_103 = arith.constant 0 : index
    %c0_104 = arith.constant 0 : index
    %138 = vector.load %arg7[%c1_102, %c0_103, %c0_104] : memref<8x1x128xf32, #tpu.memory_space<vmem>>, vector<1x1x128xf32>
    %139 = vector.shape_cast %138 : vector<1x1x128xf32> to vector<1x128xf32>
    %c1_105 = arith.constant 1 : index
    %c0_106 = arith.constant 0 : index
    %c0_107 = arith.constant 0 : index
    %140 = vector.load %arg8[%c1_105, %c0_106, %c0_107] : memref<8x1x128xf32, #tpu.memory_space<vmem>>, vector<1x1x128xf32>
    %141 = vector.shape_cast %140 : vector<1x1x128xf32> to vector<1x128xf32>
    %c0_108 = arith.constant 0 : index
    %c1_109 = arith.constant 1 : index
    %c0_110 = arith.constant 0 : index
    %142 = vector.load %arg14[%c0_108, %c1_109, %c0_110] : memref<2x24x128xf32, #tpu.memory_space<vmem>>, vector<1x14x128xf32>
    %143 = vector.shape_cast %142 : vector<1x14x128xf32> to vector<14x128xf32>
    %c1_111 = arith.constant 1 : index
    %c1_112 = arith.constant 1 : index
    %c0_113 = arith.constant 0 : index
    %144 = vector.load %arg14[%c1_111, %c1_112, %c0_113] : memref<2x24x128xf32, #tpu.memory_space<vmem>>, vector<1x14x128xf32>
    %145 = vector.shape_cast %144 : vector<1x14x128xf32> to vector<14x128xf32>
    %146 = tpu.concatenate %143, %145 in 0 : vector<14x128xf32>, vector<14x128xf32> -> vector<28x128xf32>
    %c0_114 = arith.constant 0 : index
    %c2_115 = arith.constant 2 : index
    %c0_116 = arith.constant 0 : index
    %147 = vector.load %arg14[%c0_114, %c2_115, %c0_116] : memref<2x24x128xf32, #tpu.memory_space<vmem>>, vector<1x14x128xf32>
    %148 = vector.shape_cast %147 : vector<1x14x128xf32> to vector<14x128xf32>
    %c1_117 = arith.constant 1 : index
    %c2_118 = arith.constant 2 : index
    %c0_119 = arith.constant 0 : index
    %149 = vector.load %arg14[%c1_117, %c2_118, %c0_119] : memref<2x24x128xf32, #tpu.memory_space<vmem>>, vector<1x14x128xf32>
    %150 = vector.shape_cast %149 : vector<1x14x128xf32> to vector<14x128xf32>
    %151 = tpu.concatenate %148, %150 in 0 : vector<14x128xf32>, vector<14x128xf32> -> vector<28x128xf32>
    %c0_120 = arith.constant 0 : index
    %c3_121 = arith.constant 3 : index
    %c0_122 = arith.constant 0 : index
    %152 = vector.load %arg14[%c0_120, %c3_121, %c0_122] : memref<2x24x128xf32, #tpu.memory_space<vmem>>, vector<1x14x128xf32>
    %153 = vector.shape_cast %152 : vector<1x14x128xf32> to vector<14x128xf32>
    %c1_123 = arith.constant 1 : index
    %c3_124 = arith.constant 3 : index
    %c0_125 = arith.constant 0 : index
    %154 = vector.load %arg14[%c1_123, %c3_124, %c0_125] : memref<2x24x128xf32, #tpu.memory_space<vmem>>, vector<1x14x128xf32>
    %155 = vector.shape_cast %154 : vector<1x14x128xf32> to vector<14x128xf32>
    %156 = tpu.concatenate %153, %155 in 0 : vector<14x128xf32>, vector<14x128xf32> -> vector<28x128xf32>
    %c64_i32_126 = arith.constant 64 : i32
    %157 = vector.broadcast %c64_i32_126 : i32 to vector<28x128xi32>
    %158 = arith.cmpi slt, %47, %157 : vector<28x128xi32>
    %159 = arith.select %158, %151, %156 : vector<28x128xi1>, vector<28x128xf32>
    %c32_i32_127 = arith.constant 32 : i32
    %160 = vector.broadcast %c32_i32_127 : i32 to vector<28x128xi32>
    %161 = arith.cmpi slt, %47, %160 : vector<28x128xi32>
    %162 = arith.select %161, %146, %159 : vector<28x128xi1>, vector<28x128xf32>
    %163 = arith.truncf %162 : vector<28x128xf32> to vector<28x128xbf16>
    %cst_128 = arith.constant dense<0.000000e+00> : vector<28x128xf32>
    %164 = tpu.matmul %163, %137, %cst_128 {dimension_numbers = #tpu.dot_dimension_numbers<[1], [0], [0], [1], [0, 0, 1, 1], [], []>} : vector<28x128xbf16>, vector<128x128xbf16>, vector<28x128xf32> -> vector<28x128xf32>
    %cst_129 = arith.constant dense<0.000000e+00> : vector<128xf32>
    %165 = vector.multi_reduction <add>, %164, %cst_129 [0] : vector<28x128xf32> to vector<128xf32>
    %166 = vector.shape_cast %165 : vector<128xf32> to vector<1x128xf32>
    %cst_130 = arith.constant 0.0357142873 : f32
    %167 = vector.broadcast %cst_130 : f32 to vector<1x128xf32>
    %168 = arith.mulf %166, %167 : vector<1x128xf32>
    %169 = arith.mulf %164, %164 : vector<28x128xf32>
    %cst_131 = arith.constant dense<0.000000e+00> : vector<128xf32>
    %170 = vector.multi_reduction <add>, %169, %cst_131 [0] : vector<28x128xf32> to vector<128xf32>
    %171 = vector.shape_cast %170 : vector<128xf32> to vector<1x128xf32>
    %cst_132 = arith.constant 0.0357142873 : f32
    %172 = vector.broadcast %cst_132 : f32 to vector<1x128xf32>
    %173 = arith.mulf %171, %172 : vector<1x128xf32>
    %174 = arith.mulf %168, %168 : vector<1x128xf32>
    %175 = arith.subf %173, %174 : vector<1x128xf32>
    %cst_133 = arith.constant 0.000000e+00 : f32
    %176 = vector.broadcast %cst_133 : f32 to vector<1x128xf32>
    %177 = arith.maximumf %175, %176 : vector<1x128xf32>
    %cst_134 = arith.constant 9.99999974E-6 : f32
    %178 = vector.broadcast %cst_134 : f32 to vector<1x128xf32>
    %179 = arith.addf %177, %178 : vector<1x128xf32>
    %180 = math.rsqrt %179 : vector<1x128xf32>
    %181 = arith.mulf %180, %139 : vector<1x128xf32>
    %182 = arith.mulf %168, %181 : vector<1x128xf32>
    %183 = arith.subf %141, %182 : vector<1x128xf32>
    %184 = vector.broadcast %181 : vector<1x128xf32> to vector<28x128xf32>
    %185 = arith.mulf %164, %184 : vector<28x128xf32>
    %186 = vector.broadcast %183 : vector<1x128xf32> to vector<28x128xf32>
    %187 = arith.addf %185, %186 : vector<28x128xf32>
    %c0_135 = arith.constant 0 : index
    %c2_136 = arith.constant 2 : index
    %c0_137 = arith.constant 0 : index
    %188 = vector.load %arg15[%c0_135, %c2_136, %c0_137] : memref<2x24x128xf32, #tpu.memory_space<vmem>>, vector<1x14x128xf32>
    %189 = vector.shape_cast %188 : vector<1x14x128xf32> to vector<14x128xf32>
    %c1_138 = arith.constant 1 : index
    %c2_139 = arith.constant 2 : index
    %c0_140 = arith.constant 0 : index
    %190 = vector.load %arg15[%c1_138, %c2_139, %c0_140] : memref<2x24x128xf32, #tpu.memory_space<vmem>>, vector<1x14x128xf32>
    %191 = vector.shape_cast %190 : vector<1x14x128xf32> to vector<14x128xf32>
    %192 = tpu.concatenate %189, %191 in 0 : vector<14x128xf32>, vector<14x128xf32> -> vector<28x128xf32>
    %193 = arith.addf %187, %192 : vector<28x128xf32>
    %194 = vector.extract_strided_slice %193 {offsets = [0, 0], sizes = [14, 128], strides = [1, 1]} : vector<28x128xf32> to vector<14x128xf32>
    %c0_141 = arith.constant 0 : index
    %c2_142 = arith.constant 2 : index
    %c0_143 = arith.constant 0 : index
    %195 = vector.load %arg15[%c0_141, %c2_142, %c0_143] : memref<2x24x128xf32, #tpu.memory_space<vmem>>, vector<1x14x128xf32>
    %196 = vector.shape_cast %195 : vector<1x14x128xf32> to vector<14x128xf32>
    %197 = vector.shape_cast %194 : vector<14x128xf32> to vector<1x14x128xf32>
    tpu.vector_store %arg15[%c0_141, %c2_142, %c0_143], %197 {strides = array<i32>} : memref<2x24x128xf32, #tpu.memory_space<vmem>>, vector<1x14x128xf32>,
    %198 = vector.extract_strided_slice %193 {offsets = [14, 0], sizes = [14, 128], strides = [1, 1]} : vector<28x128xf32> to vector<14x128xf32>
    %c1_144 = arith.constant 1 : index
    %c2_145 = arith.constant 2 : index
    %c0_146 = arith.constant 0 : index
    %199 = vector.load %arg15[%c1_144, %c2_145, %c0_146] : memref<2x24x128xf32, #tpu.memory_space<vmem>>, vector<1x14x128xf32>
    %200 = vector.shape_cast %199 : vector<1x14x128xf32> to vector<14x128xf32>
    %201 = vector.shape_cast %198 : vector<14x128xf32> to vector<1x14x128xf32>
    tpu.vector_store %arg15[%c1_144, %c2_145, %c0_146], %201 {strides = array<i32>} : memref<2x24x128xf32, #tpu.memory_space<vmem>>, vector<1x14x128xf32>,
    %c2_147 = arith.constant 2 : index
    %c0_148 = arith.constant 0 : index
    %c0_149 = arith.constant 0 : index
    %202 = vector.load %arg6[%c2_147, %c0_148, %c0_149] : memref<8x128x128xbf16, #tpu.memory_space<vmem>>, vector<1x128x128xbf16>
    %203 = vector.shape_cast %202 : vector<1x128x128xbf16> to vector<128x128xbf16>
    %c2_150 = arith.constant 2 : index
    %c0_151 = arith.constant 0 : index
    %c0_152 = arith.constant 0 : index
    %204 = vector.load %arg7[%c2_150, %c0_151, %c0_152] : memref<8x1x128xf32, #tpu.memory_space<vmem>>, vector<1x1x128xf32>
    %205 = vector.shape_cast %204 : vector<1x1x128xf32> to vector<1x128xf32>
    %c2_153 = arith.constant 2 : index
    %c0_154 = arith.constant 0 : index
    %c0_155 = arith.constant 0 : index
    %206 = vector.load %arg8[%c2_153, %c0_154, %c0_155] : memref<8x1x128xf32, #tpu.memory_space<vmem>>, vector<1x1x128xf32>
    %207 = vector.shape_cast %206 : vector<1x1x128xf32> to vector<1x128xf32>
    %c0_156 = arith.constant 0 : index
    %c1_157 = arith.constant 1 : index
    %c0_158 = arith.constant 0 : index
    %208 = vector.load %arg15[%c0_156, %c1_157, %c0_158] : memref<2x24x128xf32, #tpu.memory_space<vmem>>, vector<1x14x128xf32>
    %209 = vector.shape_cast %208 : vector<1x14x128xf32> to vector<14x128xf32>
    %c1_159 = arith.constant 1 : index
    %c1_160 = arith.constant 1 : index
    %c0_161 = arith.constant 0 : index
    %210 = vector.load %arg15[%c1_159, %c1_160, %c0_161] : memref<2x24x128xf32, #tpu.memory_space<vmem>>, vector<1x14x128xf32>
    %211 = vector.shape_cast %210 : vector<1x14x128xf32> to vector<14x128xf32>
    %212 = tpu.concatenate %209, %211 in 0 : vector<14x128xf32>, vector<14x128xf32> -> vector<28x128xf32>
    %c0_162 = arith.constant 0 : index
    %c2_163 = arith.constant 2 : index
    %c0_164 = arith.constant 0 : index
    %213 = vector.load %arg15[%c0_162, %c2_163, %c0_164] : memref<2x24x128xf32, #tpu.memory_space<vmem>>, vector<1x14x128xf32>
    %214 = vector.shape_cast %213 : vector<1x14x128xf32> to vector<14x128xf32>
    %c1_165 = arith.constant 1 : index
    %c2_166 = arith.constant 2 : index
    %c0_167 = arith.constant 0 : index
    %215 = vector.load %arg15[%c1_165, %c2_166, %c0_167] : memref<2x24x128xf32, #tpu.memory_space<vmem>>, vector<1x14x128xf32>
    %216 = vector.shape_cast %215 : vector<1x14x128xf32> to vector<14x128xf32>
    %217 = tpu.concatenate %214, %216 in 0 : vector<14x128xf32>, vector<14x128xf32> -> vector<28x128xf32>
    %c0_168 = arith.constant 0 : index
    %c3_169 = arith.constant 3 : index
    %c0_170 = arith.constant 0 : index
    %218 = vector.load %arg15[%c0_168, %c3_169, %c0_170] : memref<2x24x128xf32, #tpu.memory_space<vmem>>, vector<1x14x128xf32>
    %219 = vector.shape_cast %218 : vector<1x14x128xf32> to vector<14x128xf32>
    %c1_171 = arith.constant 1 : index
    %c3_172 = arith.constant 3 : index
    %c0_173 = arith.constant 0 : index
    %220 = vector.load %arg15[%c1_171, %c3_172, %c0_173] : memref<2x24x128xf32, #tpu.memory_space<vmem>>, vector<1x14x128xf32>
    %221 = vector.shape_cast %220 : vector<1x14x128xf32> to vector<14x128xf32>
    %222 = tpu.concatenate %219, %221 in 0 : vector<14x128xf32>, vector<14x128xf32> -> vector<28x128xf32>
    %c64_i32_174 = arith.constant 64 : i32
    %223 = vector.broadcast %c64_i32_174 : i32 to vector<28x128xi32>
    %224 = arith.cmpi slt, %47, %223 : vector<28x128xi32>
    %225 = arith.select %224, %217, %222 : vector<28x128xi1>, vector<28x128xf32>
    %c32_i32_175 = arith.constant 32 : i32
    %226 = vector.broadcast %c32_i32_175 : i32 to vector<28x128xi32>
    %227 = arith.cmpi slt, %47, %226 : vector<28x128xi32>
    %228 = arith.select %227, %212, %225 : vector<28x128xi1>, vector<28x128xf32>
    %229 = arith.truncf %228 : vector<28x128xf32> to vector<28x128xbf16>
    %cst_176 = arith.constant dense<0.000000e+00> : vector<28x128xf32>
    %230 = tpu.matmul %229, %203, %cst_176 {dimension_numbers = #tpu.dot_dimension_numbers<[1], [0], [0], [1], [0, 0, 1, 1], [], []>} : vector<28x128xbf16>, vector<128x128xbf16>, vector<28x128xf32> -> vector<28x128xf32>
    %cst_177 = arith.constant dense<0.000000e+00> : vector<128xf32>
    %231 = vector.multi_reduction <add>, %230, %cst_177 [0] : vector<28x128xf32> to vector<128xf32>
    %232 = vector.shape_cast %231 : vector<128xf32> to vector<1x128xf32>
    %cst_178 = arith.constant 0.0357142873 : f32
    %233 = vector.broadcast %cst_178 : f32 to vector<1x128xf32>
    %234 = arith.mulf %232, %233 : vector<1x128xf32>
    %235 = arith.mulf %230, %230 : vector<28x128xf32>
    %cst_179 = arith.constant dense<0.000000e+00> : vector<128xf32>
    %236 = vector.multi_reduction <add>, %235, %cst_179 [0] : vector<28x128xf32> to vector<128xf32>
    %237 = vector.shape_cast %236 : vector<128xf32> to vector<1x128xf32>
    %cst_180 = arith.constant 0.0357142873 : f32
    %238 = vector.broadcast %cst_180 : f32 to vector<1x128xf32>
    %239 = arith.mulf %237, %238 : vector<1x128xf32>
    %240 = arith.mulf %234, %234 : vector<1x128xf32>
    %241 = arith.subf %239, %240 : vector<1x128xf32>
    %cst_181 = arith.constant 0.000000e+00 : f32
    %242 = vector.broadcast %cst_181 : f32 to vector<1x128xf32>
    %243 = arith.maximumf %241, %242 : vector<1x128xf32>
    %cst_182 = arith.constant 9.99999974E-6 : f32
    %244 = vector.broadcast %cst_182 : f32 to vector<1x128xf32>
    %245 = arith.addf %243, %244 : vector<1x128xf32>
    %246 = math.rsqrt %245 : vector<1x128xf32>
    %247 = arith.mulf %246, %205 : vector<1x128xf32>
    %248 = arith.mulf %234, %247 : vector<1x128xf32>
    %249 = arith.subf %207, %248 : vector<1x128xf32>
    %250 = vector.broadcast %247 : vector<1x128xf32> to vector<28x128xf32>
    %251 = arith.mulf %230, %250 : vector<28x128xf32>
    %252 = vector.broadcast %249 : vector<1x128xf32> to vector<28x128xf32>
    %253 = arith.addf %251, %252 : vector<28x128xf32>
    %cst_183 = arith.constant 0.000000e+00 : f32
    %254 = vector.broadcast %cst_183 : f32 to vector<28x128xf32>
    %255 = arith.maximumf %253, %254 : vector<28x128xf32>
    %256 = vector.extract_strided_slice %255 {offsets = [0, 0], sizes = [14, 128], strides = [1, 1]} : vector<28x128xf32> to vector<14x128xf32>
    %c0_184 = arith.constant 0 : index
    %c2_185 = arith.constant 2 : index
    %c0_186 = arith.constant 0 : index
    %257 = vector.load %arg14[%c0_184, %c2_185, %c0_186] : memref<2x24x128xf32, #tpu.memory_space<vmem>>, vector<1x14x128xf32>
    %258 = vector.shape_cast %257 : vector<1x14x128xf32> to vector<14x128xf32>
    %259 = vector.shape_cast %256 : vector<14x128xf32> to vector<1x14x128xf32>
    tpu.vector_store %arg14[%c0_184, %c2_185, %c0_186], %259 {strides = array<i32>} : memref<2x24x128xf32, #tpu.memory_space<vmem>>, vector<1x14x128xf32>,
    %260 = vector.extract_strided_slice %255 {offsets = [14, 0], sizes = [14, 128], strides = [1, 1]} : vector<28x128xf32> to vector<14x128xf32>
    %c1_187 = arith.constant 1 : index
    %c2_188 = arith.constant 2 : index
    %c0_189 = arith.constant 0 : index
    %261 = vector.load %arg14[%c1_187, %c2_188, %c0_189] : memref<2x24x128xf32, #tpu.memory_space<vmem>>, vector<1x14x128xf32>
    %262 = vector.shape_cast %261 : vector<1x14x128xf32> to vector<14x128xf32>
    %263 = vector.shape_cast %260 : vector<14x128xf32> to vector<1x14x128xf32>
    tpu.vector_store %arg14[%c1_187, %c2_188, %c0_189], %263 {strides = array<i32>} : memref<2x24x128xf32, #tpu.memory_space<vmem>>, vector<1x14x128xf32>,
    %c3_190 = arith.constant 3 : index
    %c0_191 = arith.constant 0 : index
    %c0_192 = arith.constant 0 : index
    %264 = vector.load %arg6[%c3_190, %c0_191, %c0_192] : memref<8x128x128xbf16, #tpu.memory_space<vmem>>, vector<1x128x128xbf16>
    %265 = vector.shape_cast %264 : vector<1x128x128xbf16> to vector<128x128xbf16>
    %c3_193 = arith.constant 3 : index
    %c0_194 = arith.constant 0 : index
    %c0_195 = arith.constant 0 : index
    %266 = vector.load %arg7[%c3_193, %c0_194, %c0_195] : memref<8x1x128xf32, #tpu.memory_space<vmem>>, vector<1x1x128xf32>
    %267 = vector.shape_cast %266 : vector<1x1x128xf32> to vector<1x128xf32>
    %c3_196 = arith.constant 3 : index
    %c0_197 = arith.constant 0 : index
    %c0_198 = arith.constant 0 : index
    %268 = vector.load %arg8[%c3_196, %c0_197, %c0_198] : memref<8x1x128xf32, #tpu.memory_space<vmem>>, vector<1x1x128xf32>
    %269 = vector.shape_cast %268 : vector<1x1x128xf32> to vector<1x128xf32>
    %c0_199 = arith.constant 0 : index
    %c1_200 = arith.constant 1 : index
    %c0_201 = arith.constant 0 : index
    %270 = vector.load %arg14[%c0_199, %c1_200, %c0_201] : memref<2x24x128xf32, #tpu.memory_space<vmem>>, vector<1x14x128xf32>
    %271 = vector.shape_cast %270 : vector<1x14x128xf32> to vector<14x128xf32>
    %c1_202 = arith.constant 1 : index
    %c1_203 = arith.constant 1 : index
    %c0_204 = arith.constant 0 : index
    %272 = vector.load %arg14[%c1_202, %c1_203, %c0_204] : memref<2x24x128xf32, #tpu.memory_space<vmem>>, vector<1x14x128xf32>
    %273 = vector.shape_cast %272 : vector<1x14x128xf32> to vector<14x128xf32>
    %274 = tpu.concatenate %271, %273 in 0 : vector<14x128xf32>, vector<14x128xf32> -> vector<28x128xf32>
    %c0_205 = arith.constant 0 : index
    %c2_206 = arith.constant 2 : index
    %c0_207 = arith.constant 0 : index
    %275 = vector.load %arg14[%c0_205, %c2_206, %c0_207] : memref<2x24x128xf32, #tpu.memory_space<vmem>>, vector<1x14x128xf32>
    %276 = vector.shape_cast %275 : vector<1x14x128xf32> to vector<14x128xf32>
    %c1_208 = arith.constant 1 : index
    %c2_209 = arith.constant 2 : index
    %c0_210 = arith.constant 0 : index
    %277 = vector.load %arg14[%c1_208, %c2_209, %c0_210] : memref<2x24x128xf32, #tpu.memory_space<vmem>>, vector<1x14x128xf32>
    %278 = vector.shape_cast %277 : vector<1x14x128xf32> to vector<14x128xf32>
    %279 = tpu.concatenate %276, %278 in 0 : vector<14x128xf32>, vector<14x128xf32> -> vector<28x128xf32>
    %c0_211 = arith.constant 0 : index
    %c3_212 = arith.constant 3 : index
    %c0_213 = arith.constant 0 : index
    %280 = vector.load %arg14[%c0_211, %c3_212, %c0_213] : memref<2x24x128xf32, #tpu.memory_space<vmem>>, vector<1x14x128xf32>
    %281 = vector.shape_cast %280 : vector<1x14x128xf32> to vector<14x128xf32>
    %c1_214 = arith.constant 1 : index
    %c3_215 = arith.constant 3 : index
    %c0_216 = arith.constant 0 : index
    %282 = vector.load %arg14[%c1_214, %c3_215, %c0_216] : memref<2x24x128xf32, #tpu.memory_space<vmem>>, vector<1x14x128xf32>
    %283 = vector.shape_cast %282 : vector<1x14x128xf32> to vector<14x128xf32>
    %284 = tpu.concatenate %281, %283 in 0 : vector<14x128xf32>, vector<14x128xf32> -> vector<28x128xf32>
    %c64_i32_217 = arith.constant 64 : i32
    %285 = vector.broadcast %c64_i32_217 : i32 to vector<28x128xi32>
    %286 = arith.cmpi slt, %47, %285 : vector<28x128xi32>
    %287 = arith.select %286, %279, %284 : vector<28x128xi1>, vector<28x128xf32>
    %c32_i32_218 = arith.constant 32 : i32
    %288 = vector.broadcast %c32_i32_218 : i32 to vector<28x128xi32>
    %289 = arith.cmpi slt, %47, %288 : vector<28x128xi32>
    %290 = arith.select %289, %274, %287 : vector<28x128xi1>, vector<28x128xf32>
    %291 = arith.truncf %290 : vector<28x128xf32> to vector<28x128xbf16>
    %cst_219 = arith.constant dense<0.000000e+00> : vector<28x128xf32>
    %292 = tpu.matmul %291, %265, %cst_219 {dimension_numbers = #tpu.dot_dimension_numbers<[1], [0], [0], [1], [0, 0, 1, 1], [], []>} : vector<28x128xbf16>, vector<128x128xbf16>, vector<28x128xf32> -> vector<28x128xf32>
    %cst_220 = arith.constant dense<0.000000e+00> : vector<128xf32>
    %293 = vector.multi_reduction <add>, %292, %cst_220 [0] : vector<28x128xf32> to vector<128xf32>
    %294 = vector.shape_cast %293 : vector<128xf32> to vector<1x128xf32>
    %cst_221 = arith.constant 0.0357142873 : f32
    %295 = vector.broadcast %cst_221 : f32 to vector<1x128xf32>
    %296 = arith.mulf %294, %295 : vector<1x128xf32>
    %297 = arith.mulf %292, %292 : vector<28x128xf32>
    %cst_222 = arith.constant dense<0.000000e+00> : vector<128xf32>
    %298 = vector.multi_reduction <add>, %297, %cst_222 [0] : vector<28x128xf32> to vector<128xf32>
    %299 = vector.shape_cast %298 : vector<128xf32> to vector<1x128xf32>
    %cst_223 = arith.constant 0.0357142873 : f32
    %300 = vector.broadcast %cst_223 : f32 to vector<1x128xf32>
    %301 = arith.mulf %299, %300 : vector<1x128xf32>
    %302 = arith.mulf %296, %296 : vector<1x128xf32>
    %303 = arith.subf %301, %302 : vector<1x128xf32>
    %cst_224 = arith.constant 0.000000e+00 : f32
    %304 = vector.broadcast %cst_224 : f32 to vector<1x128xf32>
    %305 = arith.maximumf %303, %304 : vector<1x128xf32>
    %cst_225 = arith.constant 9.99999974E-6 : f32
    %306 = vector.broadcast %cst_225 : f32 to vector<1x128xf32>
    %307 = arith.addf %305, %306 : vector<1x128xf32>
    %308 = math.rsqrt %307 : vector<1x128xf32>
    %309 = arith.mulf %308, %267 : vector<1x128xf32>
    %310 = arith.mulf %296, %309 : vector<1x128xf32>
    %311 = arith.subf %269, %310 : vector<1x128xf32>
    %312 = vector.broadcast %309 : vector<1x128xf32> to vector<28x128xf32>
    %313 = arith.mulf %292, %312 : vector<28x128xf32>
    %314 = vector.broadcast %311 : vector<1x128xf32> to vector<28x128xf32>
    %315 = arith.addf %313, %314 : vector<28x128xf32>
    %c0_226 = arith.constant 0 : index
    %c2_227 = arith.constant 2 : index
    %c0_228 = arith.constant 0 : index
    %316 = vector.load %arg15[%c0_226, %c2_227, %c0_228] : memref<2x24x128xf32, #tpu.memory_space<vmem>>, vector<1x14x128xf32>
    %317 = vector.shape_cast %316 : vector<1x14x128xf32> to vector<14x128xf32>
    %c1_229 = arith.constant 1 : index
    %c2_230 = arith.constant 2 : index
    %c0_231 = arith.constant 0 : index
    %318 = vector.load %arg15[%c1_229, %c2_230, %c0_231] : memref<2x24x128xf32, #tpu.memory_space<vmem>>, vector<1x14x128xf32>
    %319 = vector.shape_cast %318 : vector<1x14x128xf32> to vector<14x128xf32>
    %320 = tpu.concatenate %317, %319 in 0 : vector<14x128xf32>, vector<14x128xf32> -> vector<28x128xf32>
    %321 = arith.addf %315, %320 : vector<28x128xf32>
    %322 = vector.extract_strided_slice %321 {offsets = [0, 0], sizes = [14, 128], strides = [1, 1]} : vector<28x128xf32> to vector<14x128xf32>
    %c0_232 = arith.constant 0 : index
    %c2_233 = arith.constant 2 : index
    %c0_234 = arith.constant 0 : index
    %323 = vector.load %arg15[%c0_232, %c2_233, %c0_234] : memref<2x24x128xf32, #tpu.memory_space<vmem>>, vector<1x14x128xf32>
    %324 = vector.shape_cast %323 : vector<1x14x128xf32> to vector<14x128xf32>
    %325 = vector.shape_cast %322 : vector<14x128xf32> to vector<1x14x128xf32>
    tpu.vector_store %arg15[%c0_232, %c2_233, %c0_234], %325 {strides = array<i32>} : memref<2x24x128xf32, #tpu.memory_space<vmem>>, vector<1x14x128xf32>,
    %326 = vector.extract_strided_slice %321 {offsets = [14, 0], sizes = [14, 128], strides = [1, 1]} : vector<28x128xf32> to vector<14x128xf32>
    %c1_235 = arith.constant 1 : index
    %c2_236 = arith.constant 2 : index
    %c0_237 = arith.constant 0 : index
    %327 = vector.load %arg15[%c1_235, %c2_236, %c0_237] : memref<2x24x128xf32, #tpu.memory_space<vmem>>, vector<1x14x128xf32>
    %328 = vector.shape_cast %327 : vector<1x14x128xf32> to vector<14x128xf32>
    %329 = vector.shape_cast %326 : vector<14x128xf32> to vector<1x14x128xf32>
    tpu.vector_store %arg15[%c1_235, %c2_236, %c0_237], %329 {strides = array<i32>} : memref<2x24x128xf32, #tpu.memory_space<vmem>>, vector<1x14x128xf32>,
    %c4 = arith.constant 4 : index
    %c0_238 = arith.constant 0 : index
    %c0_239 = arith.constant 0 : index
    %330 = vector.load %arg6[%c4, %c0_238, %c0_239] : memref<8x128x128xbf16, #tpu.memory_space<vmem>>, vector<1x128x128xbf16>
    %331 = vector.shape_cast %330 : vector<1x128x128xbf16> to vector<128x128xbf16>
    %c4_240 = arith.constant 4 : index
    %c0_241 = arith.constant 0 : index
    %c0_242 = arith.constant 0 : index
    %332 = vector.load %arg7[%c4_240, %c0_241, %c0_242] : memref<8x1x128xf32, #tpu.memory_space<vmem>>, vector<1x1x128xf32>
    %333 = vector.shape_cast %332 : vector<1x1x128xf32> to vector<1x128xf32>
    %c4_243 = arith.constant 4 : index
    %c0_244 = arith.constant 0 : index
    %c0_245 = arith.constant 0 : index
    %334 = vector.load %arg8[%c4_243, %c0_244, %c0_245] : memref<8x1x128xf32, #tpu.memory_space<vmem>>, vector<1x1x128xf32>
    %335 = vector.shape_cast %334 : vector<1x1x128xf32> to vector<1x128xf32>
    %c0_246 = arith.constant 0 : index
    %c1_247 = arith.constant 1 : index
    %c0_248 = arith.constant 0 : index
    %336 = vector.load %arg15[%c0_246, %c1_247, %c0_248] : memref<2x24x128xf32, #tpu.memory_space<vmem>>, vector<1x14x128xf32>
    %337 = vector.shape_cast %336 : vector<1x14x128xf32> to vector<14x128xf32>
    %c1_249 = arith.constant 1 : index
    %c1_250 = arith.constant 1 : index
    %c0_251 = arith.constant 0 : index
    %338 = vector.load %arg15[%c1_249, %c1_250, %c0_251] : memref<2x24x128xf32, #tpu.memory_space<vmem>>, vector<1x14x128xf32>
    %339 = vector.shape_cast %338 : vector<1x14x128xf32> to vector<14x128xf32>
    %340 = tpu.concatenate %337, %339 in 0 : vector<14x128xf32>, vector<14x128xf32> -> vector<28x128xf32>
    %c0_252 = arith.constant 0 : index
    %c2_253 = arith.constant 2 : index
    %c0_254 = arith.constant 0 : index
    %341 = vector.load %arg15[%c0_252, %c2_253, %c0_254] : memref<2x24x128xf32, #tpu.memory_space<vmem>>, vector<1x14x128xf32>
    %342 = vector.shape_cast %341 : vector<1x14x128xf32> to vector<14x128xf32>
    %c1_255 = arith.constant 1 : index
    %c2_256 = arith.constant 2 : index
    %c0_257 = arith.constant 0 : index
    %343 = vector.load %arg15[%c1_255, %c2_256, %c0_257] : memref<2x24x128xf32, #tpu.memory_space<vmem>>, vector<1x14x128xf32>
    %344 = vector.shape_cast %343 : vector<1x14x128xf32> to vector<14x128xf32>
    %345 = tpu.concatenate %342, %344 in 0 : vector<14x128xf32>, vector<14x128xf32> -> vector<28x128xf32>
    %c0_258 = arith.constant 0 : index
    %c3_259 = arith.constant 3 : index
    %c0_260 = arith.constant 0 : index
    %346 = vector.load %arg15[%c0_258, %c3_259, %c0_260] : memref<2x24x128xf32, #tpu.memory_space<vmem>>, vector<1x14x128xf32>
    %347 = vector.shape_cast %346 : vector<1x14x128xf32> to vector<14x128xf32>
    %c1_261 = arith.constant 1 : index
    %c3_262 = arith.constant 3 : index
    %c0_263 = arith.constant 0 : index
    %348 = vector.load %arg15[%c1_261, %c3_262, %c0_263] : memref<2x24x128xf32, #tpu.memory_space<vmem>>, vector<1x14x128xf32>
    %349 = vector.shape_cast %348 : vector<1x14x128xf32> to vector<14x128xf32>
    %350 = tpu.concatenate %347, %349 in 0 : vector<14x128xf32>, vector<14x128xf32> -> vector<28x128xf32>
    %c64_i32_264 = arith.constant 64 : i32
    %351 = vector.broadcast %c64_i32_264 : i32 to vector<28x128xi32>
    %352 = arith.cmpi slt, %47, %351 : vector<28x128xi32>
    %353 = arith.select %352, %345, %350 : vector<28x128xi1>, vector<28x128xf32>
    %c32_i32_265 = arith.constant 32 : i32
    %354 = vector.broadcast %c32_i32_265 : i32 to vector<28x128xi32>
    %355 = arith.cmpi slt, %47, %354 : vector<28x128xi32>
    %356 = arith.select %355, %340, %353 : vector<28x128xi1>, vector<28x128xf32>
    %357 = arith.truncf %356 : vector<28x128xf32> to vector<28x128xbf16>
    %cst_266 = arith.constant dense<0.000000e+00> : vector<28x128xf32>
    %358 = tpu.matmul %357, %331, %cst_266 {dimension_numbers = #tpu.dot_dimension_numbers<[1], [0], [0], [1], [0, 0, 1, 1], [], []>} : vector<28x128xbf16>, vector<128x128xbf16>, vector<28x128xf32> -> vector<28x128xf32>
    %cst_267 = arith.constant dense<0.000000e+00> : vector<128xf32>
    %359 = vector.multi_reduction <add>, %358, %cst_267 [0] : vector<28x128xf32> to vector<128xf32>
    %360 = vector.shape_cast %359 : vector<128xf32> to vector<1x128xf32>
    %cst_268 = arith.constant 0.0357142873 : f32
    %361 = vector.broadcast %cst_268 : f32 to vector<1x128xf32>
    %362 = arith.mulf %360, %361 : vector<1x128xf32>
    %363 = arith.mulf %358, %358 : vector<28x128xf32>
    %cst_269 = arith.constant dense<0.000000e+00> : vector<128xf32>
    %364 = vector.multi_reduction <add>, %363, %cst_269 [0] : vector<28x128xf32> to vector<128xf32>
    %365 = vector.shape_cast %364 : vector<128xf32> to vector<1x128xf32>
    %cst_270 = arith.constant 0.0357142873 : f32
    %366 = vector.broadcast %cst_270 : f32 to vector<1x128xf32>
    %367 = arith.mulf %365, %366 : vector<1x128xf32>
    %368 = arith.mulf %362, %362 : vector<1x128xf32>
    %369 = arith.subf %367, %368 : vector<1x128xf32>
    %cst_271 = arith.constant 0.000000e+00 : f32
    %370 = vector.broadcast %cst_271 : f32 to vector<1x128xf32>
    %371 = arith.maximumf %369, %370 : vector<1x128xf32>
    %cst_272 = arith.constant 9.99999974E-6 : f32
    %372 = vector.broadcast %cst_272 : f32 to vector<1x128xf32>
    %373 = arith.addf %371, %372 : vector<1x128xf32>
    %374 = math.rsqrt %373 : vector<1x128xf32>
    %375 = arith.mulf %374, %333 : vector<1x128xf32>
    %376 = arith.mulf %362, %375 : vector<1x128xf32>
    %377 = arith.subf %335, %376 : vector<1x128xf32>
    %378 = vector.broadcast %375 : vector<1x128xf32> to vector<28x128xf32>
    %379 = arith.mulf %358, %378 : vector<28x128xf32>
    %380 = vector.broadcast %377 : vector<1x128xf32> to vector<28x128xf32>
    %381 = arith.addf %379, %380 : vector<28x128xf32>
    %cst_273 = arith.constant 0.000000e+00 : f32
    %382 = vector.broadcast %cst_273 : f32 to vector<28x128xf32>
    %383 = arith.maximumf %381, %382 : vector<28x128xf32>
    %384 = vector.extract_strided_slice %383 {offsets = [0, 0], sizes = [14, 128], strides = [1, 1]} : vector<28x128xf32> to vector<14x128xf32>
    %c0_274 = arith.constant 0 : index
    %c2_275 = arith.constant 2 : index
    %c0_276 = arith.constant 0 : index
    %385 = vector.load %arg14[%c0_274, %c2_275, %c0_276] : memref<2x24x128xf32, #tpu.memory_space<vmem>>, vector<1x14x128xf32>
    %386 = vector.shape_cast %385 : vector<1x14x128xf32> to vector<14x128xf32>
    %387 = vector.shape_cast %384 : vector<14x128xf32> to vector<1x14x128xf32>
    tpu.vector_store %arg14[%c0_274, %c2_275, %c0_276], %387 {strides = array<i32>} : memref<2x24x128xf32, #tpu.memory_space<vmem>>, vector<1x14x128xf32>,
    %388 = vector.extract_strided_slice %383 {offsets = [14, 0], sizes = [14, 128], strides = [1, 1]} : vector<28x128xf32> to vector<14x128xf32>
    %c1_277 = arith.constant 1 : index
    %c2_278 = arith.constant 2 : index
    %c0_279 = arith.constant 0 : index
    %389 = vector.load %arg14[%c1_277, %c2_278, %c0_279] : memref<2x24x128xf32, #tpu.memory_space<vmem>>, vector<1x14x128xf32>
    %390 = vector.shape_cast %389 : vector<1x14x128xf32> to vector<14x128xf32>
    %391 = vector.shape_cast %388 : vector<14x128xf32> to vector<1x14x128xf32>
    tpu.vector_store %arg14[%c1_277, %c2_278, %c0_279], %391 {strides = array<i32>} : memref<2x24x128xf32, #tpu.memory_space<vmem>>, vector<1x14x128xf32>,
    %c5 = arith.constant 5 : index
    %c0_280 = arith.constant 0 : index
    %c0_281 = arith.constant 0 : index
    %392 = vector.load %arg6[%c5, %c0_280, %c0_281] : memref<8x128x128xbf16, #tpu.memory_space<vmem>>, vector<1x128x128xbf16>
    %393 = vector.shape_cast %392 : vector<1x128x128xbf16> to vector<128x128xbf16>
    %c5_282 = arith.constant 5 : index
    %c0_283 = arith.constant 0 : index
    %c0_284 = arith.constant 0 : index
    %394 = vector.load %arg7[%c5_282, %c0_283, %c0_284] : memref<8x1x128xf32, #tpu.memory_space<vmem>>, vector<1x1x128xf32>
    %395 = vector.shape_cast %394 : vector<1x1x128xf32> to vector<1x128xf32>
    %c5_285 = arith.constant 5 : index
    %c0_286 = arith.constant 0 : index
    %c0_287 = arith.constant 0 : index
    %396 = vector.load %arg8[%c5_285, %c0_286, %c0_287] : memref<8x1x128xf32, #tpu.memory_space<vmem>>, vector<1x1x128xf32>
    %397 = vector.shape_cast %396 : vector<1x1x128xf32> to vector<1x128xf32>
    %c0_288 = arith.constant 0 : index
    %c1_289 = arith.constant 1 : index
    %c0_290 = arith.constant 0 : index
    %398 = vector.load %arg14[%c0_288, %c1_289, %c0_290] : memref<2x24x128xf32, #tpu.memory_space<vmem>>, vector<1x14x128xf32>
    %399 = vector.shape_cast %398 : vector<1x14x128xf32> to vector<14x128xf32>
    %c1_291 = arith.constant 1 : index
    %c1_292 = arith.constant 1 : index
    %c0_293 = arith.constant 0 : index
    %400 = vector.load %arg14[%c1_291, %c1_292, %c0_293] : memref<2x24x128xf32, #tpu.memory_space<vmem>>, vector<1x14x128xf32>
    %401 = vector.shape_cast %400 : vector<1x14x128xf32> to vector<14x128xf32>
    %402 = tpu.concatenate %399, %401 in 0 : vector<14x128xf32>, vector<14x128xf32> -> vector<28x128xf32>
    %c0_294 = arith.constant 0 : index
    %c2_295 = arith.constant 2 : index
    %c0_296 = arith.constant 0 : index
    %403 = vector.load %arg14[%c0_294, %c2_295, %c0_296] : memref<2x24x128xf32, #tpu.memory_space<vmem>>, vector<1x14x128xf32>
    %404 = vector.shape_cast %403 : vector<1x14x128xf32> to vector<14x128xf32>
    %c1_297 = arith.constant 1 : index
    %c2_298 = arith.constant 2 : index
    %c0_299 = arith.constant 0 : index
    %405 = vector.load %arg14[%c1_297, %c2_298, %c0_299] : memref<2x24x128xf32, #tpu.memory_space<vmem>>, vector<1x14x128xf32>
    %406 = vector.shape_cast %405 : vector<1x14x128xf32> to vector<14x128xf32>
    %407 = tpu.concatenate %404, %406 in 0 : vector<14x128xf32>, vector<14x128xf32> -> vector<28x128xf32>
    %c0_300 = arith.constant 0 : index
    %c3_301 = arith.constant 3 : index
    %c0_302 = arith.constant 0 : index
    %408 = vector.load %arg14[%c0_300, %c3_301, %c0_302] : memref<2x24x128xf32, #tpu.memory_space<vmem>>, vector<1x14x128xf32>
    %409 = vector.shape_cast %408 : vector<1x14x128xf32> to vector<14x128xf32>
    %c1_303 = arith.constant 1 : index
    %c3_304 = arith.constant 3 : index
    %c0_305 = arith.constant 0 : index
    %410 = vector.load %arg14[%c1_303, %c3_304, %c0_305] : memref<2x24x128xf32, #tpu.memory_space<vmem>>, vector<1x14x128xf32>
    %411 = vector.shape_cast %410 : vector<1x14x128xf32> to vector<14x128xf32>
    %412 = tpu.concatenate %409, %411 in 0 : vector<14x128xf32>, vector<14x128xf32> -> vector<28x128xf32>
    %c64_i32_306 = arith.constant 64 : i32
    %413 = vector.broadcast %c64_i32_306 : i32 to vector<28x128xi32>
    %414 = arith.cmpi slt, %47, %413 : vector<28x128xi32>
    %415 = arith.select %414, %407, %412 : vector<28x128xi1>, vector<28x128xf32>
    %c32_i32_307 = arith.constant 32 : i32
    %416 = vector.broadcast %c32_i32_307 : i32 to vector<28x128xi32>
    %417 = arith.cmpi slt, %47, %416 : vector<28x128xi32>
    %418 = arith.select %417, %402, %415 : vector<28x128xi1>, vector<28x128xf32>
    %419 = arith.truncf %418 : vector<28x128xf32> to vector<28x128xbf16>
    %cst_308 = arith.constant dense<0.000000e+00> : vector<28x128xf32>
    %420 = tpu.matmul %419, %393, %cst_308 {dimension_numbers = #tpu.dot_dimension_numbers<[1], [0], [0], [1], [0, 0, 1, 1], [], []>} : vector<28x128xbf16>, vector<128x128xbf16>, vector<28x128xf32> -> vector<28x128xf32>
    %cst_309 = arith.constant dense<0.000000e+00> : vector<128xf32>
    %421 = vector.multi_reduction <add>, %420, %cst_309 [0] : vector<28x128xf32> to vector<128xf32>
    %422 = vector.shape_cast %421 : vector<128xf32> to vector<1x128xf32>
    %cst_310 = arith.constant 0.0357142873 : f32
    %423 = vector.broadcast %cst_310 : f32 to vector<1x128xf32>
    %424 = arith.mulf %422, %423 : vector<1x128xf32>
    %425 = arith.mulf %420, %420 : vector<28x128xf32>
    %cst_311 = arith.constant dense<0.000000e+00> : vector<128xf32>
    %426 = vector.multi_reduction <add>, %425, %cst_311 [0] : vector<28x128xf32> to vector<128xf32>
    %427 = vector.shape_cast %426 : vector<128xf32> to vector<1x128xf32>
    %cst_312 = arith.constant 0.0357142873 : f32
    %428 = vector.broadcast %cst_312 : f32 to vector<1x128xf32>
    %429 = arith.mulf %427, %428 : vector<1x128xf32>
    %430 = arith.mulf %424, %424 : vector<1x128xf32>
    %431 = arith.subf %429, %430 : vector<1x128xf32>
    %cst_313 = arith.constant 0.000000e+00 : f32
    %432 = vector.broadcast %cst_313 : f32 to vector<1x128xf32>
    %433 = arith.maximumf %431, %432 : vector<1x128xf32>
    %cst_314 = arith.constant 9.99999974E-6 : f32
    %434 = vector.broadcast %cst_314 : f32 to vector<1x128xf32>
    %435 = arith.addf %433, %434 : vector<1x128xf32>
    %436 = math.rsqrt %435 : vector<1x128xf32>
    %437 = arith.mulf %436, %395 : vector<1x128xf32>
    %438 = arith.mulf %424, %437 : vector<1x128xf32>
    %439 = arith.subf %397, %438 : vector<1x128xf32>
    %440 = vector.broadcast %437 : vector<1x128xf32> to vector<28x128xf32>
    %441 = arith.mulf %420, %440 : vector<28x128xf32>
    %442 = vector.broadcast %439 : vector<1x128xf32> to vector<28x128xf32>
    %443 = arith.addf %441, %442 : vector<28x128xf32>
    %c0_315 = arith.constant 0 : index
    %c2_316 = arith.constant 2 : index
    %c0_317 = arith.constant 0 : index
    %444 = vector.load %arg15[%c0_315, %c2_316, %c0_317] : memref<2x24x128xf32, #tpu.memory_space<vmem>>, vector<1x14x128xf32>
    %445 = vector.shape_cast %444 : vector<1x14x128xf32> to vector<14x128xf32>
    %c1_318 = arith.constant 1 : index
    %c2_319 = arith.constant 2 : index
    %c0_320 = arith.constant 0 : index
    %446 = vector.load %arg15[%c1_318, %c2_319, %c0_320] : memref<2x24x128xf32, #tpu.memory_space<vmem>>, vector<1x14x128xf32>
    %447 = vector.shape_cast %446 : vector<1x14x128xf32> to vector<14x128xf32>
    %448 = tpu.concatenate %445, %447 in 0 : vector<14x128xf32>, vector<14x128xf32> -> vector<28x128xf32>
    %449 = arith.addf %443, %448 : vector<28x128xf32>
    %450 = vector.extract_strided_slice %449 {offsets = [0, 0], sizes = [14, 128], strides = [1, 1]} : vector<28x128xf32> to vector<14x128xf32>
    %c0_321 = arith.constant 0 : index
    %c2_322 = arith.constant 2 : index
    %c0_323 = arith.constant 0 : index
    %451 = vector.load %arg15[%c0_321, %c2_322, %c0_323] : memref<2x24x128xf32, #tpu.memory_space<vmem>>, vector<1x14x128xf32>
    %452 = vector.shape_cast %451 : vector<1x14x128xf32> to vector<14x128xf32>
    %453 = vector.shape_cast %450 : vector<14x128xf32> to vector<1x14x128xf32>
    tpu.vector_store %arg15[%c0_321, %c2_322, %c0_323], %453 {strides = array<i32>} : memref<2x24x128xf32, #tpu.memory_space<vmem>>, vector<1x14x128xf32>,
    %454 = vector.extract_strided_slice %449 {offsets = [14, 0], sizes = [14, 128], strides = [1, 1]} : vector<28x128xf32> to vector<14x128xf32>
    %c1_324 = arith.constant 1 : index
    %c2_325 = arith.constant 2 : index
    %c0_326 = arith.constant 0 : index
    %455 = vector.load %arg15[%c1_324, %c2_325, %c0_326] : memref<2x24x128xf32, #tpu.memory_space<vmem>>, vector<1x14x128xf32>
    %456 = vector.shape_cast %455 : vector<1x14x128xf32> to vector<14x128xf32>
    %457 = vector.shape_cast %454 : vector<14x128xf32> to vector<1x14x128xf32>
    tpu.vector_store %arg15[%c1_324, %c2_325, %c0_326], %457 {strides = array<i32>} : memref<2x24x128xf32, #tpu.memory_space<vmem>>, vector<1x14x128xf32>,
    %c6 = arith.constant 6 : index
    %c0_327 = arith.constant 0 : index
    %c0_328 = arith.constant 0 : index
    %458 = vector.load %arg6[%c6, %c0_327, %c0_328] : memref<8x128x128xbf16, #tpu.memory_space<vmem>>, vector<1x128x128xbf16>
    %459 = vector.shape_cast %458 : vector<1x128x128xbf16> to vector<128x128xbf16>
    %c6_329 = arith.constant 6 : index
    %c0_330 = arith.constant 0 : index
    %c0_331 = arith.constant 0 : index
    %460 = vector.load %arg7[%c6_329, %c0_330, %c0_331] : memref<8x1x128xf32, #tpu.memory_space<vmem>>, vector<1x1x128xf32>
    %461 = vector.shape_cast %460 : vector<1x1x128xf32> to vector<1x128xf32>
    %c6_332 = arith.constant 6 : index
    %c0_333 = arith.constant 0 : index
    %c0_334 = arith.constant 0 : index
    %462 = vector.load %arg8[%c6_332, %c0_333, %c0_334] : memref<8x1x128xf32, #tpu.memory_space<vmem>>, vector<1x1x128xf32>
    %463 = vector.shape_cast %462 : vector<1x1x128xf32> to vector<1x128xf32>
    %c0_335 = arith.constant 0 : index
    %c1_336 = arith.constant 1 : index
    %c0_337 = arith.constant 0 : index
    %464 = vector.load %arg15[%c0_335, %c1_336, %c0_337] : memref<2x24x128xf32, #tpu.memory_space<vmem>>, vector<1x14x128xf32>
    %465 = vector.shape_cast %464 : vector<1x14x128xf32> to vector<14x128xf32>
    %c1_338 = arith.constant 1 : index
    %c1_339 = arith.constant 1 : index
    %c0_340 = arith.constant 0 : index
    %466 = vector.load %arg15[%c1_338, %c1_339, %c0_340] : memref<2x24x128xf32, #tpu.memory_space<vmem>>, vector<1x14x128xf32>
    %467 = vector.shape_cast %466 : vector<1x14x128xf32> to vector<14x128xf32>
    %468 = tpu.concatenate %465, %467 in 0 : vector<14x128xf32>, vector<14x128xf32> -> vector<28x128xf32>
    %c0_341 = arith.constant 0 : index
    %c2_342 = arith.constant 2 : index
    %c0_343 = arith.constant 0 : index
    %469 = vector.load %arg15[%c0_341, %c2_342, %c0_343] : memref<2x24x128xf32, #tpu.memory_space<vmem>>, vector<1x14x128xf32>
    %470 = vector.shape_cast %469 : vector<1x14x128xf32> to vector<14x128xf32>
    %c1_344 = arith.constant 1 : index
    %c2_345 = arith.constant 2 : index
    %c0_346 = arith.constant 0 : index
    %471 = vector.load %arg15[%c1_344, %c2_345, %c0_346] : memref<2x24x128xf32, #tpu.memory_space<vmem>>, vector<1x14x128xf32>
    %472 = vector.shape_cast %471 : vector<1x14x128xf32> to vector<14x128xf32>
    %473 = tpu.concatenate %470, %472 in 0 : vector<14x128xf32>, vector<14x128xf32> -> vector<28x128xf32>
    %c0_347 = arith.constant 0 : index
    %c3_348 = arith.constant 3 : index
    %c0_349 = arith.constant 0 : index
    %474 = vector.load %arg15[%c0_347, %c3_348, %c0_349] : memref<2x24x128xf32, #tpu.memory_space<vmem>>, vector<1x14x128xf32>
    %475 = vector.shape_cast %474 : vector<1x14x128xf32> to vector<14x128xf32>
    %c1_350 = arith.constant 1 : index
    %c3_351 = arith.constant 3 : index
    %c0_352 = arith.constant 0 : index
    %476 = vector.load %arg15[%c1_350, %c3_351, %c0_352] : memref<2x24x128xf32, #tpu.memory_space<vmem>>, vector<1x14x128xf32>
    %477 = vector.shape_cast %476 : vector<1x14x128xf32> to vector<14x128xf32>
    %478 = tpu.concatenate %475, %477 in 0 : vector<14x128xf32>, vector<14x128xf32> -> vector<28x128xf32>
    %c64_i32_353 = arith.constant 64 : i32
    %479 = vector.broadcast %c64_i32_353 : i32 to vector<28x128xi32>
    %480 = arith.cmpi slt, %47, %479 : vector<28x128xi32>
    %481 = arith.select %480, %473, %478 : vector<28x128xi1>, vector<28x128xf32>
    %c32_i32_354 = arith.constant 32 : i32
    %482 = vector.broadcast %c32_i32_354 : i32 to vector<28x128xi32>
    %483 = arith.cmpi slt, %47, %482 : vector<28x128xi32>
    %484 = arith.select %483, %468, %481 : vector<28x128xi1>, vector<28x128xf32>
    %485 = arith.truncf %484 : vector<28x128xf32> to vector<28x128xbf16>
    %cst_355 = arith.constant dense<0.000000e+00> : vector<28x128xf32>
    %486 = tpu.matmul %485, %459, %cst_355 {dimension_numbers = #tpu.dot_dimension_numbers<[1], [0], [0], [1], [0, 0, 1, 1], [], []>} : vector<28x128xbf16>, vector<128x128xbf16>, vector<28x128xf32> -> vector<28x128xf32>
    %cst_356 = arith.constant dense<0.000000e+00> : vector<128xf32>
    %487 = vector.multi_reduction <add>, %486, %cst_356 [0] : vector<28x128xf32> to vector<128xf32>
    %488 = vector.shape_cast %487 : vector<128xf32> to vector<1x128xf32>
    %cst_357 = arith.constant 0.0357142873 : f32
    %489 = vector.broadcast %cst_357 : f32 to vector<1x128xf32>
    %490 = arith.mulf %488, %489 : vector<1x128xf32>
    %491 = arith.mulf %486, %486 : vector<28x128xf32>
    %cst_358 = arith.constant dense<0.000000e+00> : vector<128xf32>
    %492 = vector.multi_reduction <add>, %491, %cst_358 [0] : vector<28x128xf32> to vector<128xf32>
    %493 = vector.shape_cast %492 : vector<128xf32> to vector<1x128xf32>
    %cst_359 = arith.constant 0.0357142873 : f32
    %494 = vector.broadcast %cst_359 : f32 to vector<1x128xf32>
    %495 = arith.mulf %493, %494 : vector<1x128xf32>
    %496 = arith.mulf %490, %490 : vector<1x128xf32>
    %497 = arith.subf %495, %496 : vector<1x128xf32>
    %cst_360 = arith.constant 0.000000e+00 : f32
    %498 = vector.broadcast %cst_360 : f32 to vector<1x128xf32>
    %499 = arith.maximumf %497, %498 : vector<1x128xf32>
    %cst_361 = arith.constant 9.99999974E-6 : f32
    %500 = vector.broadcast %cst_361 : f32 to vector<1x128xf32>
    %501 = arith.addf %499, %500 : vector<1x128xf32>
    %502 = math.rsqrt %501 : vector<1x128xf32>
    %503 = arith.mulf %502, %461 : vector<1x128xf32>
    %504 = arith.mulf %490, %503 : vector<1x128xf32>
    %505 = arith.subf %463, %504 : vector<1x128xf32>
    %506 = vector.broadcast %503 : vector<1x128xf32> to vector<28x128xf32>
    %507 = arith.mulf %486, %506 : vector<28x128xf32>
    %508 = vector.broadcast %505 : vector<1x128xf32> to vector<28x128xf32>
    %509 = arith.addf %507, %508 : vector<28x128xf32>
    %cst_362 = arith.constant 0.000000e+00 : f32
    %510 = vector.broadcast %cst_362 : f32 to vector<28x128xf32>
    %511 = arith.maximumf %509, %510 : vector<28x128xf32>
    %512 = vector.extract_strided_slice %511 {offsets = [0, 0], sizes = [14, 128], strides = [1, 1]} : vector<28x128xf32> to vector<14x128xf32>
    %c0_363 = arith.constant 0 : index
    %c2_364 = arith.constant 2 : index
    %c0_365 = arith.constant 0 : index
    %513 = vector.load %arg14[%c0_363, %c2_364, %c0_365] : memref<2x24x128xf32, #tpu.memory_space<vmem>>, vector<1x14x128xf32>
    %514 = vector.shape_cast %513 : vector<1x14x128xf32> to vector<14x128xf32>
    %515 = vector.shape_cast %512 : vector<14x128xf32> to vector<1x14x128xf32>
    tpu.vector_store %arg14[%c0_363, %c2_364, %c0_365], %515 {strides = array<i32>} : memref<2x24x128xf32, #tpu.memory_space<vmem>>, vector<1x14x128xf32>,
    %516 = vector.extract_strided_slice %511 {offsets = [14, 0], sizes = [14, 128], strides = [1, 1]} : vector<28x128xf32> to vector<14x128xf32>
    %c1_366 = arith.constant 1 : index
    %c2_367 = arith.constant 2 : index
    %c0_368 = arith.constant 0 : index
    %517 = vector.load %arg14[%c1_366, %c2_367, %c0_368] : memref<2x24x128xf32, #tpu.memory_space<vmem>>, vector<1x14x128xf32>
    %518 = vector.shape_cast %517 : vector<1x14x128xf32> to vector<14x128xf32>
    %519 = vector.shape_cast %516 : vector<14x128xf32> to vector<1x14x128xf32>
    tpu.vector_store %arg14[%c1_366, %c2_367, %c0_368], %519 {strides = array<i32>} : memref<2x24x128xf32, #tpu.memory_space<vmem>>, vector<1x14x128xf32>,
    %c7 = arith.constant 7 : index
    %c0_369 = arith.constant 0 : index
    %c0_370 = arith.constant 0 : index
    %520 = vector.load %arg6[%c7, %c0_369, %c0_370] : memref<8x128x128xbf16, #tpu.memory_space<vmem>>, vector<1x128x128xbf16>
    %521 = vector.shape_cast %520 : vector<1x128x128xbf16> to vector<128x128xbf16>
    %c7_371 = arith.constant 7 : index
    %c0_372 = arith.constant 0 : index
    %c0_373 = arith.constant 0 : index
    %522 = vector.load %arg7[%c7_371, %c0_372, %c0_373] : memref<8x1x128xf32, #tpu.memory_space<vmem>>, vector<1x1x128xf32>
    %523 = vector.shape_cast %522 : vector<1x1x128xf32> to vector<1x128xf32>
    %c7_374 = arith.constant 7 : index
    %c0_375 = arith.constant 0 : index
    %c0_376 = arith.constant 0 : index
    %524 = vector.load %arg8[%c7_374, %c0_375, %c0_376] : memref<8x1x128xf32, #tpu.memory_space<vmem>>, vector<1x1x128xf32>
    %525 = vector.shape_cast %524 : vector<1x1x128xf32> to vector<1x128xf32>
    %c0_377 = arith.constant 0 : index
    %c1_378 = arith.constant 1 : index
    %c0_379 = arith.constant 0 : index
    %526 = vector.load %arg14[%c0_377, %c1_378, %c0_379] : memref<2x24x128xf32, #tpu.memory_space<vmem>>, vector<1x14x128xf32>
    %527 = vector.shape_cast %526 : vector<1x14x128xf32> to vector<14x128xf32>
    %c1_380 = arith.constant 1 : index
    %c1_381 = arith.constant 1 : index
    %c0_382 = arith.constant 0 : index
    %528 = vector.load %arg14[%c1_380, %c1_381, %c0_382] : memref<2x24x128xf32, #tpu.memory_space<vmem>>, vector<1x14x128xf32>
    %529 = vector.shape_cast %528 : vector<1x14x128xf32> to vector<14x128xf32>
    %530 = tpu.concatenate %527, %529 in 0 : vector<14x128xf32>, vector<14x128xf32> -> vector<28x128xf32>
    %c0_383 = arith.constant 0 : index
    %c2_384 = arith.constant 2 : index
    %c0_385 = arith.constant 0 : index
    %531 = vector.load %arg14[%c0_383, %c2_384, %c0_385] : memref<2x24x128xf32, #tpu.memory_space<vmem>>, vector<1x14x128xf32>
    %532 = vector.shape_cast %531 : vector<1x14x128xf32> to vector<14x128xf32>
    %c1_386 = arith.constant 1 : index
    %c2_387 = arith.constant 2 : index
    %c0_388 = arith.constant 0 : index
    %533 = vector.load %arg14[%c1_386, %c2_387, %c0_388] : memref<2x24x128xf32, #tpu.memory_space<vmem>>, vector<1x14x128xf32>
    %534 = vector.shape_cast %533 : vector<1x14x128xf32> to vector<14x128xf32>
    %535 = tpu.concatenate %532, %534 in 0 : vector<14x128xf32>, vector<14x128xf32> -> vector<28x128xf32>
    %c0_389 = arith.constant 0 : index
    %c3_390 = arith.constant 3 : index
    %c0_391 = arith.constant 0 : index
    %536 = vector.load %arg14[%c0_389, %c3_390, %c0_391] : memref<2x24x128xf32, #tpu.memory_space<vmem>>, vector<1x14x128xf32>
    %537 = vector.shape_cast %536 : vector<1x14x128xf32> to vector<14x128xf32>
    %c1_392 = arith.constant 1 : index
    %c3_393 = arith.constant 3 : index
    %c0_394 = arith.constant 0 : index
    %538 = vector.load %arg14[%c1_392, %c3_393, %c0_394] : memref<2x24x128xf32, #tpu.memory_space<vmem>>, vector<1x14x128xf32>
    %539 = vector.shape_cast %538 : vector<1x14x128xf32> to vector<14x128xf32>
    %540 = tpu.concatenate %537, %539 in 0 : vector<14x128xf32>, vector<14x128xf32> -> vector<28x128xf32>
    %c64_i32_395 = arith.constant 64 : i32
    %541 = vector.broadcast %c64_i32_395 : i32 to vector<28x128xi32>
    %542 = arith.cmpi slt, %47, %541 : vector<28x128xi32>
    %543 = arith.select %542, %535, %540 : vector<28x128xi1>, vector<28x128xf32>
    %c32_i32_396 = arith.constant 32 : i32
    %544 = vector.broadcast %c32_i32_396 : i32 to vector<28x128xi32>
    %545 = arith.cmpi slt, %47, %544 : vector<28x128xi32>
    %546 = arith.select %545, %530, %543 : vector<28x128xi1>, vector<28x128xf32>
    %547 = arith.truncf %546 : vector<28x128xf32> to vector<28x128xbf16>
    %cst_397 = arith.constant dense<0.000000e+00> : vector<28x128xf32>
    %548 = tpu.matmul %547, %521, %cst_397 {dimension_numbers = #tpu.dot_dimension_numbers<[1], [0], [0], [1], [0, 0, 1, 1], [], []>} : vector<28x128xbf16>, vector<128x128xbf16>, vector<28x128xf32> -> vector<28x128xf32>
    %cst_398 = arith.constant dense<0.000000e+00> : vector<128xf32>
    %549 = vector.multi_reduction <add>, %548, %cst_398 [0] : vector<28x128xf32> to vector<128xf32>
    %550 = vector.shape_cast %549 : vector<128xf32> to vector<1x128xf32>
    %cst_399 = arith.constant 0.0357142873 : f32
    %551 = vector.broadcast %cst_399 : f32 to vector<1x128xf32>
    %552 = arith.mulf %550, %551 : vector<1x128xf32>
    %553 = arith.mulf %548, %548 : vector<28x128xf32>
    %cst_400 = arith.constant dense<0.000000e+00> : vector<128xf32>
    %554 = vector.multi_reduction <add>, %553, %cst_400 [0] : vector<28x128xf32> to vector<128xf32>
    %555 = vector.shape_cast %554 : vector<128xf32> to vector<1x128xf32>
    %cst_401 = arith.constant 0.0357142873 : f32
    %556 = vector.broadcast %cst_401 : f32 to vector<1x128xf32>
    %557 = arith.mulf %555, %556 : vector<1x128xf32>
    %558 = arith.mulf %552, %552 : vector<1x128xf32>
    %559 = arith.subf %557, %558 : vector<1x128xf32>
    %cst_402 = arith.constant 0.000000e+00 : f32
    %560 = vector.broadcast %cst_402 : f32 to vector<1x128xf32>
    %561 = arith.maximumf %559, %560 : vector<1x128xf32>
    %cst_403 = arith.constant 9.99999974E-6 : f32
    %562 = vector.broadcast %cst_403 : f32 to vector<1x128xf32>
    %563 = arith.addf %561, %562 : vector<1x128xf32>
    %564 = math.rsqrt %563 : vector<1x128xf32>
    %565 = arith.mulf %564, %523 : vector<1x128xf32>
    %566 = arith.mulf %552, %565 : vector<1x128xf32>
    %567 = arith.subf %525, %566 : vector<1x128xf32>
    %568 = vector.broadcast %565 : vector<1x128xf32> to vector<28x128xf32>
    %569 = arith.mulf %548, %568 : vector<28x128xf32>
    %570 = vector.broadcast %567 : vector<1x128xf32> to vector<28x128xf32>
    %571 = arith.addf %569, %570 : vector<28x128xf32>
    %c0_404 = arith.constant 0 : index
    %c2_405 = arith.constant 2 : index
    %c0_406 = arith.constant 0 : index
    %572 = vector.load %arg15[%c0_404, %c2_405, %c0_406] : memref<2x24x128xf32, #tpu.memory_space<vmem>>, vector<1x14x128xf32>
    %573 = vector.shape_cast %572 : vector<1x14x128xf32> to vector<14x128xf32>
    %c1_407 = arith.constant 1 : index
    %c2_408 = arith.constant 2 : index
    %c0_409 = arith.constant 0 : index
    %574 = vector.load %arg15[%c1_407, %c2_408, %c0_409] : memref<2x24x128xf32, #tpu.memory_space<vmem>>, vector<1x14x128xf32>
    %575 = vector.shape_cast %574 : vector<1x14x128xf32> to vector<14x128xf32>
    %576 = tpu.concatenate %573, %575 in 0 : vector<14x128xf32>, vector<14x128xf32> -> vector<28x128xf32>
    %577 = arith.addf %571, %576 : vector<28x128xf32>
    %578 = vector.extract_strided_slice %577 {offsets = [0, 0], sizes = [14, 128], strides = [1, 1]} : vector<28x128xf32> to vector<14x128xf32>
    %c0_410 = arith.constant 0 : index
    %c2_411 = arith.constant 2 : index
    %c0_412 = arith.constant 0 : index
    %579 = vector.load %arg15[%c0_410, %c2_411, %c0_412] : memref<2x24x128xf32, #tpu.memory_space<vmem>>, vector<1x14x128xf32>
    %580 = vector.shape_cast %579 : vector<1x14x128xf32> to vector<14x128xf32>
    %581 = vector.shape_cast %578 : vector<14x128xf32> to vector<1x14x128xf32>
    tpu.vector_store %arg15[%c0_410, %c2_411, %c0_412], %581 {strides = array<i32>} : memref<2x24x128xf32, #tpu.memory_space<vmem>>, vector<1x14x128xf32>,
    %582 = vector.extract_strided_slice %577 {offsets = [14, 0], sizes = [14, 128], strides = [1, 1]} : vector<28x128xf32> to vector<14x128xf32>
    %c1_413 = arith.constant 1 : index
    %c2_414 = arith.constant 2 : index
    %c0_415 = arith.constant 0 : index
    %583 = vector.load %arg15[%c1_413, %c2_414, %c0_415] : memref<2x24x128xf32, #tpu.memory_space<vmem>>, vector<1x14x128xf32>
    %584 = vector.shape_cast %583 : vector<1x14x128xf32> to vector<14x128xf32>
    %585 = vector.shape_cast %582 : vector<14x128xf32> to vector<1x14x128xf32>
    tpu.vector_store %arg15[%c1_413, %c2_414, %c0_415], %585 {strides = array<i32>} : memref<2x24x128xf32, #tpu.memory_space<vmem>>, vector<1x14x128xf32>,
    %c0_416 = arith.constant 0 : index
    %c0_417 = arith.constant 0 : index
    %586 = vector.load %arg9[%c0_416, %c0_417] : memref<128x128xbf16, #tpu.memory_space<vmem>>, vector<128x128xbf16>
    %c0_418 = arith.constant 0 : index
    %c0_419 = arith.constant 0 : index
    %587 = vector.load %arg10[%c0_418, %c0_419] : memref<1x128xf32, #tpu.memory_space<vmem>>, vector<1x128xf32>
    %c0_420 = arith.constant 0 : index
    %c0_421 = arith.constant 0 : index
    %588 = vector.load %arg11[%c0_420, %c0_421] : memref<1x128xf32, #tpu.memory_space<vmem>>, vector<1x128xf32>
    %c0_422 = arith.constant 0 : index
    %c1_423 = arith.constant 1 : index
    %c0_424 = arith.constant 0 : index
    %589 = vector.load %arg15[%c0_422, %c1_423, %c0_424] : memref<2x24x128xf32, #tpu.memory_space<vmem>>, vector<1x14x128xf32>
    %590 = vector.shape_cast %589 : vector<1x14x128xf32> to vector<14x128xf32>
    %c1_425 = arith.constant 1 : index
    %c1_426 = arith.constant 1 : index
    %c0_427 = arith.constant 0 : index
    %591 = vector.load %arg15[%c1_425, %c1_426, %c0_427] : memref<2x24x128xf32, #tpu.memory_space<vmem>>, vector<1x14x128xf32>
    %592 = vector.shape_cast %591 : vector<1x14x128xf32> to vector<14x128xf32>
    %593 = tpu.concatenate %590, %592 in 0 : vector<14x128xf32>, vector<14x128xf32> -> vector<28x128xf32>
    %c0_428 = arith.constant 0 : index
    %c2_429 = arith.constant 2 : index
    %c0_430 = arith.constant 0 : index
    %594 = vector.load %arg15[%c0_428, %c2_429, %c0_430] : memref<2x24x128xf32, #tpu.memory_space<vmem>>, vector<1x14x128xf32>
    %595 = vector.shape_cast %594 : vector<1x14x128xf32> to vector<14x128xf32>
    %c1_431 = arith.constant 1 : index
    %c2_432 = arith.constant 2 : index
    %c0_433 = arith.constant 0 : index
    %596 = vector.load %arg15[%c1_431, %c2_432, %c0_433] : memref<2x24x128xf32, #tpu.memory_space<vmem>>, vector<1x14x128xf32>
    %597 = vector.shape_cast %596 : vector<1x14x128xf32> to vector<14x128xf32>
    %598 = tpu.concatenate %595, %597 in 0 : vector<14x128xf32>, vector<14x128xf32> -> vector<28x128xf32>
    %c0_434 = arith.constant 0 : index
    %c3_435 = arith.constant 3 : index
    %c0_436 = arith.constant 0 : index
    %599 = vector.load %arg15[%c0_434, %c3_435, %c0_436] : memref<2x24x128xf32, #tpu.memory_space<vmem>>, vector<1x14x128xf32>
    %600 = vector.shape_cast %599 : vector<1x14x128xf32> to vector<14x128xf32>
    %c1_437 = arith.constant 1 : index
    %c3_438 = arith.constant 3 : index
    %c0_439 = arith.constant 0 : index
    %601 = vector.load %arg15[%c1_437, %c3_438, %c0_439] : memref<2x24x128xf32, #tpu.memory_space<vmem>>, vector<1x14x128xf32>
    %602 = vector.shape_cast %601 : vector<1x14x128xf32> to vector<14x128xf32>
    %603 = tpu.concatenate %600, %602 in 0 : vector<14x128xf32>, vector<14x128xf32> -> vector<28x128xf32>
    %c64_i32_440 = arith.constant 64 : i32
    %604 = vector.broadcast %c64_i32_440 : i32 to vector<28x128xi32>
    %605 = arith.cmpi slt, %47, %604 : vector<28x128xi32>
    %606 = arith.select %605, %598, %603 : vector<28x128xi1>, vector<28x128xf32>
    %c32_i32_441 = arith.constant 32 : i32
    %607 = vector.broadcast %c32_i32_441 : i32 to vector<28x128xi32>
    %608 = arith.cmpi slt, %47, %607 : vector<28x128xi32>
    %609 = arith.select %608, %593, %606 : vector<28x128xi1>, vector<28x128xf32>
    %610 = arith.truncf %609 : vector<28x128xf32> to vector<28x128xbf16>
    %cst_442 = arith.constant dense<0.000000e+00> : vector<28x128xf32>
    %611 = tpu.matmul %610, %586, %cst_442 {dimension_numbers = #tpu.dot_dimension_numbers<[1], [0], [0], [1], [0, 0, 1, 1], [], []>} : vector<28x128xbf16>, vector<128x128xbf16>, vector<28x128xf32> -> vector<28x128xf32>
    %cst_443 = arith.constant dense<0.000000e+00> : vector<128xf32>
    %612 = vector.multi_reduction <add>, %611, %cst_443 [0] : vector<28x128xf32> to vector<128xf32>
    %613 = vector.shape_cast %612 : vector<128xf32> to vector<1x128xf32>
    %cst_444 = arith.constant 0.0357142873 : f32
    %614 = vector.broadcast %cst_444 : f32 to vector<1x128xf32>
    %615 = arith.mulf %613, %614 : vector<1x128xf32>
    %616 = arith.mulf %611, %611 : vector<28x128xf32>
    %cst_445 = arith.constant dense<0.000000e+00> : vector<128xf32>
    %617 = vector.multi_reduction <add>, %616, %cst_445 [0] : vector<28x128xf32> to vector<128xf32>
    %618 = vector.shape_cast %617 : vector<128xf32> to vector<1x128xf32>
    %cst_446 = arith.constant 0.0357142873 : f32
    %619 = vector.broadcast %cst_446 : f32 to vector<1x128xf32>
    %620 = arith.mulf %618, %619 : vector<1x128xf32>
    %621 = arith.mulf %615, %615 : vector<1x128xf32>
    %622 = arith.subf %620, %621 : vector<1x128xf32>
    %cst_447 = arith.constant 0.000000e+00 : f32
    %623 = vector.broadcast %cst_447 : f32 to vector<1x128xf32>
    %624 = arith.maximumf %622, %623 : vector<1x128xf32>
    %cst_448 = arith.constant 9.99999974E-6 : f32
    %625 = vector.broadcast %cst_448 : f32 to vector<1x128xf32>
    %626 = arith.addf %624, %625 : vector<1x128xf32>
    %627 = math.rsqrt %626 : vector<1x128xf32>
    %628 = arith.mulf %627, %587 : vector<1x128xf32>
    %629 = arith.mulf %615, %628 : vector<1x128xf32>
    %630 = arith.subf %588, %629 : vector<1x128xf32>
    %631 = vector.broadcast %628 : vector<1x128xf32> to vector<28x128xf32>
    %632 = arith.mulf %611, %631 : vector<28x128xf32>
    %633 = vector.broadcast %630 : vector<1x128xf32> to vector<28x128xf32>
    %634 = arith.addf %632, %633 : vector<28x128xf32>
    %cst_449 = arith.constant 0.000000e+00 : f32
    %635 = vector.broadcast %cst_449 : f32 to vector<28x128xf32>
    %636 = arith.maximumf %634, %635 : vector<28x128xf32>
    %637 = vector.extract_strided_slice %636 {offsets = [0, 0], sizes = [14, 128], strides = [1, 1]} : vector<28x128xf32> to vector<14x128xf32>
    %c0_450 = arith.constant 0 : index
    %c2_451 = arith.constant 2 : index
    %c0_452 = arith.constant 0 : index
    %638 = vector.load %arg14[%c0_450, %c2_451, %c0_452] : memref<2x24x128xf32, #tpu.memory_space<vmem>>, vector<1x14x128xf32>
    %639 = vector.shape_cast %638 : vector<1x14x128xf32> to vector<14x128xf32>
    %640 = vector.shape_cast %637 : vector<14x128xf32> to vector<1x14x128xf32>
    tpu.vector_store %arg14[%c0_450, %c2_451, %c0_452], %640 {strides = array<i32>} : memref<2x24x128xf32, #tpu.memory_space<vmem>>, vector<1x14x128xf32>,
    %641 = vector.extract_strided_slice %636 {offsets = [14, 0], sizes = [14, 128], strides = [1, 1]} : vector<28x128xf32> to vector<14x128xf32>
    %c1_453 = arith.constant 1 : index
    %c2_454 = arith.constant 2 : index
    %c0_455 = arith.constant 0 : index
    %642 = vector.load %arg14[%c1_453, %c2_454, %c0_455] : memref<2x24x128xf32, #tpu.memory_space<vmem>>, vector<1x14x128xf32>
    %643 = vector.shape_cast %642 : vector<1x14x128xf32> to vector<14x128xf32>
    %644 = vector.shape_cast %641 : vector<14x128xf32> to vector<1x14x128xf32>
    tpu.vector_store %arg14[%c1_453, %c2_454, %c0_455], %644 {strides = array<i32>} : memref<2x24x128xf32, #tpu.memory_space<vmem>>, vector<1x14x128xf32>,
    %c0_456 = arith.constant 0 : index
    %c0_457 = arith.constant 0 : index
    %645 = vector.load %arg12[%c0_456, %c0_457] : memref<128x128xbf16, #tpu.memory_space<vmem>>, vector<128x128xbf16>
    %c0_458 = arith.constant 0 : index
    %c0_459 = arith.constant 0 : index
    %c0_460 = arith.constant 0 : index
    %646 = vector.load %arg14[%c0_458, %c0_459, %c0_460] : memref<2x24x128xf32, #tpu.memory_space<vmem>>, vector<1x16x128xf32>
    %647 = vector.shape_cast %646 : vector<1x16x128xf32> to vector<16x128xf32>
    %c1_461 = arith.constant 1 : index
    %c0_462 = arith.constant 0 : index
    %c0_463 = arith.constant 0 : index
    %648 = vector.load %arg14[%c1_461, %c0_462, %c0_463] : memref<2x24x128xf32, #tpu.memory_space<vmem>>, vector<1x16x128xf32>
    %649 = vector.shape_cast %648 : vector<1x16x128xf32> to vector<16x128xf32>
    %650 = tpu.concatenate %647, %649 in 0 : vector<16x128xf32>, vector<16x128xf32> -> vector<32x128xf32>
    %c0_464 = arith.constant 0 : index
    %c1_465 = arith.constant 1 : index
    %c0_466 = arith.constant 0 : index
    %651 = vector.load %arg14[%c0_464, %c1_465, %c0_466] : memref<2x24x128xf32, #tpu.memory_space<vmem>>, vector<1x16x128xf32>
    %652 = vector.shape_cast %651 : vector<1x16x128xf32> to vector<16x128xf32>
    %c1_467 = arith.constant 1 : index
    %c1_468 = arith.constant 1 : index
    %c0_469 = arith.constant 0 : index
    %653 = vector.load %arg14[%c1_467, %c1_468, %c0_469] : memref<2x24x128xf32, #tpu.memory_space<vmem>>, vector<1x16x128xf32>
    %654 = vector.shape_cast %653 : vector<1x16x128xf32> to vector<16x128xf32>
    %655 = tpu.concatenate %652, %654 in 0 : vector<16x128xf32>, vector<16x128xf32> -> vector<32x128xf32>
    %c0_470 = arith.constant 0 : index
    %c2_471 = arith.constant 2 : index
    %c0_472 = arith.constant 0 : index
    %656 = vector.load %arg14[%c0_470, %c2_471, %c0_472] : memref<2x24x128xf32, #tpu.memory_space<vmem>>, vector<1x16x128xf32>
    %657 = vector.shape_cast %656 : vector<1x16x128xf32> to vector<16x128xf32>
    %c1_473 = arith.constant 1 : index
    %c2_474 = arith.constant 2 : index
    %c0_475 = arith.constant 0 : index
    %658 = vector.load %arg14[%c1_473, %c2_474, %c0_475] : memref<2x24x128xf32, #tpu.memory_space<vmem>>, vector<1x16x128xf32>
    %659 = vector.shape_cast %658 : vector<1x16x128xf32> to vector<16x128xf32>
    %660 = tpu.concatenate %657, %659 in 0 : vector<16x128xf32>, vector<16x128xf32> -> vector<32x128xf32>
    %661 = tpu.iota {dimensions = array<i32: 1>} : vector<32x128xi32>
    %c32_i32_476 = arith.constant 32 : i32
    %662 = vector.broadcast %c32_i32_476 : i32 to vector<32x128xi32>
    %663 = arith.cmpi slt, %661, %662 : vector<32x128xi32>
    %664 = arith.select %663, %655, %660 : vector<32x128xi1>, vector<32x128xf32>
    %c16_i32_477 = arith.constant 16 : i32
    %665 = vector.broadcast %c16_i32_477 : i32 to vector<32x128xi32>
    %666 = arith.cmpi slt, %661, %665 : vector<32x128xi32>
    %667 = arith.select %666, %650, %664 : vector<32x128xi1>, vector<32x128xf32>
    %668 = arith.truncf %667 : vector<32x128xf32> to vector<32x128xbf16>
    %cst_478 = arith.constant dense<0.000000e+00> : vector<32x128xf32>
    %669 = tpu.matmul %668, %645, %cst_478 {dimension_numbers = #tpu.dot_dimension_numbers<[1], [0], [0], [1], [0, 0, 1, 1], [], []>} : vector<32x128xbf16>, vector<128x128xbf16>, vector<32x128xf32> -> vector<32x128xf32>
    %670 = math.tanh %669 : vector<32x128xf32>
    %671 = vector.extract_strided_slice %670 {offsets = [0, 0], sizes = [16, 128], strides = [1, 1]} : vector<32x128xf32> to vector<16x128xf32>
    %c0_479 = arith.constant 0 : index
    %c0_480 = arith.constant 0 : index
    %c0_481 = arith.constant 0 : index
    %672 = vector.load %arg13[%c0_479, %c0_480, %c0_481] : memref<2x16x128xf32, #tpu.memory_space<vmem>>, vector<1x16x128xf32>
    %673 = vector.shape_cast %672 : vector<1x16x128xf32> to vector<16x128xf32>
    %674 = vector.shape_cast %671 : vector<16x128xf32> to vector<1x16x128xf32>
    tpu.vector_store %arg13[%c0_479, %c0_480, %c0_481], %674 {strides = array<i32>} : memref<2x16x128xf32, #tpu.memory_space<vmem>>, vector<1x16x128xf32>,
    %675 = vector.extract_strided_slice %670 {offsets = [16, 0], sizes = [16, 128], strides = [1, 1]} : vector<32x128xf32> to vector<16x128xf32>
    %c1_482 = arith.constant 1 : index
    %c0_483 = arith.constant 0 : index
    %c0_484 = arith.constant 0 : index
    %676 = vector.load %arg13[%c1_482, %c0_483, %c0_484] : memref<2x16x128xf32, #tpu.memory_space<vmem>>, vector<1x16x128xf32>
    %677 = vector.shape_cast %676 : vector<1x16x128xf32> to vector<16x128xf32>
    %678 = vector.shape_cast %675 : vector<16x128xf32> to vector<1x16x128xf32>
    tpu.vector_store %arg13[%c1_482, %c0_483, %c0_484], %678 {strides = array<i32>} : memref<2x16x128xf32, #tpu.memory_space<vmem>>, vector<1x16x128xf32>,
    return
  }
  func.func @transform_0(%arg0: i32) -> (i32, i32, i32) {
    %c0_i32 = arith.constant 0 : i32
    %c0_i32_0 = arith.constant 0 : i32
    %c0_i32_1 = arith.constant 0 : i32
    %c0_i32_2 = arith.constant 0 : i32
    return %c0_i32, %c0_i32_0, %c0_i32_1 : i32, i32, i32
  }
  func.func @transform_1(%arg0: i32) -> (i32, i32) {
    %c0_i32 = arith.constant 0 : i32
    %c0_i32_0 = arith.constant 0 : i32
    %c0_i32_1 = arith.constant 0 : i32
    return %c0_i32, %c0_i32_0 : i32, i32
  }
  func.func @transform_2(%arg0: i32) -> (i32, i32) {
    %c0_i32 = arith.constant 0 : i32
    %c0_i32_0 = arith.constant 0 : i32
    %c0_i32_1 = arith.constant 0 : i32
    return %c0_i32, %c0_i32_0 : i32, i32
  }
  func.func @transform_3(%arg0: i32) -> (i32, i32) {
    %c0_i32 = arith.constant 0 : i32
    %c0_i32_0 = arith.constant 0 : i32
    %c0_i32_1 = arith.constant 0 : i32
    return %c0_i32, %c0_i32_0 : i32, i32
  }
  func.func @transform_4(%arg0: i32) -> (i32, i32) {
    %c0_i32 = arith.constant 0 : i32
    %c0_i32_0 = arith.constant 0 : i32
    %c0_i32_1 = arith.constant 0 : i32
    return %c0_i32, %c0_i32_0 : i32, i32
  }
  func.func @transform_5(%arg0: i32) -> (i32, i32, i32) {
    %c0_i32 = arith.constant 0 : i32
    %c0_i32_0 = arith.constant 0 : i32
    %c0_i32_1 = arith.constant 0 : i32
    %c0_i32_2 = arith.constant 0 : i32
    return %c0_i32, %c0_i32_0, %c0_i32_1 : i32, i32, i32
  }
  func.func @transform_6(%arg0: i32) -> (i32, i32, i32) {
    %c0_i32 = arith.constant 0 : i32
    %c0_i32_0 = arith.constant 0 : i32
    %c0_i32_1 = arith.constant 0 : i32
    %c0_i32_2 = arith.constant 0 : i32
    return %c0_i32, %c0_i32_0, %c0_i32_1 : i32, i32, i32
  }
  func.func @transform_7(%arg0: i32) -> (i32, i32, i32) {
    %c0_i32 = arith.constant 0 : i32
    %c0_i32_0 = arith.constant 0 : i32
    %c0_i32_1 = arith.constant 0 : i32
    %c0_i32_2 = arith.constant 0 : i32
    return %c0_i32, %c0_i32_0, %c0_i32_1 : i32, i32, i32
  }
  func.func @transform_8(%arg0: i32) -> (i32, i32) {
    %c0_i32 = arith.constant 0 : i32
    %c0_i32_0 = arith.constant 0 : i32
    %c0_i32_1 = arith.constant 0 : i32
    return %c0_i32, %c0_i32_0 : i32, i32
  }
  func.func @transform_9(%arg0: i32) -> (i32, i32) {
    %c0_i32 = arith.constant 0 : i32
    %c0_i32_0 = arith.constant 0 : i32
    %c0_i32_1 = arith.constant 0 : i32
    return %c0_i32, %c0_i32_0 : i32, i32
  }
  func.func @transform_10(%arg0: i32) -> (i32, i32) {
    %c0_i32 = arith.constant 0 : i32
    %c0_i32_0 = arith.constant 0 : i32
    %c0_i32_1 = arith.constant 0 : i32
    return %c0_i32, %c0_i32_0 : i32, i32
  }
  func.func @transform_11(%arg0: i32) -> (i32, i32) {
    %c0_i32 = arith.constant 0 : i32
    %c0_i32_0 = arith.constant 0 : i32
    %c0_i32_1 = arith.constant 0 : i32
    return %c0_i32, %c0_i32_0 : i32, i32
  }
  func.func @transform_12(%arg0: i32) -> (i32, i32, i32) {
    %c0_i32 = arith.constant 0 : i32
    %c0_i32_0 = arith.constant 0 : i32
    %c0_i32_1 = arith.constant 0 : i32
    %c0_i32_2 = arith.constant 0 : i32
    return %c0_i32, %c0_i32_0, %c0_i32_1 : i32, i32, i32
  }
}

</mosaic_0001>

<llo_original>
// kernel: tpu_custom_call.1
$region0: #{tpu_custom_call.1}
  #allocation0 [shape = 'u32[]', space=smem, size = 0x4, offset = 0x4, fixed_abs, tag = 'smem constant byte address 0x4 - core index']
  #allocation1 [shape = 'u32[144,128]{1,0:T(1,128)}', space=vmem, size = 0x12000, scoped, tag = 'internal scratch']
  #allocation2 [shape = 'f32[2,24,128]{2,1,0:T(8,128)}', space=vmem, size = 0x6000, scoped, tag = 'scratch operand']
  #allocation3 [shape = 'f32[2,24,128]{2,1,0:T(8,128)}', space=vmem, size = 0x6000, scoped, tag = 'scratch operand']
  %s0 = inlined_call_operand.hbm [shape: f32[2,16,128], index: 0, kind: input, shape index: {}]
  %s1 = inlined_call_operand.hbm [shape: bf16[128,128], index: 1, kind: input, shape index: {}]
  %s2 = inlined_call_operand.vmem [shape: f32[1,128], index: 2, kind: input, shape index: {}]
  %s3 = inlined_call_operand.hbm [shape: bf16[128,128], index: 3, kind: input, shape index: {}]
  %s4 = inlined_call_operand.vmem [shape: f32[1,128], index: 4, kind: input, shape index: {}]
  %s5 = inlined_call_operand.hbm [shape: bf16[8,128,128], index: 5, kind: input, shape index: {}]
  %s6 = inlined_call_operand.vmem [shape: f32[8,1,128], index: 6, kind: input, shape index: {}]
  %s7 = inlined_call_operand.vmem [shape: f32[8,1,128], index: 7, kind: input, shape index: {}]
  %s8 = inlined_call_operand.hbm [shape: bf16[128,128], index: 8, kind: input, shape index: {}]
  %s9 = inlined_call_operand.vmem [shape: f32[1,128], index: 9, kind: input, shape index: {}]
  %s10 = inlined_call_operand.vmem [shape: f32[1,128], index: 10, kind: input, shape index: {}]
  %s11 = inlined_call_operand.hbm [shape: bf16[128,128], index: 11, kind: input, shape index: {}]
  %s12 = inlined_call_operand.hbm [shape: f32[2,16,128], index: 12, kind: output, shape index: {}]
  %s13 = sld [smem:[#allocation0]]
  $region82: #{tpu_custom_call.1} parent=0
    _
  %s15 = ssub.s32 1, %s13
  %s16 = scalar_select 0, %s15, %s13
  $region1: #{tpu_custom_call.1} parent=0
    #allocation4 [shape = 'u8[16384]{0}', space=vmem, size = 0x4000, scoped, tag = 'input window, operand 0, single buffered']
    #allocation5 [shape = 's32[1]{0}', space=sflag, size = 0x4, scoped, tag = 'scoped memory for tpu_custom_call.1']
    #allocation6 [shape = 's32[1]{0}', space=sflag, size = 0x4, scoped, tag = 'scoped memory for tpu_custom_call.1']
    #allocation7 [shape = 'u8[32768]{0}', space=vmem, size = 0x8000, scoped, tag = 'input window, operand 1, single buffered']
    #allocation8 [shape = 's32[1]{0}', space=sflag, size = 0x4, scoped, tag = 'scoped memory for tpu_custom_call.1']
    #allocation9 [shape = 'u8[32768]{0}', space=vmem, size = 0x8000, scoped, tag = 'input window, operand 3, single buffered']
    #allocation10 [shape = 'u8[262144]{0}', space=vmem, size = 0x40000, scoped, tag = 'input window, operand 5, single buffered']
    #allocation11 [shape = 's32[1]{0}', space=sflag, size = 0x4, scoped, tag = 'scoped memory for tpu_custom_call.1']
    #allocation12 [shape = 'u8[32768]{0}', space=vmem, size = 0x8000, scoped, tag = 'input window, operand 8, single buffered']
    #allocation13 [shape = 'u8[32768]{0}', space=vmem, size = 0x8000, scoped, tag = 'input window, operand 11, single buffered']
    #allocation14 [shape = 's32[1]{0}', space=sflag, size = 0x4, scoped, tag = 'scoped memory for tpu_custom_call.1']
    #allocation15 [shape = 'u8[16384]{0}', space=vmem, size = 0x4000, scoped, tag = 'output window, operand 0, single buffered']
    %17 = vsyncpa [#allocation5], 0
    %18 = vsyncpa [#allocation8], 0
    %19 = vsyncpa [#allocation11], 0
    %20 = vsyncpa [#allocation14], 0
    %21 = vsyncpa [#allocation6], 0
    // Predicated region
    $region2: #{tpu_custom_call.1} parent=1 // pred_check
      _
    $region3: #{tpu_custom_call.1} parent=1 // pred_check_branch
      %23 = sbr.rel (0) target = $region5
    $region4: #{tpu_custom_call.1} parent=1 // pred_region
      %s25 = ssub.s32 512, 512
      %26 = vsyncadd [#allocation5], %s25
      %s27 = sshll.u32 [#allocation4], 4
      %s28 = int_to_ptr.vmem [resolvable:$true] %s27
      %33 = dma.hbm_to_vmem [thread:$0]  %s0, 512, %s28, [#allocation5], 128, 128, 8
    $region5: #{tpu_custom_call.1} parent=1 // pred_fallthru
      _
    // Predicated region
    $region6: #{tpu_custom_call.1} parent=1 // pred_check
      _
    $region7: #{tpu_custom_call.1} parent=1 // pred_check_branch
      %35 = sbr.rel (0) target = $region9
    $region8: #{tpu_custom_call.1} parent=1 // pred_region
      %s37 = ssub.s32 1024, 1024
      %38 = vsyncadd [#allocation8], %s37
      %s39 = sshll.u32 [#allocation7], 4
      %s40 = int_to_ptr.vmem [resolvable:$true] %s39
      %45 = dma.hbm_to_vmem [thread:$0]  %s1, 1024, %s40, [#allocation8], 64, 64, 4
    $region9: #{tpu_custom_call.1} parent=1 // pred_fallthru
      _
    // Predicated region
    $region10: #{tpu_custom_call.1} parent=1 // pred_check
      _
    $region11: #{tpu_custom_call.1} parent=1 // pred_check_branch
      %47 = sbr.rel (0) target = $region13
    $region12: #{tpu_custom_call.1} parent=1 // pred_region
      _
    $region13: #{tpu_custom_call.1} parent=1 // pred_fallthru
      _
    // Predicated region
    $region14: #{tpu_custom_call.1} parent=1 // pred_check
      _
    $region15: #{tpu_custom_call.1} parent=1 // pred_check_branch
      %49 = sbr.rel (0) target = $region17
    $region16: #{tpu_custom_call.1} parent=1 // pred_region
      %s51 = ssub.s32 1024, 1024
      %52 = vsyncadd [#allocation8], %s51
      %s53 = sshll.u32 [#allocation9], 4
      %s54 = int_to_ptr.vmem [resolvable:$true] %s53
      %59 = dma.hbm_to_vmem [thread:$0]  %s3, 1024, %s54, [#allocation8], 64, 64, 4
    $region17: #{tpu_custom_call.1} parent=1 // pred_fallthru
      _
    // Predicated region
    $region18: #{tpu_custom_call.1} parent=1 // pred_check
      _
    $region19: #{tpu_custom_call.1} parent=1 // pred_check_branch
      %61 = sbr.rel (0) target = $region21
    $region20: #{tpu_custom_call.1} parent=1 // pred_region
      _
    $region21: #{tpu_custom_call.1} parent=1 // pred_fallthru
      _
    // Predicated region
    $region22: #{tpu_custom_call.1} parent=1 // pred_check
      _
    $region23: #{tpu_custom_call.1} parent=1 // pred_check_branch
      %63 = sbr.rel (0) target = $region25
    $region24: #{tpu_custom_call.1} parent=1 // pred_region
      %s65 = ssub.s32 8192, 8192
      %66 = vsyncadd [#allocation11], %s65
      %s67 = sshll.u32 [#allocation10], 4
      %s68 = int_to_ptr.vmem [resolvable:$true] %s67
      %73 = dma.hbm_to_vmem [thread:$0]  %s5, 8192, %s68, [#allocation11], 64, 64, 4
    $region25: #{tpu_custom_call.1} parent=1 // pred_fallthru
      _
    // Predicated region
    $region26: #{tpu_custom_call.1} parent=1 // pred_check
      _
    $region27: #{tpu_custom_call.1} parent=1 // pred_check_branch
      %75 = sbr.rel (0) target = $region29
    $region28: #{tpu_custom_call.1} parent=1 // pred_region
      _
    $region29: #{tpu_custom_call.1} parent=1 // pred_fallthru
      _
    // Predicated region
    $region30: #{tpu_custom_call.1} parent=1 // pred_check
      _
    $region31: #{tpu_custom_call.1} parent=1 // pred_check_branch
      %77 = sbr.rel (0) target = $region33
    $region32: #{tpu_custom_call.1} parent=1 // pred_region
      _
    $region33: #{tpu_custom_call.1} parent=1 // pred_fallthru
      _
    // Predicated region
    $region34: #{tpu_custom_call.1} parent=1 // pred_check
      _
    $region35: #{tpu_custom_call.1} parent=1 // pred_check_branch
      %79 = sbr.rel (0) target = $region37
    $region36: #{tpu_custom_call.1} parent=1 // pred_region
      %s81 = ssub.s32 1024, 1024
      %82 = vsyncadd [#allocation11], %s81
      %s83 = sshll.u32 [#allocation12], 4
      %s84 = int_to_ptr.vmem [resolvable:$true] %s83
      %89 = dma.hbm_to_vmem [thread:$0]  %s8, 1024, %s84, [#allocation11], 64, 64, 4
    $region37: #{tpu_custom_call.1} parent=1 // pred_fallthru
      _
    // Predicated region
    $region38: #{tpu_custom_call.1} parent=1 // pred_check
      _
    $region39: #{tpu_custom_call.1} parent=1 // pred_check_branch
      %91 = sbr.rel (0) target = $region41
    $region40: #{tpu_custom_call.1} parent=1 // pred_region
      _
    $region41: #{tpu_custom_call.1} parent=1 // pred_fallthru
      _
    // Predicated region
    $region42: #{tpu_custom_call.1} parent=1 // pred_check
      _
    $region43: #{tpu_custom_call.1} parent=1 // pred_check_branch
      %93 = sbr.rel (0) target = $region45
    $region44: #{tpu_custom_call.1} parent=1 // pred_region
      _
    $region45: #{tpu_custom_call.1} parent=1 // pred_fallthru
      _
    // Predicated region
    $region46: #{tpu_custom_call.1} parent=1 // pred_check
      _
    $region47: #{tpu_custom_call.1} parent=1 // pred_check_branch
      %95 = sbr.rel (0) target = $region49
    $region48: #{tpu_custom_call.1} parent=1 // pred_region
      %s97 = ssub.s32 1024, 1024
      %98 = vsyncadd [#allocation14], %s97
      %s99 = sshll.u32 [#allocation13], 4
      %s100 = int_to_ptr.vmem [resolvable:$true] %s99
      %105 = dma.hbm_to_vmem [thread:$0]  %s11, 1024, %s100, [#allocation14], 64, 64, 4
    $region49: #{tpu_custom_call.1} parent=1 // pred_fallthru
      _
    // Predicated region
    $region50: #{tpu_custom_call.1} parent=1 // pred_check
      _
    $region51: #{tpu_custom_call.1} parent=1 // pred_check_branch
      %107 = sbr.rel (0) target = $region53
    $region52: #{tpu_custom_call.1} parent=1 // pred_region
      %108 = dma.done [#allocation5], 512
    $region53: #{tpu_custom_call.1} parent=1 // pred_fallthru
      _
    // Predicated region
    $region54: #{tpu_custom_call.1} parent=1 // pred_check
      _
    $region55: #{tpu_custom_call.1} parent=1 // pred_check_branch
      %110 = sbr.rel (0) target = $region57
    $region56: #{tpu_custom_call.1} parent=1 // pred_region
      %111 = dma.done [#allocation8], 1024
    $region57: #{tpu_custom_call.1} parent=1 // pred_fallthru
      _
    // Predicated region
    $region58: #{tpu_custom_call.1} parent=1 // pred_check
      _
    $region59: #{tpu_custom_call.1} parent=1 // pred_check_branch
      %113 = sbr.rel (0) target = $region61
    $region60: #{tpu_custom_call.1} parent=1 // pred_region
      %114 = dma.done [#allocation8], 1024
    $region61: #{tpu_custom_call.1} parent=1 // pred_fallthru
      _
    // Predicated region
    $region62: #{tpu_custom_call.1} parent=1 // pred_check
      _
    $region63: #{tpu_custom_call.1} parent=1 // pred_check_branch
      %116 = sbr.rel (0) target = $region65
    $region64: #{tpu_custom_call.1} parent=1 // pred_region
      %117 = dma.done [#allocation11], 8192
    $region65: #{tpu_custom_call.1} parent=1 // pred_fallthru
      _
    // Predicated region
    $region66: #{tpu_custom_call.1} parent=1 // pred_check
      _
    $region67: #{tpu_custom_call.1} parent=1 // pred_check_branch
      %119 = sbr.rel (0) target = $region69
    $region68: #{tpu_custom_call.1} parent=1 // pred_region
      %120 = dma.done [#allocation11], 1024
    $region69: #{tpu_custom_call.1} parent=1 // pred_fallthru
      _
    // Predicated region
    $region70: #{tpu_custom_call.1} parent=1 // pred_check
      _
    $region71: #{tpu_custom_call.1} parent=1 // pred_check_branch
      %122 = sbr.rel (0) target = $region73
    $region72: #{tpu_custom_call.1} parent=1 // pred_region
      %123 = dma.done [#allocation14], 1024
    $region73: #{tpu_custom_call.1} parent=1 // pred_fallthru
      _
    %125 = vst [vmem:[#allocation2] sm:$0xff] 0.0
    %126 = vst [vmem:[#allocation2 + $0x8] sm:$0xff] 0.0
    %127 = vst [vmem:[#allocation2 + $0x10] sm:$0xff] 0.0
    %128 = vst [vmem:[#allocation2 + $0x18] sm:$0xff] 0.0
    %129 = vst [vmem:[#allocation2 + $0x20] sm:$0xff] 0.0
    %130 = vst [vmem:[#allocation2 + $0x28] sm:$0xff] 0.0
    %131 = vst [vmem:[#allocation3] sm:$0xff] 0.0
    %132 = vst [vmem:[#allocation3 + $0x8] sm:$0xff] 0.0
    %133 = vst [vmem:[#allocation3 + $0x10] sm:$0xff] 0.0
    %134 = vst [vmem:[#allocation3 + $0x18] sm:$0xff] 0.0
    %135 = vst [vmem:[#allocation3 + $0x20] sm:$0xff] 0.0
    %136 = vst [vmem:[#allocation3 + $0x28] sm:$0xff] 0.0
    %v137 = vld [vmem:[#allocation7] sm:$0xf]
    %v138 = vld [vmem:[#allocation7 + $0x4] sm:$0xf]
    %v139 = vld [vmem:[#allocation7 + $0x8] sm:$0xf]
    %v140 = vld [vmem:[#allocation7 + $0xc] sm:$0xf]
    %v141 = vld [vmem:[#allocation7 + $0x10] sm:$0xf]
    %v142 = vld [vmem:[#allocation7 + $0x14] sm:$0xf]
    %v143 = vld [vmem:[#allocation7 + $0x18] sm:$0xf]
    %v144 = vld [vmem:[#allocation7 + $0x1c] sm:$0xf]
    %v145 = vld [vmem:[#allocation7 + $0x20] sm:$0xf]
    %v146 = vld [vmem:[#allocation7 + $0x24] sm:$0xf]
    %v147 = vld [vmem:[#allocation7 + $0x28] sm:$0xf]
    %v148 = vld [vmem:[#allocation7 + $0x2c] sm:$0xf]
    %v149 = vld [vmem:[#allocation7 + $0x30] sm:$0xf]
    %v150 = vld [vmem:[#allocation7 + $0x34] sm:$0xf]
    %v151 = vld [vmem:[#allocation7 + $0x38] sm:$0xf]
    %v152 = vld [vmem:[#allocation7 + $0x3c] sm:$0xf]
    %v153 = vld [vmem:[%s2] sm:$0x1]
    %v154 = vld [vmem:[#allocation4] sm:$0xff]
    %v155 = vld [vmem:[#allocation4 + $0x8] sm:$0x7f]
    %s156 = scalar_lea.vmem [#allocation4], 16
    %v157 = vld [vmem:[%s156] sm:$0xff]
    %v158 = vld [vmem:[%s156 + $0x8] sm:$0x7f]
    %vm161 = vcmask 1046528
    %v162 = vrot.slane %v157, 1
    %v163 = vrot.slane %v158, 1
    %v164 = vsel %vm161, %v162, %v163
    %v168 = vsel %vm161, %v155, %v162
    %v169 = vld [vmem:[#allocation4 + $0x1] sm:$0xff]
    %v170 = vld [vmem:[#allocation4 + $0x9] sm:$0x7f]
    %v171 = vld [vmem:[%s156 + $0x1] sm:$0xff]
    %v172 = vld [vmem:[%s156 + $0x9] sm:$0x7f]
    %v175 = vrot.slane %v171, 1
    %v176 = vrot.slane %v172, 1
    %v177 = vsel %vm161, %v175, %v176
    %v181 = vsel %vm161, %v170, %v175
    %v182 = vlaneseq
    %v183 = vand.u32 %v182, 127
    %vm184 = vcmp.lt.s32.totalorder %v183, 24
    %v185 = vsel %vm184, %v154, %v169
    %v186 = vsel %vm184, %v168, %v181
    %v187 = vsel %vm184, %v164, %v177
    %v188 = vsel %vm184, %v163, %v176
    %v189 = vpack.c.bf16 %v186, %v185
    %v190 = vpack.c.bf16 %v188, %v187
    %v192 = vlaneseq
    %v193 = vshrl.u32 %v192, 7
    %v194 = vsub.s32 0, %v193
    %v195 = vrot.slane %v153, %v194
    %v213 = vunpack.c.l.b16 %v137
    %v214 = vunpack.c.l.b16 %v138
    %v215 = vunpack.c.l.b16 %v139
    %v216 = vunpack.c.l.b16 %v140
    %v217 = vunpack.c.l.b16 %v141
    %v218 = vunpack.c.l.b16 %v142
    %v219 = vunpack.c.l.b16 %v143
    %v220 = vunpack.c.l.b16 %v144
    %v221 = vunpack.c.l.b16 %v145
    %v222 = vunpack.c.l.b16 %v146
    %v223 = vunpack.c.l.b16 %v147
    %v224 = vunpack.c.l.b16 %v148
    %v225 = vunpack.c.l.b16 %v149
    %v226 = vunpack.c.l.b16 %v150
    %v227 = vunpack.c.l.b16 %v151
    %v228 = vunpack.c.l.b16 %v152
    %v229 = vpack.c.b16 %v214, %v213
    %v230 = vpack.c.b16 %v216, %v215
    %v231 = vpack.c.b16 %v218, %v217
    %v232 = vpack.c.b16 %v220, %v219
    %v233 = vpack.c.b16 %v222, %v221
    %v234 = vpack.c.b16 %v224, %v223
    %v235 = vpack.c.b16 %v226, %v225
    %v236 = vpack.c.b16 %v228, %v227
    %245 = vmatprep.subr.bf16.mxu0 0
    %246 = vmatpush1.bf16.msra.mxu0 %v229
    %247 = vmatprep.subr.bf16.mxu0 0
    %248 = vmatpush1.bf16.msra.mxu0 %v230
    %249 = vmatprep.subr.bf16.mxu0 0
    %250 = vmatpush1.bf16.msra.mxu0 %v231
    %251 = vmatprep.subr.bf16.mxu0 0
    %252 = vmatpush1.bf16.msra.mxu0 %v232
    %253 = vmatprep.subr.bf16.mxu0 0
    %254 = vmatpush1.bf16.msra.mxu0 %v233
    %255 = vmatprep.subr.bf16.mxu0 0
    %256 = vmatpush1.bf16.msra.mxu0 %v234
    %257 = vmatprep.subr.bf16.mxu0 0
    %258 = vmatpush1.bf16.msra.mxu0 %v235
    %259 = vmatprep.subr.bf16.mxu0 0
    %260 = vmatpush1.bf16.msra.mxu0 %v236
    %261 = vmatprep.subr.bf16.mxu0 0
    %262 = vmatpush1.bf16.msra.mxu0 0
    %263 = vmatprep.subr.bf16.mxu0 0
    %264 = vmatpush1.bf16.msra.mxu0 0
    %265 = vmatprep.subr.bf16.mxu0 0
    %266 = vmatpush1.bf16.msra.mxu0 0
    %267 = vmatprep.subr.bf16.mxu0 0
    %268 = vmatpush1.bf16.msra.mxu0 0
    %269 = vmatprep.subr.bf16.mxu0 0
    %270 = vmatpush1.bf16.msra.mxu0 0
    %271 = vmatprep.subr.bf16.mxu0 0
    %272 = vmatpush1.bf16.msra.mxu0 0
    %273 = vmatprep.subr.bf16.mxu0 0
    %274 = vmatpush1.bf16.msra.mxu0 0
    %275 = vmatprep.subr.bf16.mxu0 0
    %276 = vmatpush1.bf16.msra.mxu0 0
    %277 = vmatprep.mubr.bf16.mxu0 0
    %278 = vmatmul.mubr.bf16.gmra.mrb[0].mxu0 %v189
    %v279 = vpop.f32.mrb[0].mxu0
    %v280 = vadd.f32 %v195, %v279
    %v281 = vpop.f32.mrb[0].mxu0
    %v282 = vpop.f32.mrb[0].mxu0
    %v283 = vadd.f32 %v195, %v282
    %v284 = vpop.f32.mrb[0].mxu0
    %285 = vmatprep.mubr.bf16.mxu0 0
    %286 = vmatmul.mubr.bf16.gmra.mrb[0].mxu0 %v190
    %v287 = vpop.f32.mrb[0].mxu0
    %v288 = vadd.f32 %v195, %v287
    %v289 = vpop.f32.mrb[0].mxu0
    %v290 = vpop.f32.mrb[0].mxu0
    %v291 = vadd.f32 %v195, %v290
    %v292 = vpop.f32.mrb[0].mxu0
    %293 = vdwg.mxu0
    %v294 = vmul.f32 %v280, 0.2
    %v295 = vmul.f32 %v283, 0.2
    %v296 = vmul.f32 %v288, 0.2
    %v297 = vmul.f32 %v291, 0.2
    %v298 = vmax.f32 %v280, %v294
    %v299 = vmax.f32 %v283, %v295
    %v300 = vmax.f32 %v288, %v296
    %v301 = vmax.f32 %v291, %v297
    %302 = vst [vmem:[#allocation2 + $0x2] sm:$0xff] %v298
    %303 = vst [vmem:[#allocation2 + $0xa] sm:$0x7f] %v299
    %s304 = scalar_lea.vmem [#allocation2], 24
    %305 = vst [vmem:[%s304 - $0x5] sm:$0x80] %v299
    %306 = vst [vmem:[%s304 + $0x3] sm:$0xff] %v300
    %307 = vst [vmem:[%s304 + $0xb] sm:$0x3f] %v301
    %v308 = vld [vmem:[#allocation9] sm:$0xf]
    %v309 = vld [vmem:[#allocation9 + $0x4] sm:$0xf]
    %v310 = vld [vmem:[#allocation9 + $0x8] sm:$0xf]
    %v311 = vld [vmem:[#allocation9 + $0xc] sm:$0xf]
    %v312 = vld [vmem:[#allocation9 + $0x10] sm:$0xf]
    %v313 = vld [vmem:[#allocation9 + $0x14] sm:$0xf]
    %v314 = vld [vmem:[#allocation9 + $0x18] sm:$0xf]
    %v315 = vld [vmem:[#allocation9 + $0x1c] sm:$0xf]
    %v316 = vld [vmem:[#allocation9 + $0x20] sm:$0xf]
    %v317 = vld [vmem:[#allocation9 + $0x24] sm:$0xf]
    %v318 = vld [vmem:[#allocation9 + $0x28] sm:$0xf]
    %v319 = vld [vmem:[#allocation9 + $0x2c] sm:$0xf]
    %v320 = vld [vmem:[#allocation9 + $0x30] sm:$0xf]
    %v321 = vld [vmem:[#allocation9 + $0x34] sm:$0xf]
    %v322 = vld [vmem:[#allocation9 + $0x38] sm:$0xf]
    %v323 = vld [vmem:[#allocation9 + $0x3c] sm:$0xf]
    %v324 = vld [vmem:[%s4] sm:$0x1]
    %v325 = vld [vmem:[#allocation2 + $0x2] sm:$0xff]
    %v326 = vld [vmem:[#allocation2 + $0xa] sm:$0x3f]
    %v327 = vld [vmem:[%s304 + $0x2] sm:$0xff]
    %v328 = vld [vmem:[%s304 + $0xa] sm:$0x3f]
    %vm331 = vcmask 1045504
    %v332 = vrot.slane %v327, 2
    %v333 = vrot.slane %v328, 2
    %v334 = vsel %vm331, %v332, %v333
    %v338 = vsel %vm331, %v326, %v332
    %v339 = vld [vmem:[#allocation2 + $0x3] sm:$0xff]
    %v340 = vld [vmem:[#allocation2 + $0xb] sm:$0x3f]
    %v341 = vld [vmem:[%s304 + $0x3] sm:$0xff]
    %v342 = vld [vmem:[%s304 + $0xb] sm:$0x3f]
    %v345 = vrot.slane %v341, 2
    %v346 = vrot.slane %v342, 2
    %v347 = vsel %vm331, %v345, %v346
    %v351 = vsel %vm331, %v340, %v345
    %vm352 = vcmp.lt.s32.totalorder %v183, 16
    %v353 = vsel %vm352, %v325, %v339
    %v354 = vsel %vm352, %v338, %v351
    %v355 = vsel %vm352, %v334, %v347
    %v356 = vsel %vm352, %v333, %v346
    %v357 = vpack.c.bf16 %v354, %v353
    %v358 = vpack.c.bf16 %v356, %v355
    %v360 = vlaneseq
    %v361 = vshrl.u32 %v360, 7
    %v362 = vsub.s32 0, %v361
    %v363 = vrot.slane %v324, %v362
    %v381 = vunpack.c.l.b16 %v308
    %v382 = vunpack.c.l.b16 %v309
    %v383 = vunpack.c.l.b16 %v310
    %v384 = vunpack.c.l.b16 %v311
    %v385 = vunpack.c.l.b16 %v312
    %v386 = vunpack.c.l.b16 %v313
    %v387 = vunpack.c.l.b16 %v314
    %v388 = vunpack.c.l.b16 %v315
    %v389 = vunpack.c.l.b16 %v316
    %v390 = vunpack.c.l.b16 %v317
    %v391 = vunpack.c.l.b16 %v318
    %v392 = vunpack.c.l.b16 %v319
    %v393 = vunpack.c.l.b16 %v320
    %v394 = vunpack.c.l.b16 %v321
    %v395 = vunpack.c.l.b16 %v322
    %v396 = vunpack.c.l.b16 %v323
    %v397 = vpack.c.b16 %v382, %v381
    %v398 = vpack.c.b16 %v384, %v383
    %v399 = vpack.c.b16 %v386, %v385
    %v400 = vpack.c.b16 %v388, %v387
    %v401 = vpack.c.b16 %v390, %v389
    %v402 = vpack.c.b16 %v392, %v391
    %v403 = vpack.c.b16 %v394, %v393
    %v404 = vpack.c.b16 %v396, %v395
    %413 = vmatprep.subr.bf16.mxu0 0
    %414 = vmatpush1.bf16.msra.mxu0 %v397
    %415 = vmatprep.subr.bf16.mxu0 0
    %416 = vmatpush1.bf16.msra.mxu0 %v398
    %417 = vmatprep.subr.bf16.mxu0 0
    %418 = vmatpush1.bf16.msra.mxu0 %v399
    %419 = vmatprep.subr.bf16.mxu0 0
    %420 = vmatpush1.bf16.msra.mxu0 %v400
    %421 = vmatprep.subr.bf16.mxu0 0
    %422 = vmatpush1.bf16.msra.mxu0 %v401
    %423 = vmatprep.subr.bf16.mxu0 0
    %424 = vmatpush1.bf16.msra.mxu0 %v402
    %425 = vmatprep.subr.bf16.mxu0 0
    %426 = vmatpush1.bf16.msra.mxu0 %v403
    %427 = vmatprep.subr.bf16.mxu0 0
    %428 = vmatpush1.bf16.msra.mxu0 %v404
    %429 = vmatprep.subr.bf16.mxu0 0
    %430 = vmatpush1.bf16.msra.mxu0 0
    %431 = vmatprep.subr.bf16.mxu0 0
    %432 = vmatpush1.bf16.msra.mxu0 0
    %433 = vmatprep.subr.bf16.mxu0 0
    %434 = vmatpush1.bf16.msra.mxu0 0
    %435 = vmatprep.subr.bf16.mxu0 0
    %436 = vmatpush1.bf16.msra.mxu0 0
    %437 = vmatprep.subr.bf16.mxu0 0
    %438 = vmatpush1.bf16.msra.mxu0 0
    %439 = vmatprep.subr.bf16.mxu0 0
    %440 = vmatpush1.bf16.msra.mxu0 0
    %441 = vmatprep.subr.bf16.mxu0 0
    %442 = vmatpush1.bf16.msra.mxu0 0
    %443 = vmatprep.subr.bf16.mxu0 0
    %444 = vmatpush1.bf16.msra.mxu0 0
    %445 = vmatprep.mubr.bf16.mxu0 0
    %446 = vmatmul.mubr.bf16.gmra.mrb[0].mxu0 %v357
    %v447 = vpop.f32.mrb[0].mxu0
    %v448 = vadd.f32 %v363, %v447
    %v449 = vpop.f32.mrb[0].mxu0
    %v450 = vpop.f32.mrb[0].mxu0
    %v451 = vadd.f32 %v363, %v450
    %v452 = vpop.f32.mrb[0].mxu0
    %453 = vmatprep.mubr.bf16.mxu0 0
    %454 = vmatmul.mubr.bf16.gmra.mrb[0].mxu0 %v358
    %v455 = vpop.f32.mrb[0].mxu0
    %v456 = vadd.f32 %v363, %v455
    %v457 = vpop.f32.mrb[0].mxu0
    %v458 = vpop.f32.mrb[0].mxu0
    %v459 = vadd.f32 %v363, %v458
    %v460 = vpop.f32.mrb[0].mxu0
    %461 = vdwg.mxu0
    %v462 = vmul.f32 %v448, 0.2
    %v463 = vmul.f32 %v451, 0.2
    %v464 = vmul.f32 %v456, 0.2
    %v465 = vmul.f32 %v459, 0.2
    %v466 = vmax.f32 %v448, %v462
    %v467 = vmax.f32 %v451, %v463
    %v468 = vmax.f32 %v456, %v464
    %v469 = vmax.f32 %v459, %v465
    %470 = vst [vmem:[#allocation3 + $0x2] sm:$0xff] %v466
    %471 = vst [vmem:[#allocation3 + $0xa] sm:$0x3f] %v467
    %s472 = scalar_lea.vmem [#allocation3], 24
    %473 = vst [vmem:[%s472 - $0x4] sm:$0xc0] %v467
    %474 = vst [vmem:[%s472 + $0x4] sm:$0xff] %v468
    %475 = vst [vmem:[%s472 + $0xc] sm:$0xf] %v469
    %v476 = vld [vmem:[#allocation10] sm:$0xf]
    %v477 = vld [vmem:[#allocation10 + $0x4] sm:$0xf]
    %v478 = vld [vmem:[#allocation10 + $0x8] sm:$0xf]
    %v479 = vld [vmem:[#allocation10 + $0xc] sm:$0xf]
    %v480 = vld [vmem:[#allocation10 + $0x10] sm:$0xf]
    %v481 = vld [vmem:[#allocation10 + $0x14] sm:$0xf]
    %v482 = vld [vmem:[#allocation10 + $0x18] sm:$0xf]
    %v483 = vld [vmem:[#allocation10 + $0x1c] sm:$0xf]
    %v484 = vld [vmem:[#allocation10 + $0x20] sm:$0xf]
    %v485 = vld [vmem:[#allocation10 + $0x24] sm:$0xf]
    %v486 = vld [vmem:[#allocation10 + $0x28] sm:$0xf]
    %v487 = vld [vmem:[#allocation10 + $0x2c] sm:$0xf]
    %v488 = vld [vmem:[#allocation10 + $0x30] sm:$0xf]
    %v489 = vld [vmem:[#allocation10 + $0x34] sm:$0xf]
    %v490 = vld [vmem:[#allocation10 + $0x38] sm:$0xf]
    %v491 = vld [vmem:[#allocation10 + $0x3c] sm:$0xf]
    %v492 = vld [vmem:[%s6] sm:$0x1]
    %v493 = vld [vmem:[%s7] sm:$0x1]
    %v494 = vld [vmem:[#allocation3 + $0x1] sm:$0xff]
    %v495 = vld [vmem:[#allocation3 + $0x9] sm:$0x3f]
    %v496 = vld [vmem:[%s472 + $0x1] sm:$0xff]
    %v497 = vld [vmem:[%s472 + $0x9] sm:$0x3f]
    %v500 = vrot.slane %v496, 2
    %v501 = vrot.slane %v497, 2
    %v502 = vsel %vm331, %v500, %v501
    %v506 = vsel %vm331, %v495, %v500
    %v507 = vld [vmem:[#allocation3 + $0x2] sm:$0xff]
    %v508 = vld [vmem:[#allocation3 + $0xa] sm:$0x3f]
    %v509 = vld [vmem:[%s472 + $0x2] sm:$0xff]
    %v510 = vld [vmem:[%s472 + $0xa] sm:$0x3f]
    %v513 = vrot.slane %v509, 2
    %v514 = vrot.slane %v510, 2
    %v515 = vsel %vm331, %v513, %v514
    %v519 = vsel %vm331, %v508, %v513
    %v520 = vld [vmem:[#allocation3 + $0x3] sm:$0xff]
    %v521 = vld [vmem:[#allocation3 + $0xb] sm:$0x3f]
    %v522 = vld [vmem:[%s472 + $0x3] sm:$0xff]
    %v523 = vld [vmem:[%s472 + $0xb] sm:$0x3f]
    %v526 = vrot.slane %v522, 2
    %v527 = vrot.slane %v523, 2
    %v528 = vsel %vm331, %v526, %v527
    %v532 = vsel %vm331, %v521, %v526
    %vm533 = vcmp.lt.s32.totalorder %v183, 64
    %v534 = vsel %vm533, %v507, %v520
    %v535 = vsel %vm533, %v519, %v532
    %v536 = vsel %vm533, %v515, %v528
    %v537 = vsel %vm533, %v514, %v527
    %vm538 = vcmp.lt.s32.totalorder %v183, 32
    %v539 = vsel %vm538, %v494, %v534
    %v540 = vsel %vm538, %v506, %v535
    %v541 = vsel %vm538, %v502, %v536
    %v542 = vsel %vm538, %v501, %v537
    %v543 = vpack.c.bf16 %v540, %v539
    %v544 = vpack.c.bf16 %v542, %v541
    %v561 = vunpack.c.l.b16 %v476
    %v562 = vunpack.c.l.b16 %v477
    %v563 = vunpack.c.l.b16 %v478
    %v564 = vunpack.c.l.b16 %v479
    %v565 = vunpack.c.l.b16 %v480
    %v566 = vunpack.c.l.b16 %v481
    %v567 = vunpack.c.l.b16 %v482
    %v568 = vunpack.c.l.b16 %v483
    %v569 = vunpack.c.l.b16 %v484
    %v570 = vunpack.c.l.b16 %v485
    %v571 = vunpack.c.l.b16 %v486
    %v572 = vunpack.c.l.b16 %v487
    %v573 = vunpack.c.l.b16 %v488
    %v574 = vunpack.c.l.b16 %v489
    %v575 = vunpack.c.l.b16 %v490
    %v576 = vunpack.c.l.b16 %v491
    %v577 = vpack.c.b16 %v562, %v561
    %v578 = vpack.c.b16 %v564, %v563
    %v579 = vpack.c.b16 %v566, %v565
    %v580 = vpack.c.b16 %v568, %v567
    %v581 = vpack.c.b16 %v570, %v569
    %v582 = vpack.c.b16 %v572, %v571
    %v583 = vpack.c.b16 %v574, %v573
    %v584 = vpack.c.b16 %v576, %v575
    %593 = vmatprep.subr.bf16.mxu0 0
    %594 = vmatpush1.bf16.msra.mxu0 %v577
    %595 = vmatprep.subr.bf16.mxu0 0
    %596 = vmatpush1.bf16.msra.mxu0 %v578
    %597 = vmatprep.subr.bf16.mxu0 0
    %598 = vmatpush1.bf16.msra.mxu0 %v579
    %599 = vmatprep.subr.bf16.mxu0 0
    %600 = vmatpush1.bf16.msra.mxu0 %v580
    %601 = vmatprep.subr.bf16.mxu0 0
    %602 = vmatpush1.bf16.msra.mxu0 %v581
    %603 = vmatprep.subr.bf16.mxu0 0
    %604 = vmatpush1.bf16.msra.mxu0 %v582
    %605 = vmatprep.subr.bf16.mxu0 0
    %606 = vmatpush1.bf16.msra.mxu0 %v583
    %607 = vmatprep.subr.bf16.mxu0 0
    %608 = vmatpush1.bf16.msra.mxu0 %v584
    %609 = vmatprep.subr.bf16.mxu0 0
    %610 = vmatpush1.bf16.msra.mxu0 0
    %611 = vmatprep.subr.bf16.mxu0 0
    %612 = vmatpush1.bf16.msra.mxu0 0
    %613 = vmatprep.subr.bf16.mxu0 0
    %614 = vmatpush1.bf16.msra.mxu0 0
    %615 = vmatprep.subr.bf16.mxu0 0
    %616 = vmatpush1.bf16.msra.mxu0 0
    %617 = vmatprep.subr.bf16.mxu0 0
    %618 = vmatpush1.bf16.msra.mxu0 0
    %619 = vmatprep.subr.bf16.mxu0 0
    %620 = vmatpush1.bf16.msra.mxu0 0
    %621 = vmatprep.subr.bf16.mxu0 0
    %622 = vmatpush1.bf16.msra.mxu0 0
    %623 = vmatprep.subr.bf16.mxu0 0
    %624 = vmatpush1.bf16.msra.mxu0 0
    %625 = vmatprep.mubr.bf16.mxu0 0
    %626 = vmatmul.mubr.bf16.gmra.mrb[0].mxu0 %v543
    %v627 = vpop.f32.mrb[0].mxu0
    %v628 = vadd.f32 0.0, %v627
    %v629 = vpop.f32.mrb[0].mxu0
    %v630 = vpop.f32.mrb[0].mxu0
    %v631 = vadd.f32 0.0, %v630
    %v632 = vpop.f32.mrb[0].mxu0
    %633 = vmatprep.mubr.bf16.mxu0 0
    %634 = vmatmul.mubr.bf16.gmra.mrb[0].mxu0 %v544
    %v635 = vpop.f32.mrb[0].mxu0
    %v636 = vadd.f32 0.0, %v635
    %v637 = vpop.f32.mrb[0].mxu0
    %v638 = vpop.f32.mrb[0].mxu0
    %v639 = vadd.f32 0.0, %v638
    %v640 = vpop.f32.mrb[0].mxu0
    %641 = vdwg.mxu0
    %v642 = vadd.f32 %v628, %v631
    %v643 = vadd.f32 %v642, %v636
    %vm644 = vcmask 1043456
    %v645 = vsel %vm644, %v639, 0.0
    %v646 = vadd.f32 %v643, %v645
    %v647 = vrot.slane %v646, 4
    %v648 = vadd.f32 %v646, %v647
    %v649 = vrot.slane %v648, 2
    %v650 = vadd.f32 %v648, %v649
    %v651 = vrot.slane %v650, 1
    %v652 = vadd.f32 %v650, %v651
    %v653 = vmul.f32 %v652, 0.035714287
    %v654 = vmul.f32 %v628, %v628
    %v655 = vmul.f32 %v631, %v631
    %v656 = vmul.f32 %v636, %v636
    %v657 = vmul.f32 %v639, %v639
    %v658 = vadd.f32 %v654, %v655
    %v659 = vadd.f32 %v658, %v656
    %v660 = vsel %vm644, %v657, 0.0
    %v661 = vadd.f32 %v659, %v660
    %v662 = vrot.slane %v661, 4
    %v663 = vadd.f32 %v661, %v662
    %v664 = vrot.slane %v663, 2
    %v665 = vadd.f32 %v663, %v664
    %v666 = vrot.slane %v665, 1
    %v667 = vadd.f32 %v665, %v666
    %v668 = vmul.f32 %v667, 0.035714287
    %v669 = vmul.f32 %v653, %v653
    %v670 = vsub.f32 %v668, %v669
    %v671 = vmax.f32 %v670, 0.0
    %v672 = vadd.f32 %v671, 1e-05
    %v673 = vrsqrt.pop %v672
    %v674 = vmul.f32 %v673, %v492
    %v675 = vmul.f32 %v653, %v674
    %v676 = vsub.f32 %v493, %v675
    %v677 = vlaneseq
    %v678 = vshrl.u32 %v677, 7
    %v679 = vsub.s32 0, %v678
    %v680 = vrot.slane %v674, %v679
    %v681 = vmul.f32 %v628, %v680
    %v682 = vmul.f32 %v631, %v680
    %v683 = vmul.f32 %v636, %v680
    %v684 = vmul.f32 %v639, %v680
    %v686 = vlaneseq
    %v687 = vshrl.u32 %v686, 7
    %v688 = vsub.s32 0, %v687
    %v689 = vrot.slane %v676, %v688
    %v691 = vadd.f32 %v681, %v689
    %v692 = vadd.f32 %v682, %v689
    %v693 = vadd.f32 %v683, %v689
    %v694 = vadd.f32 %v684, %v689
    %v695 = vmax.f32 %v691, 0.0
    %v696 = vmax.f32 %v692, 0.0
    %v697 = vmax.f32 %v693, 0.0
    %v698 = vmax.f32 %v694, 0.0
    %699 = vst [vmem:[#allocation2 + $0x2] sm:$0xff] %v695
    %700 = vst [vmem:[#allocation2 + $0xa] sm:$0x3f] %v696
    %701 = vst [vmem:[%s304 - $0x4] sm:$0xc0] %v696
    %702 = vst [vmem:[%s304 + $0x4] sm:$0xff] %v697
    %703 = vst [vmem:[%s304 + $0xc] sm:$0xf] %v698
    %704 = vst [vmem:[#allocation2 + $0x10] sm:$0x1] 0.0
    %705 = vst [vmem:[%s304 + $0x10] sm:$0x1] 0.0
    %s706 = scalar_lea.vmem [#allocation10], 64
    %v707 = vld [vmem:[%s706] sm:$0xf]
    %v708 = vld [vmem:[%s706 + $0x4] sm:$0xf]
    %v709 = vld [vmem:[%s706 + $0x8] sm:$0xf]
    %v710 = vld [vmem:[%s706 + $0xc] sm:$0xf]
    %v711 = vld [vmem:[%s706 + $0x10] sm:$0xf]
    %v712 = vld [vmem:[%s706 + $0x14] sm:$0xf]
    %v713 = vld [vmem:[%s706 + $0x18] sm:$0xf]
    %v714 = vld [vmem:[%s706 + $0x1c] sm:$0xf]
    %v715 = vld [vmem:[%s706 + $0x20] sm:$0xf]
    %v716 = vld [vmem:[%s706 + $0x24] sm:$0xf]
    %v717 = vld [vmem:[%s706 + $0x28] sm:$0xf]
    %v718 = vld [vmem:[%s706 + $0x2c] sm:$0xf]
    %v719 = vld [vmem:[%s706 + $0x30] sm:$0xf]
    %v720 = vld [vmem:[%s706 + $0x34] sm:$0xf]
    %v721 = vld [vmem:[%s706 + $0x38] sm:$0xf]
    %v722 = vld [vmem:[%s706 + $0x3c] sm:$0xf]
    %s723 = scalar_lea.vmem %s6, 1
    %v724 = vld [vmem:[%s723] sm:$0x1]
    %s725 = scalar_lea.vmem %s7, 1
    %v726 = vld [vmem:[%s725] sm:$0x1]
    %v727 = vld [vmem:[#allocation2 + $0x1] sm:$0xff]
    %v728 = vld [vmem:[#allocation2 + $0x9] sm:$0x3f]
    %v729 = vld [vmem:[%s304 + $0x1] sm:$0xff]
    %v730 = vld [vmem:[%s304 + $0x9] sm:$0x3f]
    %v733 = vrot.slane %v729, 2
    %v734 = vrot.slane %v730, 2
    %v735 = vsel %vm331, %v733, %v734
    %v739 = vsel %vm331, %v728, %v733
    %v740 = vld [vmem:[#allocation2 + $0x2] sm:$0xff]
    %v741 = vld [vmem:[#allocation2 + $0xa] sm:$0x3f]
    %v742 = vld [vmem:[%s304 + $0x2] sm:$0xff]
    %v743 = vld [vmem:[%s304 + $0xa] sm:$0x3f]
    %v746 = vrot.slane %v742, 2
    %v747 = vrot.slane %v743, 2
    %v748 = vsel %vm331, %v746, %v747
    %v752 = vsel %vm331, %v741, %v746
    %v753 = vld [vmem:[#allocation2 + $0x3] sm:$0xff]
    %v754 = vld [vmem:[#allocation2 + $0xb] sm:$0x3f]
    %v755 = vld [vmem:[%s304 + $0x3] sm:$0xff]
    %v756 = vld [vmem:[%s304 + $0xb] sm:$0x3f]
    %v759 = vrot.slane %v755, 2
    %v760 = vrot.slane %v756, 2
    %v761 = vsel %vm331, %v759, %v760
    %v765 = vsel %vm331, %v754, %v759
    %v766 = vsel %vm533, %v740, %v753
    %v767 = vsel %vm533, %v752, %v765
    %v768 = vsel %vm533, %v748, %v761
    %v769 = vsel %vm533, %v747, %v760
    %v770 = vsel %vm538, %v727, %v766
    %v771 = vsel %vm538, %v739, %v767
    %v772 = vsel %vm538, %v735, %v768
    %v773 = vsel %vm538, %v734, %v769
    %v774 = vpack.c.bf16 %v771, %v770
    %v775 = vpack.c.bf16 %v773, %v772
    %v792 = vunpack.c.l.b16 %v707
    %v793 = vunpack.c.l.b16 %v708
    %v794 = vunpack.c.l.b16 %v709
    %v795 = vunpack.c.l.b16 %v710
    %v796 = vunpack.c.l.b16 %v711
    %v797 = vunpack.c.l.b16 %v712
    %v798 = vunpack.c.l.b16 %v713
    %v799 = vunpack.c.l.b16 %v714
    %v800 = vunpack.c.l.b16 %v715
    %v801 = vunpack.c.l.b16 %v716
    %v802 = vunpack.c.l.b16 %v717
    %v803 = vunpack.c.l.b16 %v718
    %v804 = vunpack.c.l.b16 %v719
    %v805 = vunpack.c.l.b16 %v720
    %v806 = vunpack.c.l.b16 %v721
    %v807 = vunpack.c.l.b16 %v722
    %v808 = vpack.c.b16 %v793, %v792
    %v809 = vpack.c.b16 %v795, %v794
    %v810 = vpack.c.b16 %v797, %v796
    %v811 = vpack.c.b16 %v799, %v798
    %v812 = vpack.c.b16 %v801, %v800
    %v813 = vpack.c.b16 %v803, %v802
    %v814 = vpack.c.b16 %v805, %v804
    %v815 = vpack.c.b16 %v807, %v806
    %824 = vmatprep.subr.bf16.mxu0 0
    %825 = vmatpush1.bf16.msra.mxu0 %v808
    %826 = vmatprep.subr.bf16.mxu0 0
    %827 = vmatpush1.bf16.msra.mxu0 %v809
    %828 = vmatprep.subr.bf16.mxu0 0
    %829 = vmatpush1.bf16.msra.mxu0 %v810
    %830 = vmatprep.subr.bf16.mxu0 0
    %831 = vmatpush1.bf16.msra.mxu0 %v811
    %832 = vmatprep.subr.bf16.mxu0 0
    %833 = vmatpush1.bf16.msra.mxu0 %v812
    %834 = vmatprep.subr.bf16.mxu0 0
    %835 = vmatpush1.bf16.msra.mxu0 %v813
    %836 = vmatprep.subr.bf16.mxu0 0
    %837 = vmatpush1.bf16.msra.mxu0 %v814
    %838 = vmatprep.subr.bf16.mxu0 0
    %839 = vmatpush1.bf16.msra.mxu0 %v815
    %840 = vmatprep.subr.bf16.mxu0 0
    %841 = vmatpush1.bf16.msra.mxu0 0
    %842 = vmatprep.subr.bf16.mxu0 0
    %843 = vmatpush1.bf16.msra.mxu0 0
    %844 = vmatprep.subr.bf16.mxu0 0
    %845 = vmatpush1.bf16.msra.mxu0 0
    %846 = vmatprep.subr.bf16.mxu0 0
    %847 = vmatpush1.bf16.msra.mxu0 0
    %848 = vmatprep.subr.bf16.mxu0 0
    %849 = vmatpush1.bf16.msra.mxu0 0
    %850 = vmatprep.subr.bf16.mxu0 0
    %851 = vmatpush1.bf16.msra.mxu0 0
    %852 = vmatprep.subr.bf16.mxu0 0
    %853 = vmatpush1.bf16.msra.mxu0 0
    %854 = vmatprep.subr.bf16.mxu0 0
    %855 = vmatpush1.bf16.msra.mxu0 0
    %856 = vmatprep.mubr.bf16.mxu0 0
    %857 = vmatmul.mubr.bf16.gmra.mrb[0].mxu0 %v774
    %v858 = vpop.f32.mrb[0].mxu0
    %v859 = vadd.f32 0.0, %v858
    %v860 = vpop.f32.mrb[0].mxu0
    %v861 = vpop.f32.mrb[0].mxu0
    %v862 = vadd.f32 0.0, %v861
    %v863 = vpop.f32.mrb[0].mxu0
    %864 = vmatprep.mubr.bf16.mxu0 0
    %865 = vmatmul.mubr.bf16.gmra.mrb[0].mxu0 %v775
    %v866 = vpop.f32.mrb[0].mxu0
    %v867 = vadd.f32 0.0, %v866
    %v868 = vpop.f32.mrb[0].mxu0
    %v869 = vpop.f32.mrb[0].mxu0
    %v870 = vadd.f32 0.0, %v869
    %v871 = vpop.f32.mrb[0].mxu0
    %872 = vdwg.mxu0
    %v873 = vadd.f32 %v859, %v862
    %v874 = vadd.f32 %v873, %v867
    %v875 = vsel %vm644, %v870, 0.0
    %v876 = vadd.f32 %v874, %v875
    %v877 = vrot.slane %v876, 4
    %v878 = vadd.f32 %v876, %v877
    %v879 = vrot.slane %v878, 2
    %v880 = vadd.f32 %v878, %v879
    %v881 = vrot.slane %v880, 1
    %v882 = vadd.f32 %v880, %v881
    %v883 = vmul.f32 %v882, 0.035714287
    %v884 = vmul.f32 %v859, %v859
    %v885 = vmul.f32 %v862, %v862
    %v886 = vmul.f32 %v867, %v867
    %v887 = vmul.f32 %v870, %v870
    %v888 = vadd.f32 %v884, %v885
    %v889 = vadd.f32 %v888, %v886
    %v890 = vsel %vm644, %v887, 0.0
    %v891 = vadd.f32 %v889, %v890
    %v892 = vrot.slane %v891, 4
    %v893 = vadd.f32 %v891, %v892
    %v894 = vrot.slane %v893, 2
    %v895 = vadd.f32 %v893, %v894
    %v896 = vrot.slane %v895, 1
    %v897 = vadd.f32 %v895, %v896
    %v898 = vmul.f32 %v897, 0.035714287
    %v899 = vmul.f32 %v883, %v883
    %v900 = vsub.f32 %v898, %v899
    %v901 = vmax.f32 %v900, 0.0
    %v902 = vadd.f32 %v901, 1e-05
    %v903 = vrsqrt.pop %v902
    %v904 = vmul.f32 %v903, %v724
    %v905 = vmul.f32 %v883, %v904
    %v906 = vsub.f32 %v726, %v905
    %v907 = vlaneseq
    %v908 = vshrl.u32 %v907, 7
    %v909 = vsub.s32 0, %v908
    %v910 = vrot.slane %v904, %v909
    %v911 = vmul.f32 %v859, %v910
    %v912 = vmul.f32 %v862, %v910
    %v913 = vmul.f32 %v867, %v910
    %v914 = vmul.f32 %v870, %v910
    %v916 = vlaneseq
    %v917 = vshrl.u32 %v916, 7
    %v918 = vsub.s32 0, %v917
    %v919 = vrot.slane %v906, %v918
    %v921 = vadd.f32 %v911, %v919
    %v922 = vadd.f32 %v912, %v919
    %v923 = vadd.f32 %v913, %v919
    %v924 = vadd.f32 %v914, %v919
    %v925 = vld [vmem:[#allocation3 + $0x2] sm:$0xff]
    %v926 = vld [vmem:[#allocation3 + $0xa] sm:$0x3f]
    %v927 = vld [vmem:[%s472 + $0x2] sm:$0xff]
    %v928 = vld [vmem:[%s472 + $0xa] sm:$0x3f]
    %v931 = vrot.slane %v927, 2
    %v932 = vrot.slane %v928, 2
    %v933 = vsel %vm331, %v931, %v932
    %v937 = vsel %vm331, %v926, %v931
    %v938 = vadd.f32 %v921, %v925
    %v939 = vadd.f32 %v922, %v937
    %v940 = vadd.f32 %v923, %v933
    %v941 = vadd.f32 %v924, %v932
    %942 = vst [vmem:[#allocation3 + $0x2] sm:$0xff] %v938
    %943 = vst [vmem:[#allocation3 + $0xa] sm:$0x3f] %v939
    %944 = vst [vmem:[%s472 - $0x4] sm:$0xc0] %v939
    %945 = vst [vmem:[%s472 + $0x4] sm:$0xff] %v940
    %946 = vst [vmem:[%s472 + $0xc] sm:$0xf] %v941
    %s947 = scalar_lea.vmem [#allocation10], 128
    %v948 = vld [vmem:[%s947] sm:$0xf]
    %v949 = vld [vmem:[%s947 + $0x4] sm:$0xf]
    %v950 = vld [vmem:[%s947 + $0x8] sm:$0xf]
    %v951 = vld [vmem:[%s947 + $0xc] sm:$0xf]
    %v952 = vld [vmem:[%s947 + $0x10] sm:$0xf]
    %v953 = vld [vmem:[%s947 + $0x14] sm:$0xf]
    %v954 = vld [vmem:[%s947 + $0x18] sm:$0xf]
    %v955 = vld [vmem:[%s947 + $0x1c] sm:$0xf]
    %v956 = vld [vmem:[%s947 + $0x20] sm:$0xf]
    %v957 = vld [vmem:[%s947 + $0x24] sm:$0xf]
    %v958 = vld [vmem:[%s947 + $0x28] sm:$0xf]
    %v959 = vld [vmem:[%s947 + $0x2c] sm:$0xf]
    %v960 = vld [vmem:[%s947 + $0x30] sm:$0xf]
    %v961 = vld [vmem:[%s947 + $0x34] sm:$0xf]
    %v962 = vld [vmem:[%s947 + $0x38] sm:$0xf]
    %v963 = vld [vmem:[%s947 + $0x3c] sm:$0xf]
    %s964 = scalar_lea.vmem %s6, 2
    %v965 = vld [vmem:[%s964] sm:$0x1]
    %s966 = scalar_lea.vmem %s7, 2
    %v967 = vld [vmem:[%s966] sm:$0x1]
    %v968 = vld [vmem:[#allocation3 + $0x1] sm:$0xff]
    %v969 = vld [vmem:[#allocation3 + $0x9] sm:$0x3f]
    %v970 = vld [vmem:[%s472 + $0x1] sm:$0xff]
    %v971 = vld [vmem:[%s472 + $0x9] sm:$0x3f]
    %v974 = vrot.slane %v970, 2
    %v975 = vrot.slane %v971, 2
    %v976 = vsel %vm331, %v974, %v975
    %v980 = vsel %vm331, %v969, %v974
    %v981 = vld [vmem:[#allocation3 + $0x2] sm:$0xff]
    %v982 = vld [vmem:[#allocation3 + $0xa] sm:$0x3f]
    %v983 = vld [vmem:[%s472 + $0x2] sm:$0xff]
    %v984 = vld [vmem:[%s472 + $0xa] sm:$0x3f]
    %v987 = vrot.slane %v983, 2
    %v988 = vrot.slane %v984, 2
    %v989 = vsel %vm331, %v987, %v988
    %v993 = vsel %vm331, %v982, %v987
    %v994 = vld [vmem:[#allocation3 + $0x3] sm:$0xff]
    %v995 = vld [vmem:[#allocation3 + $0xb] sm:$0x3f]
    %v996 = vld [vmem:[%s472 + $0x3] sm:$0xff]
    %v997 = vld [vmem:[%s472 + $0xb] sm:$0x3f]
    %v1000 = vrot.slane %v996, 2
    %v1001 = vrot.slane %v997, 2
    %v1002 = vsel %vm331, %v1000, %v1001
    %v1006 = vsel %vm331, %v995, %v1000
    %v1007 = vsel %vm533, %v981, %v994
    %v1008 = vsel %vm533, %v993, %v1006
    %v1009 = vsel %vm533, %v989, %v1002
    %v1010 = vsel %vm533, %v988, %v1001
    %v1011 = vsel %vm538, %v968, %v1007
    %v1012 = vsel %vm538, %v980, %v1008
    %v1013 = vsel %vm538, %v976, %v1009
    %v1014 = vsel %vm538, %v975, %v1010
    %v1015 = vpack.c.bf16 %v1012, %v1011
    %v1016 = vpack.c.bf16 %v1014, %v1013
    %v1033 = vunpack.c.l.b16 %v948
    %v1034 = vunpack.c.l.b16 %v949
    %v1035 = vunpack.c.l.b16 %v950
    %v1036 = vunpack.c.l.b16 %v951
    %v1037 = vunpack.c.l.b16 %v952
    %v1038 = vunpack.c.l.b16 %v953
    %v1039 = vunpack.c.l.b16 %v954
    %v1040 = vunpack.c.l.b16 %v955
    %v1041 = vunpack.c.l.b16 %v956
    %v1042 = vunpack.c.l.b16 %v957
    %v1043 = vunpack.c.l.b16 %v958
    %v1044 = vunpack.c.l.b16 %v959
    %v1045 = vunpack.c.l.b16 %v960
    %v1046 = vunpack.c.l.b16 %v961
    %v1047 = vunpack.c.l.b16 %v962
    %v1048 = vunpack.c.l.b16 %v963
    %v1049 = vpack.c.b16 %v1034, %v1033
    %v1050 = vpack.c.b16 %v1036, %v1035
    %v1051 = vpack.c.b16 %v1038, %v1037
    %v1052 = vpack.c.b16 %v1040, %v1039
    %v1053 = vpack.c.b16 %v1042, %v1041
    %v1054 = vpack.c.b16 %v1044, %v1043
    %v1055 = vpack.c.b16 %v1046, %v1045
    %v1056 = vpack.c.b16 %v1048, %v1047
    %1065 = vmatprep.subr.bf16.mxu0 0
    %1066 = vmatpush1.bf16.msra.mxu0 %v1049
    %1067 = vmatprep.subr.bf16.mxu0 0
    %1068 = vmatpush1.bf16.msra.mxu0 %v1050
    %1069 = vmatprep.subr.bf16.mxu0 0
    %1070 = vmatpush1.bf16.msra.mxu0 %v1051
    %1071 = vmatprep.subr.bf16.mxu0 0
    %1072 = vmatpush1.bf16.msra.mxu0 %v1052
    %1073 = vmatprep.subr.bf16.mxu0 0
    %1074 = vmatpush1.bf16.msra.mxu0 %v1053
    %1075 = vmatprep.subr.bf16.mxu0 0
    %1076 = vmatpush1.bf16.msra.mxu0 %v1054
    %1077 = vmatprep.subr.bf16.mxu0 0
    %1078 = vmatpush1.bf16.msra.mxu0 %v1055
    %1079 = vmatprep.subr.bf16.mxu0 0
    %1080 = vmatpush1.bf16.msra.mxu0 %v1056
    %1081 = vmatprep.subr.bf16.mxu0 0
    %1082 = vmatpush1.bf16.msra.mxu0 0
    %1083 = vmatprep.subr.bf16.mxu0 0
    %1084 = vmatpush1.bf16.msra.mxu0 0
    %1085 = vmatprep.subr.bf16.mxu0 0
    %1086 = vmatpush1.bf16.msra.mxu0 0
    %1087 = vmatprep.subr.bf16.mxu0 0
    %1088 = vmatpush1.bf16.msra.mxu0 0
    %1089 = vmatprep.subr.bf16.mxu0 0
    %1090 = vmatpush1.bf16.msra.mxu0 0
    %1091 = vmatprep.subr.bf16.mxu0 0
    %1092 = vmatpush1.bf16.msra.mxu0 0
    %1093 = vmatprep.subr.bf16.mxu0 0
    %1094 = vmatpush1.bf16.msra.mxu0 0
    %1095 = vmatprep.subr.bf16.mxu0 0
    %1096 = vmatpush1.bf16.msra.mxu0 0
    %1097 = vmatprep.mubr.bf16.mxu0 0
    %1098 = vmatmul.mubr.bf16.gmra.mrb[0].mxu0 %v1015
    %v1099 = vpop.f32.mrb[0].mxu0
    %v1100 = vadd.f32 0.0, %v1099
    %v1101 = vpop.f32.mrb[0].mxu0
    %v1102 = vpop.f32.mrb[0].mxu0
    %v1103 = vadd.f32 0.0, %v1102
    %v1104 = vpop.f32.mrb[0].mxu0
    %1105 = vmatprep.mubr.bf16.mxu0 0
    %1106 = vmatmul.mubr.bf16.gmra.mrb[0].mxu0 %v1016
    %v1107 = vpop.f32.mrb[0].mxu0
    %v1108 = vadd.f32 0.0, %v1107
    %v1109 = vpop.f32.mrb[0].mxu0
    %v1110 = vpop.f32.mrb[0].mxu0
    %v1111 = vadd.f32 0.0, %v1110
    %v1112 = vpop.f32.mrb[0].mxu0
    %1113 = vdwg.mxu0
    %v1114 = vadd.f32 %v1100, %v1103
    %v1115 = vadd.f32 %v1114, %v1108
    %v1116 = vsel %vm644, %v1111, 0.0
    %v1117 = vadd.f32 %v1115, %v1116
    %v1118 = vrot.slane %v1117, 4
    %v1119 = vadd.f32 %v1117, %v1118
    %v1120 = vrot.slane %v1119, 2
    %v1121 = vadd.f32 %v1119, %v1120
    %v1122 = vrot.slane %v1121, 1
    %v1123 = vadd.f32 %v1121, %v1122
    %v1124 = vmul.f32 %v1123, 0.035714287
    %v1125 = vmul.f32 %v1100, %v1100
    %v1126 = vmul.f32 %v1103, %v1103
    %v1127 = vmul.f32 %v1108, %v1108
    %v1128 = vmul.f32 %v1111, %v1111
    %v1129 = vadd.f32 %v1125, %v1126
    %v1130 = vadd.f32 %v1129, %v1127
    %v1131 = vsel %vm644, %v1128, 0.0
    %v1132 = vadd.f32 %v1130, %v1131
    %v1133 = vrot.slane %v1132, 4
    %v1134 = vadd.f32 %v1132, %v1133
    %v1135 = vrot.slane %v1134, 2
    %v1136 = vadd.f32 %v1134, %v1135
    %v1137 = vrot.slane %v1136, 1
    %v1138 = vadd.f32 %v1136, %v1137
    %v1139 = vmul.f32 %v1138, 0.035714287
    %v1140 = vmul.f32 %v1124, %v1124
    %v1141 = vsub.f32 %v1139, %v1140
    %v1142 = vmax.f32 %v1141, 0.0
    %v1143 = vadd.f32 %v1142, 1e-05
    %v1144 = vrsqrt.pop %v1143
    %v1145 = vmul.f32 %v1144, %v965
    %v1146 = vmul.f32 %v1124, %v1145
    %v1147 = vsub.f32 %v967, %v1146
    %v1148 = vlaneseq
    %v1149 = vshrl.u32 %v1148, 7
    %v1150 = vsub.s32 0, %v1149
    %v1151 = vrot.slane %v1145, %v1150
    %v1152 = vmul.f32 %v1100, %v1151
    %v1153 = vmul.f32 %v1103, %v1151
    %v1154 = vmul.f32 %v1108, %v1151
    %v1155 = vmul.f32 %v1111, %v1151
    %v1157 = vlaneseq
    %v1158 = vshrl.u32 %v1157, 7
    %v1159 = vsub.s32 0, %v1158
    %v1160 = vrot.slane %v1147, %v1159
    %v1162 = vadd.f32 %v1152, %v1160
    %v1163 = vadd.f32 %v1153, %v1160
    %v1164 = vadd.f32 %v1154, %v1160
    %v1165 = vadd.f32 %v1155, %v1160
    %v1166 = vmax.f32 %v1162, 0.0
    %v1167 = vmax.f32 %v1163, 0.0
    %v1168 = vmax.f32 %v1164, 0.0
    %v1169 = vmax.f32 %v1165, 0.0
    %1170 = vst [vmem:[#allocation2 + $0x2] sm:$0xff] %v1166
    %1171 = vst [vmem:[#allocation2 + $0xa] sm:$0x3f] %v1167
    %1172 = vst [vmem:[%s304 - $0x4] sm:$0xc0] %v1167
    %1173 = vst [vmem:[%s304 + $0x4] sm:$0xff] %v1168
    %1174 = vst [vmem:[%s304 + $0xc] sm:$0xf] %v1169
    %s1175 = scalar_lea.vmem [#allocation10], 192
    %v1176 = vld [vmem:[%s1175] sm:$0xf]
    %v1177 = vld [vmem:[%s1175 + $0x4] sm:$0xf]
    %v1178 = vld [vmem:[%s1175 + $0x8] sm:$0xf]
    %v1179 = vld [vmem:[%s1175 + $0xc] sm:$0xf]
    %v1180 = vld [vmem:[%s1175 + $0x10] sm:$0xf]
    %v1181 = vld [vmem:[%s1175 + $0x14] sm:$0xf]
    %v1182 = vld [vmem:[%s1175 + $0x18] sm:$0xf]
    %v1183 = vld [vmem:[%s1175 + $0x1c] sm:$0xf]
    %v1184 = vld [vmem:[%s1175 + $0x20] sm:$0xf]
    %v1185 = vld [vmem:[%s1175 + $0x24] sm:$0xf]
    %v1186 = vld [vmem:[%s1175 + $0x28] sm:$0xf]
    %v1187 = vld [vmem:[%s1175 + $0x2c] sm:$0xf]
    %v1188 = vld [vmem:[%s1175 + $0x30] sm:$0xf]
    %v1189 = vld [vmem:[%s1175 + $0x34] sm:$0xf]
    %v1190 = vld [vmem:[%s1175 + $0x38] sm:$0xf]
    %v1191 = vld [vmem:[%s1175 + $0x3c] sm:$0xf]
    %s1192 = scalar_lea.vmem %s6, 3
    %v1193 = vld [vmem:[%s1192] sm:$0x1]
    %s1194 = scalar_lea.vmem %s7, 3
    %v1195 = vld [vmem:[%s1194] sm:$0x1]
    %v1196 = vld [vmem:[#allocation2 + $0x1] sm:$0xff]
    %v1197 = vld [vmem:[#allocation2 + $0x9] sm:$0x3f]
    %v1198 = vld [vmem:[%s304 + $0x1] sm:$0xff]
    %v1199 = vld [vmem:[%s304 + $0x9] sm:$0x3f]
    %v1202 = vrot.slane %v1198, 2
    %v1203 = vrot.slane %v1199, 2
    %v1204 = vsel %vm331, %v1202, %v1203
    %v1208 = vsel %vm331, %v1197, %v1202
    %v1209 = vld [vmem:[#allocation2 + $0x2] sm:$0xff]
    %v1210 = vld [vmem:[#allocation2 + $0xa] sm:$0x3f]
    %v1211 = vld [vmem:[%s304 + $0x2] sm:$0xff]
    %v1212 = vld [vmem:[%s304 + $0xa] sm:$0x3f]
    %v1215 = vrot.slane %v1211, 2
    %v1216 = vrot.slane %v1212, 2
    %v1217 = vsel %vm331, %v1215, %v1216
    %v1221 = vsel %vm331, %v1210, %v1215
    %v1222 = vld [vmem:[#allocation2 + $0x3] sm:$0xff]
    %v1223 = vld [vmem:[#allocation2 + $0xb] sm:$0x3f]
    %v1224 = vld [vmem:[%s304 + $0x3] sm:$0xff]
    %v1225 = vld [vmem:[%s304 + $0xb] sm:$0x3f]
    %v1228 = vrot.slane %v1224, 2
    %v1229 = vrot.slane %v1225, 2
    %v1230 = vsel %vm331, %v1228, %v1229
    %v1234 = vsel %vm331, %v1223, %v1228
    %v1235 = vsel %vm533, %v1209, %v1222
    %v1236 = vsel %vm533, %v1221, %v1234
    %v1237 = vsel %vm533, %v1217, %v1230
    %v1238 = vsel %vm533, %v1216, %v1229
    %v1239 = vsel %vm538, %v1196, %v1235
    %v1240 = vsel %vm538, %v1208, %v1236
    %v1241 = vsel %vm538, %v1204, %v1237
    %v1242 = vsel %vm538, %v1203, %v1238
    %v1243 = vpack.c.bf16 %v1240, %v1239
    %v1244 = vpack.c.bf16 %v1242, %v1241
    %v1261 = vunpack.c.l.b16 %v1176
    %v1262 = vunpack.c.l.b16 %v1177
    %v1263 = vunpack.c.l.b16 %v1178
    %v1264 = vunpack.c.l.b16 %v1179
    %v1265 = vunpack.c.l.b16 %v1180
    %v1266 = vunpack.c.l.b16 %v1181
    %v1267 = vunpack.c.l.b16 %v1182
    %v1268 = vunpack.c.l.b16 %v1183
    %v1269 = vunpack.c.l.b16 %v1184
    %v1270 = vunpack.c.l.b16 %v1185
    %v1271 = vunpack.c.l.b16 %v1186
    %v1272 = vunpack.c.l.b16 %v1187
    %v1273 = vunpack.c.l.b16 %v1188
    %v1274 = vunpack.c.l.b16 %v1189
    %v1275 = vunpack.c.l.b16 %v1190
    %v1276 = vunpack.c.l.b16 %v1191
    %v1277 = vpack.c.b16 %v1262, %v1261
    %v1278 = vpack.c.b16 %v1264, %v1263
    %v1279 = vpack.c.b16 %v1266, %v1265
    %v1280 = vpack.c.b16 %v1268, %v1267
    %v1281 = vpack.c.b16 %v1270, %v1269
    %v1282 = vpack.c.b16 %v1272, %v1271
    %v1283 = vpack.c.b16 %v1274, %v1273
    %v1284 = vpack.c.b16 %v1276, %v1275
    %1293 = vmatprep.subr.bf16.mxu0 0
    %1294 = vmatpush1.bf16.msra.mxu0 %v1277
    %1295 = vmatprep.subr.bf16.mxu0 0
    %1296 = vmatpush1.bf16.msra.mxu0 %v1278
    %1297 = vmatprep.subr.bf16.mxu0 0
    %1298 = vmatpush1.bf16.msra.mxu0 %v1279
    %1299 = vmatprep.subr.bf16.mxu0 0
    %1300 = vmatpush1.bf16.msra.mxu0 %v1280
    %1301 = vmatprep.subr.bf16.mxu0 0
    %1302 = vmatpush1.bf16.msra.mxu0 %v1281
    %1303 = vmatprep.subr.bf16.mxu0 0
    %1304 = vmatpush1.bf16.msra.mxu0 %v1282
    %1305 = vmatprep.subr.bf16.mxu0 0
    %1306 = vmatpush1.bf16.msra.mxu0 %v1283
    %1307 = vmatprep.subr.bf16.mxu0 0
    %1308 = vmatpush1.bf16.msra.mxu0 %v1284
    %1309 = vmatprep.subr.bf16.mxu0 0
    %1310 = vmatpush1.bf16.msra.mxu0 0
    %1311 = vmatprep.subr.bf16.mxu0 0
    %1312 = vmatpush1.bf16.msra.mxu0 0
    %1313 = vmatprep.subr.bf16.mxu0 0
    %1314 = vmatpush1.bf16.msra.mxu0 0
    %1315 = vmatprep.subr.bf16.mxu0 0
    %1316 = vmatpush1.bf16.msra.mxu0 0
    %1317 = vmatprep.subr.bf16.mxu0 0
    %1318 = vmatpush1.bf16.msra.mxu0 0
    %1319 = vmatprep.subr.bf16.mxu0 0
    %1320 = vmatpush1.bf16.msra.mxu0 0
    %1321 = vmatprep.subr.bf16.mxu0 0
    %1322 = vmatpush1.bf16.msra.mxu0 0
    %1323 = vmatprep.subr.bf16.mxu0 0
    %1324 = vmatpush1.bf16.msra.mxu0 0
    %1325 = vmatprep.mubr.bf16.mxu0 0
    %1326 = vmatmul.mubr.bf16.gmra.mrb[0].mxu0 %v1243
    %v1327 = vpop.f32.mrb[0].mxu0
    %v1328 = vadd.f32 0.0, %v1327
    %v1329 = vpop.f32.mrb[0].mxu0
    %v1330 = vpop.f32.mrb[0].mxu0
    %v1331 = vadd.f32 0.0, %v1330
    %v1332 = vpop.f32.mrb[0].mxu0
    %1333 = vmatprep.mubr.bf16.mxu0 0
    %1334 = vmatmul.mubr.bf16.gmra.mrb[0].mxu0 %v1244
    %v1335 = vpop.f32.mrb[0].mxu0
    %v1336 = vadd.f32 0.0, %v1335
    %v1337 = vpop.f32.mrb[0].mxu0
    %v1338 = vpop.f32.mrb[0].mxu0
    %v1339 = vadd.f32 0.0, %v1338
    %v1340 = vpop.f32.mrb[0].mxu0
    %1341 = vdwg.mxu0
    %v1342 = vadd.f32 %v1328, %v1331
    %v1343 = vadd.f32 %v1342, %v1336
    %v1344 = vsel %vm644, %v1339, 0.0
    %v1345 = vadd.f32 %v1343, %v1344
    %v1346 = vrot.slane %v1345, 4
    %v1347 = vadd.f32 %v1345, %v1346
    %v1348 = vrot.slane %v1347, 2
    %v1349 = vadd.f32 %v1347, %v1348
    %v1350 = vrot.slane %v1349, 1
    %v1351 = vadd.f32 %v1349, %v1350
    %v1352 = vmul.f32 %v1351, 0.035714287
    %v1353 = vmul.f32 %v1328, %v1328
    %v1354 = vmul.f32 %v1331, %v1331
    %v1355 = vmul.f32 %v1336, %v1336
    %v1356 = vmul.f32 %v1339, %v1339
    %v1357 = vadd.f32 %v1353, %v1354
    %v1358 = vadd.f32 %v1357, %v1355
    %v1359 = vsel %vm644, %v1356, 0.0
    %v1360 = vadd.f32 %v1358, %v1359
    %v1361 = vrot.slane %v1360, 4
    %v1362 = vadd.f32 %v1360, %v1361
    %v1363 = vrot.slane %v1362, 2
    %v1364 = vadd.f32 %v1362, %v1363
    %v1365 = vrot.slane %v1364, 1
    %v1366 = vadd.f32 %v1364, %v1365
    %v1367 = vmul.f32 %v1366, 0.035714287
    %v1368 = vmul.f32 %v1352, %v1352
    %v1369 = vsub.f32 %v1367, %v1368
    %v1370 = vmax.f32 %v1369, 0.0
    %v1371 = vadd.f32 %v1370, 1e-05
    %v1372 = vrsqrt.pop %v1371
    %v1373 = vmul.f32 %v1372, %v1193
    %v1374 = vmul.f32 %v1352, %v1373
    %v1375 = vsub.f32 %v1195, %v1374
    %v1376 = vlaneseq
    %v1377 = vshrl.u32 %v1376, 7
    %v1378 = vsub.s32 0, %v1377
    %v1379 = vrot.slane %v1373, %v1378
    %v1380 = vmul.f32 %v1328, %v1379
    %v1381 = vmul.f32 %v1331, %v1379
    %v1382 = vmul.f32 %v1336, %v1379
    %v1383 = vmul.f32 %v1339, %v1379
    %v1385 = vlaneseq
    %v1386 = vshrl.u32 %v1385, 7
    %v1387 = vsub.s32 0, %v1386
    %v1388 = vrot.slane %v1375, %v1387
    %v1390 = vadd.f32 %v1380, %v1388
    %v1391 = vadd.f32 %v1381, %v1388
    %v1392 = vadd.f32 %v1382, %v1388
    %v1393 = vadd.f32 %v1383, %v1388
    %v1394 = vld [vmem:[#allocation3 + $0x2] sm:$0xff]
    %v1395 = vld [vmem:[#allocation3 + $0xa] sm:$0x3f]
    %v1396 = vld [vmem:[%s472 + $0x2] sm:$0xff]
    %v1397 = vld [vmem:[%s472 + $0xa] sm:$0x3f]
    %v1400 = vrot.slane %v1396, 2
    %v1401 = vrot.slane %v1397, 2
    %v1402 = vsel %vm331, %v1400, %v1401
    %v1406 = vsel %vm331, %v1395, %v1400
    %v1407 = vadd.f32 %v1390, %v1394
    %v1408 = vadd.f32 %v1391, %v1406
    %v1409 = vadd.f32 %v1392, %v1402
    %v1410 = vadd.f32 %v1393, %v1401
    %1411 = vst [vmem:[#allocation3 + $0x2] sm:$0xff] %v1407
    %1412 = vst [vmem:[#allocation3 + $0xa] sm:$0x3f] %v1408
    %1413 = vst [vmem:[%s472 - $0x4] sm:$0xc0] %v1408
    %1414 = vst [vmem:[%s472 + $0x4] sm:$0xff] %v1409
    %1415 = vst [vmem:[%s472 + $0xc] sm:$0xf] %v1410
    %s1416 = scalar_lea.vmem [#allocation10], 256
    %v1417 = vld [vmem:[%s1416] sm:$0xf]
    %v1418 = vld [vmem:[%s1416 + $0x4] sm:$0xf]
    %v1419 = vld [vmem:[%s1416 + $0x8] sm:$0xf]
    %v1420 = vld [vmem:[%s1416 + $0xc] sm:$0xf]
    %v1421 = vld [vmem:[%s1416 + $0x10] sm:$0xf]
    %v1422 = vld [vmem:[%s1416 + $0x14] sm:$0xf]
    %v1423 = vld [vmem:[%s1416 + $0x18] sm:$0xf]
    %v1424 = vld [vmem:[%s1416 + $0x1c] sm:$0xf]
    %v1425 = vld [vmem:[%s1416 + $0x20] sm:$0xf]
    %v1426 = vld [vmem:[%s1416 + $0x24] sm:$0xf]
    %v1427 = vld [vmem:[%s1416 + $0x28] sm:$0xf]
    %v1428 = vld [vmem:[%s1416 + $0x2c] sm:$0xf]
    %v1429 = vld [vmem:[%s1416 + $0x30] sm:$0xf]
    %v1430 = vld [vmem:[%s1416 + $0x34] sm:$0xf]
    %v1431 = vld [vmem:[%s1416 + $0x38] sm:$0xf]
    %v1432 = vld [vmem:[%s1416 + $0x3c] sm:$0xf]
    %s1433 = scalar_lea.vmem %s6, 4
    %v1434 = vld [vmem:[%s1433] sm:$0x1]
    %s1435 = scalar_lea.vmem %s7, 4
    %v1436 = vld [vmem:[%s1435] sm:$0x1]
    %v1437 = vld [vmem:[#allocation3 + $0x1] sm:$0xff]
    %v1438 = vld [vmem:[#allocation3 + $0x9] sm:$0x3f]
    %v1439 = vld [vmem:[%s472 + $0x1] sm:$0xff]
    %v1440 = vld [vmem:[%s472 + $0x9] sm:$0x3f]
    %v1443 = vrot.slane %v1439, 2
    %v1444 = vrot.slane %v1440, 2
    %v1445 = vsel %vm331, %v1443, %v1444
    %v1449 = vsel %vm331, %v1438, %v1443
    %v1450 = vld [vmem:[#allocation3 + $0x2] sm:$0xff]
    %v1451 = vld [vmem:[#allocation3 + $0xa] sm:$0x3f]
    %v1452 = vld [vmem:[%s472 + $0x2] sm:$0xff]
    %v1453 = vld [vmem:[%s472 + $0xa] sm:$0x3f]
    %v1456 = vrot.slane %v1452, 2
    %v1457 = vrot.slane %v1453, 2
    %v1458 = vsel %vm331, %v1456, %v1457
    %v1462 = vsel %vm331, %v1451, %v1456
    %v1463 = vld [vmem:[#allocation3 + $0x3] sm:$0xff]
    %v1464 = vld [vmem:[#allocation3 + $0xb] sm:$0x3f]
    %v1465 = vld [vmem:[%s472 + $0x3] sm:$0xff]
    %v1466 = vld [vmem:[%s472 + $0xb] sm:$0x3f]
    %v1469 = vrot.slane %v1465, 2
    %v1470 = vrot.slane %v1466, 2
    %v1471 = vsel %vm331, %v1469, %v1470
    %v1475 = vsel %vm331, %v1464, %v1469
    %v1476 = vsel %vm533, %v1450, %v1463
    %v1477 = vsel %vm533, %v1462, %v1475
    %v1478 = vsel %vm533, %v1458, %v1471
    %v1479 = vsel %vm533, %v1457, %v1470
    %v1480 = vsel %vm538, %v1437, %v1476
    %v1481 = vsel %vm538, %v1449, %v1477
    %v1482 = vsel %vm538, %v1445, %v1478
    %v1483 = vsel %vm538, %v1444, %v1479
    %v1484 = vpack.c.bf16 %v1481, %v1480
    %v1485 = vpack.c.bf16 %v1483, %v1482
    %v1502 = vunpack.c.l.b16 %v1417
    %v1503 = vunpack.c.l.b16 %v1418
    %v1504 = vunpack.c.l.b16 %v1419
    %v1505 = vunpack.c.l.b16 %v1420
    %v1506 = vunpack.c.l.b16 %v1421
    %v1507 = vunpack.c.l.b16 %v1422
    %v1508 = vunpack.c.l.b16 %v1423
    %v1509 = vunpack.c.l.b16 %v1424
    %v1510 = vunpack.c.l.b16 %v1425
    %v1511 = vunpack.c.l.b16 %v1426
    %v1512 = vunpack.c.l.b16 %v1427
    %v1513 = vunpack.c.l.b16 %v1428
    %v1514 = vunpack.c.l.b16 %v1429
    %v1515 = vunpack.c.l.b16 %v1430
    %v1516 = vunpack.c.l.b16 %v1431
    %v1517 = vunpack.c.l.b16 %v1432
    %v1518 = vpack.c.b16 %v1503, %v1502
    %v1519 = vpack.c.b16 %v1505, %v1504
    %v1520 = vpack.c.b16 %v1507, %v1506
    %v1521 = vpack.c.b16 %v1509, %v1508
    %v1522 = vpack.c.b16 %v1511, %v1510
    %v1523 = vpack.c.b16 %v1513, %v1512
    %v1524 = vpack.c.b16 %v1515, %v1514
    %v1525 = vpack.c.b16 %v1517, %v1516
    %1534 = vmatprep.subr.bf16.mxu0 0
    %1535 = vmatpush1.bf16.msra.mxu0 %v1518
    %1536 = vmatprep.subr.bf16.mxu0 0
    %1537 = vmatpush1.bf16.msra.mxu0 %v1519
    %1538 = vmatprep.subr.bf16.mxu0 0
    %1539 = vmatpush1.bf16.msra.mxu0 %v1520
    %1540 = vmatprep.subr.bf16.mxu0 0
    %1541 = vmatpush1.bf16.msra.mxu0 %v1521
    %1542 = vmatprep.subr.bf16.mxu0 0
    %1543 = vmatpush1.bf16.msra.mxu0 %v1522
    %1544 = vmatprep.subr.bf16.mxu0 0
    %1545 = vmatpush1.bf16.msra.mxu0 %v1523
    %1546 = vmatprep.subr.bf16.mxu0 0
    %1547 = vmatpush1.bf16.msra.mxu0 %v1524
    %1548 = vmatprep.subr.bf16.mxu0 0
    %1549 = vmatpush1.bf16.msra.mxu0 %v1525
    %1550 = vmatprep.subr.bf16.mxu0 0
    %1551 = vmatpush1.bf16.msra.mxu0 0
    %1552 = vmatprep.subr.bf16.mxu0 0
    %1553 = vmatpush1.bf16.msra.mxu0 0
    %1554 = vmatprep.subr.bf16.mxu0 0
    %1555 = vmatpush1.bf16.msra.mxu0 0
    %1556 = vmatprep.subr.bf16.mxu0 0
    %1557 = vmatpush1.bf16.msra.mxu0 0
    %1558 = vmatprep.subr.bf16.mxu0 0
    %1559 = vmatpush1.bf16.msra.mxu0 0
    %1560 = vmatprep.subr.bf16.mxu0 0
    %1561 = vmatpush1.bf16.msra.mxu0 0
    %1562 = vmatprep.subr.bf16.mxu0 0
    %1563 = vmatpush1.bf16.msra.mxu0 0
    %1564 = vmatprep.subr.bf16.mxu0 0
    %1565 = vmatpush1.bf16.msra.mxu0 0
    %1566 = vmatprep.mubr.bf16.mxu0 0
    %1567 = vmatmul.mubr.bf16.gmra.mrb[0].mxu0 %v1484
    %v1568 = vpop.f32.mrb[0].mxu0
    %v1569 = vadd.f32 0.0, %v1568
    %v1570 = vpop.f32.mrb[0].mxu0
    %v1571 = vpop.f32.mrb[0].mxu0
    %v1572 = vadd.f32 0.0, %v1571
    %v1573 = vpop.f32.mrb[0].mxu0
    %1574 = vmatprep.mubr.bf16.mxu0 0
    %1575 = vmatmul.mubr.bf16.gmra.mrb[0].mxu0 %v1485
    %v1576 = vpop.f32.mrb[0].mxu0
    %v1577 = vadd.f32 0.0, %v1576
    %v1578 = vpop.f32.mrb[0].mxu0
    %v1579 = vpop.f32.mrb[0].mxu0
    %v1580 = vadd.f32 0.0, %v1579
    %v1581 = vpop.f32.mrb[0].mxu0
    %1582 = vdwg.mxu0
    %v1583 = vadd.f32 %v1569, %v1572
    %v1584 = vadd.f32 %v1583, %v1577
    %v1585 = vsel %vm644, %v1580, 0.0
    %v1586 = vadd.f32 %v1584, %v1585
    %v1587 = vrot.slane %v1586, 4
    %v1588 = vadd.f32 %v1586, %v1587
    %v1589 = vrot.slane %v1588, 2
    %v1590 = vadd.f32 %v1588, %v1589
    %v1591 = vrot.slane %v1590, 1
    %v1592 = vadd.f32 %v1590, %v1591
    %v1593 = vmul.f32 %v1592, 0.035714287
    %v1594 = vmul.f32 %v1569, %v1569
    %v1595 = vmul.f32 %v1572, %v1572
    %v1596 = vmul.f32 %v1577, %v1577
    %v1597 = vmul.f32 %v1580, %v1580
    %v1598 = vadd.f32 %v1594, %v1595
    %v1599 = vadd.f32 %v1598, %v1596
    %v1600 = vsel %vm644, %v1597, 0.0
    %v1601 = vadd.f32 %v1599, %v1600
    %v1602 = vrot.slane %v1601, 4
    %v1603 = vadd.f32 %v1601, %v1602
    %v1604 = vrot.slane %v1603, 2
    %v1605 = vadd.f32 %v1603, %v1604
    %v1606 = vrot.slane %v1605, 1
    %v1607 = vadd.f32 %v1605, %v1606
    %v1608 = vmul.f32 %v1607, 0.035714287
    %v1609 = vmul.f32 %v1593, %v1593
    %v1610 = vsub.f32 %v1608, %v1609
    %v1611 = vmax.f32 %v1610, 0.0
    %v1612 = vadd.f32 %v1611, 1e-05
    %v1613 = vrsqrt.pop %v1612
    %v1614 = vmul.f32 %v1613, %v1434
    %v1615 = vmul.f32 %v1593, %v1614
    %v1616 = vsub.f32 %v1436, %v1615
    %v1617 = vlaneseq
    %v1618 = vshrl.u32 %v1617, 7
    %v1619 = vsub.s32 0, %v1618
    %v1620 = vrot.slane %v1614, %v1619
    %v1621 = vmul.f32 %v1569, %v1620
    %v1622 = vmul.f32 %v1572, %v1620
    %v1623 = vmul.f32 %v1577, %v1620
    %v1624 = vmul.f32 %v1580, %v1620
    %v1626 = vlaneseq
    %v1627 = vshrl.u32 %v1626, 7
    %v1628 = vsub.s32 0, %v1627
    %v1629 = vrot.slane %v1616, %v1628
    %v1631 = vadd.f32 %v1621, %v1629
    %v1632 = vadd.f32 %v1622, %v1629
    %v1633 = vadd.f32 %v1623, %v1629
    %v1634 = vadd.f32 %v1624, %v1629
    %v1635 = vmax.f32 %v1631, 0.0
    %v1636 = vmax.f32 %v1632, 0.0
    %v1637 = vmax.f32 %v1633, 0.0
    %v1638 = vmax.f32 %v1634, 0.0
    %1639 = vst [vmem:[#allocation2 + $0x2] sm:$0xff] %v1635
    %1640 = vst [vmem:[#allocation2 + $0xa] sm:$0x3f] %v1636
    %1641 = vst [vmem:[%s304 - $0x4] sm:$0xc0] %v1636
    %1642 = vst [vmem:[%s304 + $0x4] sm:$0xff] %v1637
    %1643 = vst [vmem:[%s304 + $0xc] sm:$0xf] %v1638
    %s1644 = scalar_lea.vmem [#allocation10], 320
    %v1645 = vld [vmem:[%s1644] sm:$0xf]
    %v1646 = vld [vmem:[%s1644 + $0x4] sm:$0xf]
    %v1647 = vld [vmem:[%s1644 + $0x8] sm:$0xf]
    %v1648 = vld [vmem:[%s1644 + $0xc] sm:$0xf]
    %v1649 = vld [vmem:[%s1644 + $0x10] sm:$0xf]
    %v1650 = vld [vmem:[%s1644 + $0x14] sm:$0xf]
    %v1651 = vld [vmem:[%s1644 + $0x18] sm:$0xf]
    %v1652 = vld [vmem:[%s1644 + $0x1c] sm:$0xf]
    %v1653 = vld [vmem:[%s1644 + $0x20] sm:$0xf]
    %v1654 = vld [vmem:[%s1644 + $0x24] sm:$0xf]
    %v1655 = vld [vmem:[%s1644 + $0x28] sm:$0xf]
    %v1656 = vld [vmem:[%s1644 + $0x2c] sm:$0xf]
    %v1657 = vld [vmem:[%s1644 + $0x30] sm:$0xf]
    %v1658 = vld [vmem:[%s1644 + $0x34] sm:$0xf]
    %v1659 = vld [vmem:[%s1644 + $0x38] sm:$0xf]
    %v1660 = vld [vmem:[%s1644 + $0x3c] sm:$0xf]
    %s1661 = scalar_lea.vmem %s6, 5
    %v1662 = vld [vmem:[%s1661] sm:$0x1]
    %s1663 = scalar_lea.vmem %s7, 5
    %v1664 = vld [vmem:[%s1663] sm:$0x1]
    %v1665 = vld [vmem:[#allocation2 + $0x1] sm:$0xff]
    %v1666 = vld [vmem:[#allocation2 + $0x9] sm:$0x3f]
    %v1667 = vld [vmem:[%s304 + $0x1] sm:$0xff]
    %v1668 = vld [vmem:[%s304 + $0x9] sm:$0x3f]
    %v1671 = vrot.slane %v1667, 2
    %v1672 = vrot.slane %v1668, 2
    %v1673 = vsel %vm331, %v1671, %v1672
    %v1677 = vsel %vm331, %v1666, %v1671
    %v1678 = vld [vmem:[#allocation2 + $0x2] sm:$0xff]
    %v1679 = vld [vmem:[#allocation2 + $0xa] sm:$0x3f]
    %v1680 = vld [vmem:[%s304 + $0x2] sm:$0xff]
    %v1681 = vld [vmem:[%s304 + $0xa] sm:$0x3f]
    %v1684 = vrot.slane %v1680, 2
    %v1685 = vrot.slane %v1681, 2
    %v1686 = vsel %vm331, %v1684, %v1685
    %v1690 = vsel %vm331, %v1679, %v1684
    %v1691 = vld [vmem:[#allocation2 + $0x3] sm:$0xff]
    %v1692 = vld [vmem:[#allocation2 + $0xb] sm:$0x3f]
    %v1693 = vld [vmem:[%s304 + $0x3] sm:$0xff]
    %v1694 = vld [vmem:[%s304 + $0xb] sm:$0x3f]
    %v1697 = vrot.slane %v1693, 2
    %v1698 = vrot.slane %v1694, 2
    %v1699 = vsel %vm331, %v1697, %v1698
    %v1703 = vsel %vm331, %v1692, %v1697
    %v1704 = vsel %vm533, %v1678, %v1691
    %v1705 = vsel %vm533, %v1690, %v1703
    %v1706 = vsel %vm533, %v1686, %v1699
    %v1707 = vsel %vm533, %v1685, %v1698
    %v1708 = vsel %vm538, %v1665, %v1704
    %v1709 = vsel %vm538, %v1677, %v1705
    %v1710 = vsel %vm538, %v1673, %v1706
    %v1711 = vsel %vm538, %v1672, %v1707
    %v1712 = vpack.c.bf16 %v1709, %v1708
    %v1713 = vpack.c.bf16 %v1711, %v1710
    %v1730 = vunpack.c.l.b16 %v1645
    %v1731 = vunpack.c.l.b16 %v1646
    %v1732 = vunpack.c.l.b16 %v1647
    %v1733 = vunpack.c.l.b16 %v1648
    %v1734 = vunpack.c.l.b16 %v1649
    %v1735 = vunpack.c.l.b16 %v1650
    %v1736 = vunpack.c.l.b16 %v1651
    %v1737 = vunpack.c.l.b16 %v1652
    %v1738 = vunpack.c.l.b16 %v1653
    %v1739 = vunpack.c.l.b16 %v1654
    %v1740 = vunpack.c.l.b16 %v1655
    %v1741 = vunpack.c.l.b16 %v1656
    %v1742 = vunpack.c.l.b16 %v1657
    %v1743 = vunpack.c.l.b16 %v1658
    %v1744 = vunpack.c.l.b16 %v1659
    %v1745 = vunpack.c.l.b16 %v1660
    %v1746 = vpack.c.b16 %v1731, %v1730
    %v1747 = vpack.c.b16 %v1733, %v1732
    %v1748 = vpack.c.b16 %v1735, %v1734
    %v1749 = vpack.c.b16 %v1737, %v1736
    %v1750 = vpack.c.b16 %v1739, %v1738
    %v1751 = vpack.c.b16 %v1741, %v1740
    %v1752 = vpack.c.b16 %v1743, %v1742
    %v1753 = vpack.c.b16 %v1745, %v1744
    %1762 = vmatprep.subr.bf16.mxu0 0
    %1763 = vmatpush1.bf16.msra.mxu0 %v1746
    %1764 = vmatprep.subr.bf16.mxu0 0
    %1765 = vmatpush1.bf16.msra.mxu0 %v1747
    %1766 = vmatprep.subr.bf16.mxu0 0
    %1767 = vmatpush1.bf16.msra.mxu0 %v1748
    %1768 = vmatprep.subr.bf16.mxu0 0
    %1769 = vmatpush1.bf16.msra.mxu0 %v1749
    %1770 = vmatprep.subr.bf16.mxu0 0
    %1771 = vmatpush1.bf16.msra.mxu0 %v1750
    %1772 = vmatprep.subr.bf16.mxu0 0
    %1773 = vmatpush1.bf16.msra.mxu0 %v1751
    %1774 = vmatprep.subr.bf16.mxu0 0
    %1775 = vmatpush1.bf16.msra.mxu0 %v1752
    %1776 = vmatprep.subr.bf16.mxu0 0
    %1777 = vmatpush1.bf16.msra.mxu0 %v1753
    %1778 = vmatprep.subr.bf16.mxu0 0
    %1779 = vmatpush1.bf16.msra.mxu0 0
    %1780 = vmatprep.subr.bf16.mxu0 0
    %1781 = vmatpush1.bf16.msra.mxu0 0
    %1782 = vmatprep.subr.bf16.mxu0 0
    %1783 = vmatpush1.bf16.msra.mxu0 0
    %1784 = vmatprep.subr.bf16.mxu0 0
    %1785 = vmatpush1.bf16.msra.mxu0 0
    %1786 = vmatprep.subr.bf16.mxu0 0
    %1787 = vmatpush1.bf16.msra.mxu0 0
    %1788 = vmatprep.subr.bf16.mxu0 0
    %1789 = vmatpush1.bf16.msra.mxu0 0
    %1790 = vmatprep.subr.bf16.mxu0 0
    %1791 = vmatpush1.bf16.msra.mxu0 0
    %1792 = vmatprep.subr.bf16.mxu0 0
    %1793 = vmatpush1.bf16.msra.mxu0 0
    %1794 = vmatprep.mubr.bf16.mxu0 0
    %1795 = vmatmul.mubr.bf16.gmra.mrb[0].mxu0 %v1712
    %v1796 = vpop.f32.mrb[0].mxu0
    %v1797 = vadd.f32 0.0, %v1796
    %v1798 = vpop.f32.mrb[0].mxu0
    %v1799 = vpop.f32.mrb[0].mxu0
    %v1800 = vadd.f32 0.0, %v1799
    %v1801 = vpop.f32.mrb[0].mxu0
    %1802 = vmatprep.mubr.bf16.mxu0 0
    %1803 = vmatmul.mubr.bf16.gmra.mrb[0].mxu0 %v1713
    %v1804 = vpop.f32.mrb[0].mxu0
    %v1805 = vadd.f32 0.0, %v1804
    %v1806 = vpop.f32.mrb[0].mxu0
    %v1807 = vpop.f32.mrb[0].mxu0
    %v1808 = vadd.f32 0.0, %v1807
    %v1809 = vpop.f32.mrb[0].mxu0
    %1810 = vdwg.mxu0
    %v1811 = vadd.f32 %v1797, %v1800
    %v1812 = vadd.f32 %v1811, %v1805
    %v1813 = vsel %vm644, %v1808, 0.0
    %v1814 = vadd.f32 %v1812, %v1813
    %v1815 = vrot.slane %v1814, 4
    %v1816 = vadd.f32 %v1814, %v1815
    %v1817 = vrot.slane %v1816, 2
    %v1818 = vadd.f32 %v1816, %v1817
    %v1819 = vrot.slane %v1818, 1
    %v1820 = vadd.f32 %v1818, %v1819
    %v1821 = vmul.f32 %v1820, 0.035714287
    %v1822 = vmul.f32 %v1797, %v1797
    %v1823 = vmul.f32 %v1800, %v1800
    %v1824 = vmul.f32 %v1805, %v1805
    %v1825 = vmul.f32 %v1808, %v1808
    %v1826 = vadd.f32 %v1822, %v1823
    %v1827 = vadd.f32 %v1826, %v1824
    %v1828 = vsel %vm644, %v1825, 0.0
    %v1829 = vadd.f32 %v1827, %v1828
    %v1830 = vrot.slane %v1829, 4
    %v1831 = vadd.f32 %v1829, %v1830
    %v1832 = vrot.slane %v1831, 2
    %v1833 = vadd.f32 %v1831, %v1832
    %v1834 = vrot.slane %v1833, 1
    %v1835 = vadd.f32 %v1833, %v1834
    %v1836 = vmul.f32 %v1835, 0.035714287
    %v1837 = vmul.f32 %v1821, %v1821
    %v1838 = vsub.f32 %v1836, %v1837
    %v1839 = vmax.f32 %v1838, 0.0
    %v1840 = vadd.f32 %v1839, 1e-05
    %v1841 = vrsqrt.pop %v1840
    %v1842 = vmul.f32 %v1841, %v1662
    %v1843 = vmul.f32 %v1821, %v1842
    %v1844 = vsub.f32 %v1664, %v1843
    %v1845 = vlaneseq
    %v1846 = vshrl.u32 %v1845, 7
    %v1847 = vsub.s32 0, %v1846
    %v1848 = vrot.slane %v1842, %v1847
    %v1849 = vmul.f32 %v1797, %v1848
    %v1850 = vmul.f32 %v1800, %v1848
    %v1851 = vmul.f32 %v1805, %v1848
    %v1852 = vmul.f32 %v1808, %v1848
    %v1854 = vlaneseq
    %v1855 = vshrl.u32 %v1854, 7
    %v1856 = vsub.s32 0, %v1855
    %v1857 = vrot.slane %v1844, %v1856
    %v1859 = vadd.f32 %v1849, %v1857
    %v1860 = vadd.f32 %v1850, %v1857
    %v1861 = vadd.f32 %v1851, %v1857
    %v1862 = vadd.f32 %v1852, %v1857
    %v1863 = vld [vmem:[#allocation3 + $0x2] sm:$0xff]
    %v1864 = vld [vmem:[#allocation3 + $0xa] sm:$0x3f]
    %v1865 = vld [vmem:[%s472 + $0x2] sm:$0xff]
    %v1866 = vld [vmem:[%s472 + $0xa] sm:$0x3f]
    %v1869 = vrot.slane %v1865, 2
    %v1870 = vrot.slane %v1866, 2
    %v1871 = vsel %vm331, %v1869, %v1870
    %v1875 = vsel %vm331, %v1864, %v1869
    %v1876 = vadd.f32 %v1859, %v1863
    %v1877 = vadd.f32 %v1860, %v1875
    %v1878 = vadd.f32 %v1861, %v1871
    %v1879 = vadd.f32 %v1862, %v1870
    %1880 = vst [vmem:[#allocation3 + $0x2] sm:$0xff] %v1876
    %1881 = vst [vmem:[#allocation3 + $0xa] sm:$0x3f] %v1877
    %1882 = vst [vmem:[%s472 - $0x4] sm:$0xc0] %v1877
    %1883 = vst [vmem:[%s472 + $0x4] sm:$0xff] %v1878
    %1884 = vst [vmem:[%s472 + $0xc] sm:$0xf] %v1879
    %s1885 = scalar_lea.vmem [#allocation10], 384
    %v1886 = vld [vmem:[%s1885] sm:$0xf]
    %v1887 = vld [vmem:[%s1885 + $0x4] sm:$0xf]
    %v1888 = vld [vmem:[%s1885 + $0x8] sm:$0xf]
    %v1889 = vld [vmem:[%s1885 + $0xc] sm:$0xf]
    %v1890 = vld [vmem:[%s1885 + $0x10] sm:$0xf]
    %v1891 = vld [vmem:[%s1885 + $0x14] sm:$0xf]
    %v1892 = vld [vmem:[%s1885 + $0x18] sm:$0xf]
    %v1893 = vld [vmem:[%s1885 + $0x1c] sm:$0xf]
    %v1894 = vld [vmem:[%s1885 + $0x20] sm:$0xf]
    %v1895 = vld [vmem:[%s1885 + $0x24] sm:$0xf]
    %v1896 = vld [vmem:[%s1885 + $0x28] sm:$0xf]
    %v1897 = vld [vmem:[%s1885 + $0x2c] sm:$0xf]
    %v1898 = vld [vmem:[%s1885 + $0x30] sm:$0xf]
    %v1899 = vld [vmem:[%s1885 + $0x34] sm:$0xf]
    %v1900 = vld [vmem:[%s1885 + $0x38] sm:$0xf]
    %v1901 = vld [vmem:[%s1885 + $0x3c] sm:$0xf]
    %s1902 = scalar_lea.vmem %s6, 6
    %v1903 = vld [vmem:[%s1902] sm:$0x1]
    %s1904 = scalar_lea.vmem %s7, 6
    %v1905 = vld [vmem:[%s1904] sm:$0x1]
    %v1906 = vld [vmem:[#allocation3 + $0x1] sm:$0xff]
    %v1907 = vld [vmem:[#allocation3 + $0x9] sm:$0x3f]
    %v1908 = vld [vmem:[%s472 + $0x1] sm:$0xff]
    %v1909 = vld [vmem:[%s472 + $0x9] sm:$0x3f]
    %v1912 = vrot.slane %v1908, 2
    %v1913 = vrot.slane %v1909, 2
    %v1914 = vsel %vm331, %v1912, %v1913
    %v1918 = vsel %vm331, %v1907, %v1912
    %v1919 = vld [vmem:[#allocation3 + $0x2] sm:$0xff]
    %v1920 = vld [vmem:[#allocation3 + $0xa] sm:$0x3f]
    %v1921 = vld [vmem:[%s472 + $0x2] sm:$0xff]
    %v1922 = vld [vmem:[%s472 + $0xa] sm:$0x3f]
    %v1925 = vrot.slane %v1921, 2
    %v1926 = vrot.slane %v1922, 2
    %v1927 = vsel %vm331, %v1925, %v1926
    %v1931 = vsel %vm331, %v1920, %v1925
    %v1932 = vld [vmem:[#allocation3 + $0x3] sm:$0xff]
    %v1933 = vld [vmem:[#allocation3 + $0xb] sm:$0x3f]
    %v1934 = vld [vmem:[%s472 + $0x3] sm:$0xff]
    %v1935 = vld [vmem:[%s472 + $0xb] sm:$0x3f]
    %v1938 = vrot.slane %v1934, 2
    %v1939 = vrot.slane %v1935, 2
    %v1940 = vsel %vm331, %v1938, %v1939
    %v1944 = vsel %vm331, %v1933, %v1938
    %v1945 = vsel %vm533, %v1919, %v1932
    %v1946 = vsel %vm533, %v1931, %v1944
    %v1947 = vsel %vm533, %v1927, %v1940
    %v1948 = vsel %vm533, %v1926, %v1939
    %v1949 = vsel %vm538, %v1906, %v1945
    %v1950 = vsel %vm538, %v1918, %v1946
    %v1951 = vsel %vm538, %v1914, %v1947
    %v1952 = vsel %vm538, %v1913, %v1948
    %v1953 = vpack.c.bf16 %v1950, %v1949
    %v1954 = vpack.c.bf16 %v1952, %v1951
    %v1971 = vunpack.c.l.b16 %v1886
    %v1972 = vunpack.c.l.b16 %v1887
    %v1973 = vunpack.c.l.b16 %v1888
    %v1974 = vunpack.c.l.b16 %v1889
    %v1975 = vunpack.c.l.b16 %v1890
    %v1976 = vunpack.c.l.b16 %v1891
    %v1977 = vunpack.c.l.b16 %v1892
    %v1978 = vunpack.c.l.b16 %v1893
    %v1979 = vunpack.c.l.b16 %v1894
    %v1980 = vunpack.c.l.b16 %v1895
    %v1981 = vunpack.c.l.b16 %v1896
    %v1982 = vunpack.c.l.b16 %v1897
    %v1983 = vunpack.c.l.b16 %v1898
    %v1984 = vunpack.c.l.b16 %v1899
    %v1985 = vunpack.c.l.b16 %v1900
    %v1986 = vunpack.c.l.b16 %v1901
    %v1987 = vpack.c.b16 %v1972, %v1971
    %v1988 = vpack.c.b16 %v1974, %v1973
    %v1989 = vpack.c.b16 %v1976, %v1975
    %v1990 = vpack.c.b16 %v1978, %v1977
    %v1991 = vpack.c.b16 %v1980, %v1979
    %v1992 = vpack.c.b16 %v1982, %v1981
    %v1993 = vpack.c.b16 %v1984, %v1983
    %v1994 = vpack.c.b16 %v1986, %v1985
    %2003 = vmatprep.subr.bf16.mxu0 0
    %2004 = vmatpush1.bf16.msra.mxu0 %v1987
    %2005 = vmatprep.subr.bf16.mxu0 0
    %2006 = vmatpush1.bf16.msra.mxu0 %v1988
    %2007 = vmatprep.subr.bf16.mxu0 0
    %2008 = vmatpush1.bf16.msra.mxu0 %v1989
    %2009 = vmatprep.subr.bf16.mxu0 0
    %2010 = vmatpush1.bf16.msra.mxu0 %v1990
    %2011 = vmatprep.subr.bf16.mxu0 0
    %2012 = vmatpush1.bf16.msra.mxu0 %v1991
    %2013 = vmatprep.subr.bf16.mxu0 0
    %2014 = vmatpush1.bf16.msra.mxu0 %v1992
    %2015 = vmatprep.subr.bf16.mxu0 0
    %2016 = vmatpush1.bf16.msra.mxu0 %v1993
    %2017 = vmatprep.subr.bf16.mxu0 0
    %2018 = vmatpush1.bf16.msra.mxu0 %v1994
    %2019 = vmatprep.subr.bf16.mxu0 0
    %2020 = vmatpush1.bf16.msra.mxu0 0
    %2021 = vmatprep.subr.bf16.mxu0 0
    %2022 = vmatpush1.bf16.msra.mxu0 0
    %2023 = vmatprep.subr.bf16.mxu0 0
    %2024 = vmatpush1.bf16.msra.mxu0 0
    %2025 = vmatprep.subr.bf16.mxu0 0
    %2026 = vmatpush1.bf16.msra.mxu0 0
    %2027 = vmatprep.subr.bf16.mxu0 0
    %2028 = vmatpush1.bf16.msra.mxu0 0
    %2029 = vmatprep.subr.bf16.mxu0 0
    %2030 = vmatpush1.bf16.msra.mxu0 0
    %2031 = vmatprep.subr.bf16.mxu0 0
    %2032 = vmatpush1.bf16.msra.mxu0 0
    %2033 = vmatprep.subr.bf16.mxu0 0
    %2034 = vmatpush1.bf16.msra.mxu0 0
    %2035 = vmatprep.mubr.bf16.mxu0 0
    %2036 = vmatmul.mubr.bf16.gmra.mrb[0].mxu0 %v1953
    %v2037 = vpop.f32.mrb[0].mxu0
    %v2038 = vadd.f32 0.0, %v2037
    %v2039 = vpop.f32.mrb[0].mxu0
    %v2040 = vpop.f32.mrb[0].mxu0
    %v2041 = vadd.f32 0.0, %v2040
    %v2042 = vpop.f32.mrb[0].mxu0
    %2043 = vmatprep.mubr.bf16.mxu0 0
    %2044 = vmatmul.mubr.bf16.gmra.mrb[0].mxu0 %v1954
    %v2045 = vpop.f32.mrb[0].mxu0
    %v2046 = vadd.f32 0.0, %v2045
    %v2047 = vpop.f32.mrb[0].mxu0
    %v2048 = vpop.f32.mrb[0].mxu0
    %v2049 = vadd.f32 0.0, %v2048
    %v2050 = vpop.f32.mrb[0].mxu0
    %2051 = vdwg.mxu0
    %v2052 = vadd.f32 %v2038, %v2041
    %v2053 = vadd.f32 %v2052, %v2046
    %v2054 = vsel %vm644, %v2049, 0.0
    %v2055 = vadd.f32 %v2053, %v2054
    %v2056 = vrot.slane %v2055, 4
    %v2057 = vadd.f32 %v2055, %v2056
    %v2058 = vrot.slane %v2057, 2
    %v2059 = vadd.f32 %v2057, %v2058
    %v2060 = vrot.slane %v2059, 1
    %v2061 = vadd.f32 %v2059, %v2060
    %v2062 = vmul.f32 %v2061, 0.035714287
    %v2063 = vmul.f32 %v2038, %v2038
    %v2064 = vmul.f32 %v2041, %v2041
    %v2065 = vmul.f32 %v2046, %v2046
    %v2066 = vmul.f32 %v2049, %v2049
    %v2067 = vadd.f32 %v2063, %v2064
    %v2068 = vadd.f32 %v2067, %v2065
    %v2069 = vsel %vm644, %v2066, 0.0
    %v2070 = vadd.f32 %v2068, %v2069
    %v2071 = vrot.slane %v2070, 4
    %v2072 = vadd.f32 %v2070, %v2071
    %v2073 = vrot.slane %v2072, 2
    %v2074 = vadd.f32 %v2072, %v2073
    %v2075 = vrot.slane %v2074, 1
    %v2076 = vadd.f32 %v2074, %v2075
    %v2077 = vmul.f32 %v2076, 0.035714287
    %v2078 = vmul.f32 %v2062, %v2062
    %v2079 = vsub.f32 %v2077, %v2078
    %v2080 = vmax.f32 %v2079, 0.0
    %v2081 = vadd.f32 %v2080, 1e-05
    %v2082 = vrsqrt.pop %v2081
    %v2083 = vmul.f32 %v2082, %v1903
    %v2084 = vmul.f32 %v2062, %v2083
    %v2085 = vsub.f32 %v1905, %v2084
    %v2086 = vlaneseq
    %v2087 = vshrl.u32 %v2086, 7
    %v2088 = vsub.s32 0, %v2087
    %v2089 = vrot.slane %v2083, %v2088
    %v2090 = vmul.f32 %v2038, %v2089
    %v2091 = vmul.f32 %v2041, %v2089
    %v2092 = vmul.f32 %v2046, %v2089
    %v2093 = vmul.f32 %v2049, %v2089
    %v2095 = vlaneseq
    %v2096 = vshrl.u32 %v2095, 7
    %v2097 = vsub.s32 0, %v2096
    %v2098 = vrot.slane %v2085, %v2097
    %v2100 = vadd.f32 %v2090, %v2098
    %v2101 = vadd.f32 %v2091, %v2098
    %v2102 = vadd.f32 %v2092, %v2098
    %v2103 = vadd.f32 %v2093, %v2098
    %v2104 = vmax.f32 %v2100, 0.0
    %v2105 = vmax.f32 %v2101, 0.0
    %v2106 = vmax.f32 %v2102, 0.0
    %v2107 = vmax.f32 %v2103, 0.0
    %2108 = vst [vmem:[#allocation2 + $0x2] sm:$0xff] %v2104
    %2109 = vst [vmem:[#allocation2 + $0xa] sm:$0x3f] %v2105
    %2110 = vst [vmem:[%s304 - $0x4] sm:$0xc0] %v2105
    %2111 = vst [vmem:[%s304 + $0x4] sm:$0xff] %v2106
    %2112 = vst [vmem:[%s304 + $0xc] sm:$0xf] %v2107
    %s2113 = scalar_lea.vmem [#allocation10], 448
    %v2114 = vld [vmem:[%s2113] sm:$0xf]
    %v2115 = vld [vmem:[%s2113 + $0x4] sm:$0xf]
    %v2116 = vld [vmem:[%s2113 + $0x8] sm:$0xf]
    %v2117 = vld [vmem:[%s2113 + $0xc] sm:$0xf]
    %v2118 = vld [vmem:[%s2113 + $0x10] sm:$0xf]
    %v2119 = vld [vmem:[%s2113 + $0x14] sm:$0xf]
    %v2120 = vld [vmem:[%s2113 + $0x18] sm:$0xf]
    %v2121 = vld [vmem:[%s2113 + $0x1c] sm:$0xf]
    %v2122 = vld [vmem:[%s2113 + $0x20] sm:$0xf]
    %v2123 = vld [vmem:[%s2113 + $0x24] sm:$0xf]
    %v2124 = vld [vmem:[%s2113 + $0x28] sm:$0xf]
    %v2125 = vld [vmem:[%s2113 + $0x2c] sm:$0xf]
    %v2126 = vld [vmem:[%s2113 + $0x30] sm:$0xf]
    %v2127 = vld [vmem:[%s2113 + $0x34] sm:$0xf]
    %v2128 = vld [vmem:[%s2113 + $0x38] sm:$0xf]
    %v2129 = vld [vmem:[%s2113 + $0x3c] sm:$0xf]
    %s2130 = scalar_lea.vmem %s6, 7
    %v2131 = vld [vmem:[%s2130] sm:$0x1]
    %s2132 = scalar_lea.vmem %s7, 7
    %v2133 = vld [vmem:[%s2132] sm:$0x1]
    %v2134 = vld [vmem:[#allocation2 + $0x1] sm:$0xff]
    %v2135 = vld [vmem:[#allocation2 + $0x9] sm:$0x3f]
    %v2136 = vld [vmem:[%s304 + $0x1] sm:$0xff]
    %v2137 = vld [vmem:[%s304 + $0x9] sm:$0x3f]
    %v2140 = vrot.slane %v2136, 2
    %v2141 = vrot.slane %v2137, 2
    %v2142 = vsel %vm331, %v2140, %v2141
    %v2146 = vsel %vm331, %v2135, %v2140
    %v2147 = vld [vmem:[#allocation2 + $0x2] sm:$0xff]
    %v2148 = vld [vmem:[#allocation2 + $0xa] sm:$0x3f]
    %v2149 = vld [vmem:[%s304 + $0x2] sm:$0xff]
    %v2150 = vld [vmem:[%s304 + $0xa] sm:$0x3f]
    %v2153 = vrot.slane %v2149, 2
    %v2154 = vrot.slane %v2150, 2
    %v2155 = vsel %vm331, %v2153, %v2154
    %v2159 = vsel %vm331, %v2148, %v2153
    %v2160 = vld [vmem:[#allocation2 + $0x3] sm:$0xff]
    %v2161 = vld [vmem:[#allocation2 + $0xb] sm:$0x3f]
    %v2162 = vld [vmem:[%s304 + $0x3] sm:$0xff]
    %v2163 = vld [vmem:[%s304 + $0xb] sm:$0x3f]
    %v2166 = vrot.slane %v2162, 2
    %v2167 = vrot.slane %v2163, 2
    %v2168 = vsel %vm331, %v2166, %v2167
    %v2172 = vsel %vm331, %v2161, %v2166
    %v2173 = vsel %vm533, %v2147, %v2160
    %v2174 = vsel %vm533, %v2159, %v2172
    %v2175 = vsel %vm533, %v2155, %v2168
    %v2176 = vsel %vm533, %v2154, %v2167
    %v2177 = vsel %vm538, %v2134, %v2173
    %v2178 = vsel %vm538, %v2146, %v2174
    %v2179 = vsel %vm538, %v2142, %v2175
    %v2180 = vsel %vm538, %v2141, %v2176
    %v2181 = vpack.c.bf16 %v2178, %v2177
    %v2182 = vpack.c.bf16 %v2180, %v2179
    %v2199 = vunpack.c.l.b16 %v2114
    %v2200 = vunpack.c.l.b16 %v2115
    %v2201 = vunpack.c.l.b16 %v2116
    %v2202 = vunpack.c.l.b16 %v2117
    %v2203 = vunpack.c.l.b16 %v2118
    %v2204 = vunpack.c.l.b16 %v2119
    %v2205 = vunpack.c.l.b16 %v2120
    %v2206 = vunpack.c.l.b16 %v2121
    %v2207 = vunpack.c.l.b16 %v2122
    %v2208 = vunpack.c.l.b16 %v2123
    %v2209 = vunpack.c.l.b16 %v2124
    %v2210 = vunpack.c.l.b16 %v2125
    %v2211 = vunpack.c.l.b16 %v2126
    %v2212 = vunpack.c.l.b16 %v2127
    %v2213 = vunpack.c.l.b16 %v2128
    %v2214 = vunpack.c.l.b16 %v2129
    %v2215 = vpack.c.b16 %v2200, %v2199
    %v2216 = vpack.c.b16 %v2202, %v2201
    %v2217 = vpack.c.b16 %v2204, %v2203
    %v2218 = vpack.c.b16 %v2206, %v2205
    %v2219 = vpack.c.b16 %v2208, %v2207
    %v2220 = vpack.c.b16 %v2210, %v2209
    %v2221 = vpack.c.b16 %v2212, %v2211
    %v2222 = vpack.c.b16 %v2214, %v2213
    %2231 = vmatprep.subr.bf16.mxu0 0
    %2232 = vmatpush1.bf16.msra.mxu0 %v2215
    %2233 = vmatprep.subr.bf16.mxu0 0
    %2234 = vmatpush1.bf16.msra.mxu0 %v2216
    %2235 = vmatprep.subr.bf16.mxu0 0
    %2236 = vmatpush1.bf16.msra.mxu0 %v2217
    %2237 = vmatprep.subr.bf16.mxu0 0
    %2238 = vmatpush1.bf16.msra.mxu0 %v2218
    %2239 = vmatprep.subr.bf16.mxu0 0
    %2240 = vmatpush1.bf16.msra.mxu0 %v2219
    %2241 = vmatprep.subr.bf16.mxu0 0
    %2242 = vmatpush1.bf16.msra.mxu0 %v2220
    %2243 = vmatprep.subr.bf16.mxu0 0
    %2244 = vmatpush1.bf16.msra.mxu0 %v2221
    %2245 = vmatprep.subr.bf16.mxu0 0
    %2246 = vmatpush1.bf16.msra.mxu0 %v2222
    %2247 = vmatprep.subr.bf16.mxu0 0
    %2248 = vmatpush1.bf16.msra.mxu0 0
    %2249 = vmatprep.subr.bf16.mxu0 0
    %2250 = vmatpush1.bf16.msra.mxu0 0
    %2251 = vmatprep.subr.bf16.mxu0 0
    %2252 = vmatpush1.bf16.msra.mxu0 0
    %2253 = vmatprep.subr.bf16.mxu0 0
    %2254 = vmatpush1.bf16.msra.mxu0 0
    %2255 = vmatprep.subr.bf16.mxu0 0
    %2256 = vmatpush1.bf16.msra.mxu0 0
    %2257 = vmatprep.subr.bf16.mxu0 0
    %2258 = vmatpush1.bf16.msra.mxu0 0
    %2259 = vmatprep.subr.bf16.mxu0 0
    %2260 = vmatpush1.bf16.msra.mxu0 0
    %2261 = vmatprep.subr.bf16.mxu0 0
    %2262 = vmatpush1.bf16.msra.mxu0 0
    %2263 = vmatprep.mubr.bf16.mxu0 0
    %2264 = vmatmul.mubr.bf16.gmra.mrb[0].mxu0 %v2181
    %v2265 = vpop.f32.mrb[0].mxu0
    %v2266 = vadd.f32 0.0, %v2265
    %v2267 = vpop.f32.mrb[0].mxu0
    %v2268 = vpop.f32.mrb[0].mxu0
    %v2269 = vadd.f32 0.0, %v2268
    %v2270 = vpop.f32.mrb[0].mxu0
    %2271 = vmatprep.mubr.bf16.mxu0 0
    %2272 = vmatmul.mubr.bf16.gmra.mrb[0].mxu0 %v2182
    %v2273 = vpop.f32.mrb[0].mxu0
    %v2274 = vadd.f32 0.0, %v2273
    %v2275 = vpop.f32.mrb[0].mxu0
    %v2276 = vpop.f32.mrb[0].mxu0
    %v2277 = vadd.f32 0.0, %v2276
    %v2278 = vpop.f32.mrb[0].mxu0
    %2279 = vdwg.mxu0
    %v2280 = vadd.f32 %v2266, %v2269
    %v2281 = vadd.f32 %v2280, %v2274
    %v2282 = vsel %vm644, %v2277, 0.0
    %v2283 = vadd.f32 %v2281, %v2282
    %v2284 = vrot.slane %v2283, 4
    %v2285 = vadd.f32 %v2283, %v2284
    %v2286 = vrot.slane %v2285, 2
    %v2287 = vadd.f32 %v2285, %v2286
    %v2288 = vrot.slane %v2287, 1
    %v2289 = vadd.f32 %v2287, %v2288
    %v2290 = vmul.f32 %v2289, 0.035714287
    %v2291 = vmul.f32 %v2266, %v2266
    %v2292 = vmul.f32 %v2269, %v2269
    %v2293 = vmul.f32 %v2274, %v2274
    %v2294 = vmul.f32 %v2277, %v2277
    %v2295 = vadd.f32 %v2291, %v2292
    %v2296 = vadd.f32 %v2295, %v2293
    %v2297 = vsel %vm644, %v2294, 0.0
    %v2298 = vadd.f32 %v2296, %v2297
    %v2299 = vrot.slane %v2298, 4
    %v2300 = vadd.f32 %v2298, %v2299
    %v2301 = vrot.slane %v2300, 2
    %v2302 = vadd.f32 %v2300, %v2301
    %v2303 = vrot.slane %v2302, 1
    %v2304 = vadd.f32 %v2302, %v2303
    %v2305 = vmul.f32 %v2304, 0.035714287
    %v2306 = vmul.f32 %v2290, %v2290
    %v2307 = vsub.f32 %v2305, %v2306
    %v2308 = vmax.f32 %v2307, 0.0
    %v2309 = vadd.f32 %v2308, 1e-05
    %v2310 = vrsqrt.pop %v2309
    %v2311 = vmul.f32 %v2310, %v2131
    %v2312 = vmul.f32 %v2290, %v2311
    %v2313 = vsub.f32 %v2133, %v2312
    %v2314 = vlaneseq
    %v2315 = vshrl.u32 %v2314, 7
    %v2316 = vsub.s32 0, %v2315
    %v2317 = vrot.slane %v2311, %v2316
    %v2318 = vmul.f32 %v2266, %v2317
    %v2319 = vmul.f32 %v2269, %v2317
    %v2320 = vmul.f32 %v2274, %v2317
    %v2321 = vmul.f32 %v2277, %v2317
    %v2323 = vlaneseq
    %v2324 = vshrl.u32 %v2323, 7
    %v2325 = vsub.s32 0, %v2324
    %v2326 = vrot.slane %v2313, %v2325
    %v2328 = vadd.f32 %v2318, %v2326
    %v2329 = vadd.f32 %v2319, %v2326
    %v2330 = vadd.f32 %v2320, %v2326
    %v2331 = vadd.f32 %v2321, %v2326
    %v2332 = vld [vmem:[#allocation3 + $0x2] sm:$0xff]
    %v2333 = vld [vmem:[#allocation3 + $0xa] sm:$0x3f]
    %v2334 = vld [vmem:[%s472 + $0x2] sm:$0xff]
    %v2335 = vld [vmem:[%s472 + $0xa] sm:$0x3f]
    %v2338 = vrot.slane %v2334, 2
    %v2339 = vrot.slane %v2335, 2
    %v2340 = vsel %vm331, %v2338, %v2339
    %v2344 = vsel %vm331, %v2333, %v2338
    %v2345 = vadd.f32 %v2328, %v2332
    %v2346 = vadd.f32 %v2329, %v2344
    %v2347 = vadd.f32 %v2330, %v2340
    %v2348 = vadd.f32 %v2331, %v2339
    %2349 = vst [vmem:[#allocation3 + $0x2] sm:$0xff] %v2345
    %2350 = vst [vmem:[#allocation3 + $0xa] sm:$0x3f] %v2346
    %2351 = vst [vmem:[%s472 - $0x4] sm:$0xc0] %v2346
    %2352 = vst [vmem:[%s472 + $0x4] sm:$0xff] %v2347
    %2353 = vst [vmem:[%s472 + $0xc] sm:$0xf] %v2348
    %v2354 = vld [vmem:[#allocation12] sm:$0xf]
    %v2355 = vld [vmem:[#allocation12 + $0x4] sm:$0xf]
    %v2356 = vld [vmem:[#allocation12 + $0x8] sm:$0xf]
    %v2357 = vld [vmem:[#allocation12 + $0xc] sm:$0xf]
    %v2358 = vld [vmem:[#allocation12 + $0x10] sm:$0xf]
    %v2359 = vld [vmem:[#allocation12 + $0x14] sm:$0xf]
    %v2360 = vld [vmem:[#allocation12 + $0x18] sm:$0xf]
    %v2361 = vld [vmem:[#allocation12 + $0x1c] sm:$0xf]
    %v2362 = vld [vmem:[#allocation12 + $0x20] sm:$0xf]
    %v2363 = vld [vmem:[#allocation12 + $0x24] sm:$0xf]
    %v2364 = vld [vmem:[#allocation12 + $0x28] sm:$0xf]
    %v2365 = vld [vmem:[#allocation12 + $0x2c] sm:$0xf]
    %v2366 = vld [vmem:[#allocation12 + $0x30] sm:$0xf]
    %v2367 = vld [vmem:[#allocation12 + $0x34] sm:$0xf]
    %v2368 = vld [vmem:[#allocation12 + $0x38] sm:$0xf]
    %v2369 = vld [vmem:[#allocation12 + $0x3c] sm:$0xf]
    %v2370 = vld [vmem:[%s9] sm:$0x1]
    %v2371 = vld [vmem:[%s10] sm:$0x1]
    %v2372 = vld [vmem:[#allocation3 + $0x1] sm:$0xff]
    %v2373 = vld [vmem:[#allocation3 + $0x9] sm:$0x3f]
    %v2374 = vld [vmem:[%s472 + $0x1] sm:$0xff]
    %v2375 = vld [vmem:[%s472 + $0x9] sm:$0x3f]
    %v2378 = vrot.slane %v2374, 2
    %v2379 = vrot.slane %v2375, 2
    %v2380 = vsel %vm331, %v2378, %v2379
    %v2384 = vsel %vm331, %v2373, %v2378
    %v2385 = vld [vmem:[#allocation3 + $0x2] sm:$0xff]
    %v2386 = vld [vmem:[#allocation3 + $0xa] sm:$0x3f]
    %v2387 = vld [vmem:[%s472 + $0x2] sm:$0xff]
    %v2388 = vld [vmem:[%s472 + $0xa] sm:$0x3f]
    %v2391 = vrot.slane %v2387, 2
    %v2392 = vrot.slane %v2388, 2
    %v2393 = vsel %vm331, %v2391, %v2392
    %v2397 = vsel %vm331, %v2386, %v2391
    %v2398 = vld [vmem:[#allocation3 + $0x3] sm:$0xff]
    %v2399 = vld [vmem:[#allocation3 + $0xb] sm:$0x3f]
    %v2400 = vld [vmem:[%s472 + $0x3] sm:$0xff]
    %v2401 = vld [vmem:[%s472 + $0xb] sm:$0x3f]
    %v2404 = vrot.slane %v2400, 2
    %v2405 = vrot.slane %v2401, 2
    %v2406 = vsel %vm331, %v2404, %v2405
    %v2410 = vsel %vm331, %v2399, %v2404
    %v2411 = vsel %vm533, %v2385, %v2398
    %v2412 = vsel %vm533, %v2397, %v2410
    %v2413 = vsel %vm533, %v2393, %v2406
    %v2414 = vsel %vm533, %v2392, %v2405
    %v2415 = vsel %vm538, %v2372, %v2411
    %v2416 = vsel %vm538, %v2384, %v2412
    %v2417 = vsel %vm538, %v2380, %v2413
    %v2418 = vsel %vm538, %v2379, %v2414
    %v2419 = vpack.c.bf16 %v2416, %v2415
    %v2420 = vpack.c.bf16 %v2418, %v2417
    %v2437 = vunpack.c.l.b16 %v2354
    %v2438 = vunpack.c.l.b16 %v2355
    %v2439 = vunpack.c.l.b16 %v2356
    %v2440 = vunpack.c.l.b16 %v2357
    %v2441 = vunpack.c.l.b16 %v2358
    %v2442 = vunpack.c.l.b16 %v2359
    %v2443 = vunpack.c.l.b16 %v2360
    %v2444 = vunpack.c.l.b16 %v2361
    %v2445 = vunpack.c.l.b16 %v2362
    %v2446 = vunpack.c.l.b16 %v2363
    %v2447 = vunpack.c.l.b16 %v2364
    %v2448 = vunpack.c.l.b16 %v2365
    %v2449 = vunpack.c.l.b16 %v2366
    %v2450 = vunpack.c.l.b16 %v2367
    %v2451 = vunpack.c.l.b16 %v2368
    %v2452 = vunpack.c.l.b16 %v2369
    %v2453 = vpack.c.b16 %v2438, %v2437
    %v2454 = vpack.c.b16 %v2440, %v2439
    %v2455 = vpack.c.b16 %v2442, %v2441
    %v2456 = vpack.c.b16 %v2444, %v2443
    %v2457 = vpack.c.b16 %v2446, %v2445
    %v2458 = vpack.c.b16 %v2448, %v2447
    %v2459 = vpack.c.b16 %v2450, %v2449
    %v2460 = vpack.c.b16 %v2452, %v2451
    %2469 = vmatprep.subr.bf16.mxu0 0
    %2470 = vmatpush1.bf16.msra.mxu0 %v2453
    %2471 = vmatprep.subr.bf16.mxu0 0
    %2472 = vmatpush1.bf16.msra.mxu0 %v2454
    %2473 = vmatprep.subr.bf16.mxu0 0
    %2474 = vmatpush1.bf16.msra.mxu0 %v2455
    %2475 = vmatprep.subr.bf16.mxu0 0
    %2476 = vmatpush1.bf16.msra.mxu0 %v2456
    %2477 = vmatprep.subr.bf16.mxu0 0
    %2478 = vmatpush1.bf16.msra.mxu0 %v2457
    %2479 = vmatprep.subr.bf16.mxu0 0
    %2480 = vmatpush1.bf16.msra.mxu0 %v2458
    %2481 = vmatprep.subr.bf16.mxu0 0
    %2482 = vmatpush1.bf16.msra.mxu0 %v2459
    %2483 = vmatprep.subr.bf16.mxu0 0
    %2484 = vmatpush1.bf16.msra.mxu0 %v2460
    %2485 = vmatprep.subr.bf16.mxu0 0
    %2486 = vmatpush1.bf16.msra.mxu0 0
    %2487 = vmatprep.subr.bf16.mxu0 0
    %2488 = vmatpush1.bf16.msra.mxu0 0
    %2489 = vmatprep.subr.bf16.mxu0 0
    %2490 = vmatpush1.bf16.msra.mxu0 0
    %2491 = vmatprep.subr.bf16.mxu0 0
    %2492 = vmatpush1.bf16.msra.mxu0 0
    %2493 = vmatprep.subr.bf16.mxu0 0
    %2494 = vmatpush1.bf16.msra.mxu0 0
    %2495 = vmatprep.subr.bf16.mxu0 0
    %2496 = vmatpush1.bf16.msra.mxu0 0
    %2497 = vmatprep.subr.bf16.mxu0 0
    %2498 = vmatpush1.bf16.msra.mxu0 0
    %2499 = vmatprep.subr.bf16.mxu0 0
    %2500 = vmatpush1.bf16.msra.mxu0 0
    %2501 = vmatprep.mubr.bf16.mxu0 0
    %2502 = vmatmul.mubr.bf16.gmra.mrb[0].mxu0 %v2419
    %v2503 = vpop.f32.mrb[0].mxu0
    %v2504 = vadd.f32 0.0, %v2503
    %v2505 = vpop.f32.mrb[0].mxu0
    %v2506 = vpop.f32.mrb[0].mxu0
    %v2507 = vadd.f32 0.0, %v2506
    %v2508 = vpop.f32.mrb[0].mxu0
    %2509 = vmatprep.mubr.bf16.mxu0 0
    %2510 = vmatmul.mubr.bf16.gmra.mrb[0].mxu0 %v2420
    %v2511 = vpop.f32.mrb[0].mxu0
    %v2512 = vadd.f32 0.0, %v2511
    %v2513 = vpop.f32.mrb[0].mxu0
    %v2514 = vpop.f32.mrb[0].mxu0
    %v2515 = vadd.f32 0.0, %v2514
    %v2516 = vpop.f32.mrb[0].mxu0
    %2517 = vdwg.mxu0
    %v2518 = vadd.f32 %v2504, %v2507
    %v2519 = vadd.f32 %v2518, %v2512
    %v2520 = vsel %vm644, %v2515, 0.0
    %v2521 = vadd.f32 %v2519, %v2520
    %v2522 = vrot.slane %v2521, 4
    %v2523 = vadd.f32 %v2521, %v2522
    %v2524 = vrot.slane %v2523, 2
    %v2525 = vadd.f32 %v2523, %v2524
    %v2526 = vrot.slane %v2525, 1
    %v2527 = vadd.f32 %v2525, %v2526
    %v2528 = vmul.f32 %v2527, 0.035714287
    %v2529 = vmul.f32 %v2504, %v2504
    %v2530 = vmul.f32 %v2507, %v2507
    %v2531 = vmul.f32 %v2512, %v2512
    %v2532 = vmul.f32 %v2515, %v2515
    %v2533 = vadd.f32 %v2529, %v2530
    %v2534 = vadd.f32 %v2533, %v2531
    %v2535 = vsel %vm644, %v2532, 0.0
    %v2536 = vadd.f32 %v2534, %v2535
    %v2537 = vrot.slane %v2536, 4
    %v2538 = vadd.f32 %v2536, %v2537
    %v2539 = vrot.slane %v2538, 2
    %v2540 = vadd.f32 %v2538, %v2539
    %v2541 = vrot.slane %v2540, 1
    %v2542 = vadd.f32 %v2540, %v2541
    %v2543 = vmul.f32 %v2542, 0.035714287
    %v2544 = vmul.f32 %v2528, %v2528
    %v2545 = vsub.f32 %v2543, %v2544
    %v2546 = vmax.f32 %v2545, 0.0
    %v2547 = vadd.f32 %v2546, 1e-05
    %v2548 = vrsqrt.pop %v2547
    %v2549 = vmul.f32 %v2548, %v2370
    %v2550 = vmul.f32 %v2528, %v2549
    %v2551 = vsub.f32 %v2371, %v2550
    %v2552 = vlaneseq
    %v2553 = vshrl.u32 %v2552, 7
    %v2554 = vsub.s32 0, %v2553
    %v2555 = vrot.slane %v2549, %v2554
    %v2556 = vmul.f32 %v2504, %v2555
    %v2557 = vmul.f32 %v2507, %v2555
    %v2558 = vmul.f32 %v2512, %v2555
    %v2559 = vmul.f32 %v2515, %v2555
    %v2561 = vlaneseq
    %v2562 = vshrl.u32 %v2561, 7
    %v2563 = vsub.s32 0, %v2562
    %v2564 = vrot.slane %v2551, %v2563
    %v2566 = vadd.f32 %v2556, %v2564
    %v2567 = vadd.f32 %v2557, %v2564
    %v2568 = vadd.f32 %v2558, %v2564
    %v2569 = vadd.f32 %v2559, %v2564
    %v2570 = vmax.f32 %v2566, 0.0
    %v2571 = vmax.f32 %v2567, 0.0
    %v2572 = vmax.f32 %v2568, 0.0
    %v2573 = vmax.f32 %v2569, 0.0
    %2574 = vst [vmem:[#allocation2 + $0x2] sm:$0xff] %v2570
    %2575 = vst [vmem:[#allocation2 + $0xa] sm:$0x3f] %v2571
    %2576 = vst [vmem:[%s304 - $0x4] sm:$0xc0] %v2571
    %2577 = vst [vmem:[%s304 + $0x4] sm:$0xff] %v2572
    %2578 = vst [vmem:[%s304 + $0xc] sm:$0xf] %v2573
    %v2579 = vld [vmem:[#allocation13] sm:$0xf]
    %v2580 = vld [vmem:[#allocation13 + $0x4] sm:$0xf]
    %v2581 = vld [vmem:[#allocation13 + $0x8] sm:$0xf]
    %v2582 = vld [vmem:[#allocation13 + $0xc] sm:$0xf]
    %v2583 = vld [vmem:[#allocation13 + $0x10] sm:$0xf]
    %v2584 = vld [vmem:[#allocation13 + $0x14] sm:$0xf]
    %v2585 = vld [vmem:[#allocation13 + $0x18] sm:$0xf]
    %v2586 = vld [vmem:[#allocation13 + $0x1c] sm:$0xf]
    %v2587 = vld [vmem:[#allocation13 + $0x20] sm:$0xf]
    %v2588 = vld [vmem:[#allocation13 + $0x24] sm:$0xf]
    %v2589 = vld [vmem:[#allocation13 + $0x28] sm:$0xf]
    %v2590 = vld [vmem:[#allocation13 + $0x2c] sm:$0xf]
    %v2591 = vld [vmem:[#allocation13 + $0x30] sm:$0xf]
    %v2592 = vld [vmem:[#allocation13 + $0x34] sm:$0xf]
    %v2593 = vld [vmem:[#allocation13 + $0x38] sm:$0xf]
    %v2594 = vld [vmem:[#allocation13 + $0x3c] sm:$0xf]
    %v2595 = vld [vmem:[#allocation2] sm:$0xff]
    %v2596 = vld [vmem:[#allocation2 + $0x8] sm:$0xff]
    %v2597 = vld [vmem:[%s304] sm:$0xff]
    %v2598 = vld [vmem:[%s304 + $0x8] sm:$0xff]
    %v2599 = vld [vmem:[#allocation2 + $0x1] sm:$0xff]
    %v2600 = vld [vmem:[#allocation2 + $0x9] sm:$0xff]
    %v2601 = vld [vmem:[%s304 + $0x1] sm:$0xff]
    %v2602 = vld [vmem:[%s304 + $0x9] sm:$0xff]
    %v2603 = vld [vmem:[#allocation2 + $0x2] sm:$0xff]
    %v2604 = vld [vmem:[#allocation2 + $0xa] sm:$0xff]
    %v2605 = vld [vmem:[%s304 + $0x2] sm:$0xff]
    %v2606 = vld [vmem:[%s304 + $0xa] sm:$0xff]
    %v2607 = vsel %vm538, %v2599, %v2603
    %v2608 = vsel %vm538, %v2600, %v2604
    %v2609 = vsel %vm538, %v2601, %v2605
    %v2610 = vsel %vm538, %v2602, %v2606
    %v2611 = vsel %vm352, %v2595, %v2607
    %v2612 = vsel %vm352, %v2596, %v2608
    %v2613 = vsel %vm352, %v2597, %v2609
    %v2614 = vsel %vm352, %v2598, %v2610
    %v2615 = vpack.c.bf16 %v2612, %v2611
    %v2616 = vpack.c.bf16 %v2614, %v2613
    %v2633 = vunpack.c.l.b16 %v2579
    %v2634 = vunpack.c.l.b16 %v2580
    %v2635 = vunpack.c.l.b16 %v2581
    %v2636 = vunpack.c.l.b16 %v2582
    %v2637 = vunpack.c.l.b16 %v2583
    %v2638 = vunpack.c.l.b16 %v2584
    %v2639 = vunpack.c.l.b16 %v2585
    %v2640 = vunpack.c.l.b16 %v2586
    %v2641 = vunpack.c.l.b16 %v2587
    %v2642 = vunpack.c.l.b16 %v2588
    %v2643 = vunpack.c.l.b16 %v2589
    %v2644 = vunpack.c.l.b16 %v2590
    %v2645 = vunpack.c.l.b16 %v2591
    %v2646 = vunpack.c.l.b16 %v2592
    %v2647 = vunpack.c.l.b16 %v2593
    %v2648 = vunpack.c.l.b16 %v2594
    %v2649 = vpack.c.b16 %v2634, %v2633
    %v2650 = vpack.c.b16 %v2636, %v2635
    %v2651 = vpack.c.b16 %v2638, %v2637
    %v2652 = vpack.c.b16 %v2640, %v2639
    %v2653 = vpack.c.b16 %v2642, %v2641
    %v2654 = vpack.c.b16 %v2644, %v2643
    %v2655 = vpack.c.b16 %v2646, %v2645
    %v2656 = vpack.c.b16 %v2648, %v2647
    %2665 = vmatprep.subr.bf16.mxu0 0
    %2666 = vmatpush1.bf16.msra.mxu0 %v2649
    %2667 = vmatprep.subr.bf16.mxu0 0
    %2668 = vmatpush1.bf16.msra.mxu0 %v2650
    %2669 = vmatprep.subr.bf16.mxu0 0
    %2670 = vmatpush1.bf16.msra.mxu0 %v2651
    %2671 = vmatprep.subr.bf16.mxu0 0
    %2672 = vmatpush1.bf16.msra.mxu0 %v2652
    %2673 = vmatprep.subr.bf16.mxu0 0
    %2674 = vmatpush1.bf16.msra.mxu0 %v2653
    %2675 = vmatprep.subr.bf16.mxu0 0
    %2676 = vmatpush1.bf16.msra.mxu0 %v2654
    %2677 = vmatprep.subr.bf16.mxu0 0
    %2678 = vmatpush1.bf16.msra.mxu0 %v2655
    %2679 = vmatprep.subr.bf16.mxu0 0
    %2680 = vmatpush1.bf16.msra.mxu0 %v2656
    %2681 = vmatprep.subr.bf16.mxu0 0
    %2682 = vmatpush1.bf16.msra.mxu0 0
    %2683 = vmatprep.subr.bf16.mxu0 0
    %2684 = vmatpush1.bf16.msra.mxu0 0
    %2685 = vmatprep.subr.bf16.mxu0 0
    %2686 = vmatpush1.bf16.msra.mxu0 0
    %2687 = vmatprep.subr.bf16.mxu0 0
    %2688 = vmatpush1.bf16.msra.mxu0 0
    %2689 = vmatprep.subr.bf16.mxu0 0
    %2690 = vmatpush1.bf16.msra.mxu0 0
    %2691 = vmatprep.subr.bf16.mxu0 0
    %2692 = vmatpush1.bf16.msra.mxu0 0
    %2693 = vmatprep.subr.bf16.mxu0 0
    %2694 = vmatpush1.bf16.msra.mxu0 0
    %2695 = vmatprep.subr.bf16.mxu0 0
    %2696 = vmatpush1.bf16.msra.mxu0 0
    %2697 = vmatprep.mubr.bf16.mxu0 0
    %2698 = vmatmul.mubr.bf16.gmra.mrb[0].mxu0 %v2615
    %v2699 = vpop.f32.mrb[0].mxu0
    %v2700 = vadd.f32 0.0, %v2699
    %v2701 = vpop.f32.mrb[0].mxu0
    %v2702 = vpop.f32.mrb[0].mxu0
    %v2703 = vadd.f32 0.0, %v2702
    %v2704 = vpop.f32.mrb[0].mxu0
    %2705 = vmatprep.mubr.bf16.mxu0 0
    %2706 = vmatmul.mubr.bf16.gmra.mrb[0].mxu0 %v2616
    %v2707 = vpop.f32.mrb[0].mxu0
    %v2708 = vadd.f32 0.0, %v2707
    %v2709 = vpop.f32.mrb[0].mxu0
    %v2710 = vpop.f32.mrb[0].mxu0
    %v2711 = vadd.f32 0.0, %v2710
    %v2712 = vpop.f32.mrb[0].mxu0
    %2713 = vdwg.mxu0
    %v2714 = vtanh.pop %v2700
    %v2715 = vtanh.pop %v2703
    %v2716 = vtanh.pop %v2708
    %v2717 = vtanh.pop %v2711
    %2718 = vst [vmem:[#allocation15] sm:$0xff] %v2714
    %2719 = vst [vmem:[#allocation15 + $0x8] sm:$0xff] %v2715
    %s2720 = scalar_lea.vmem [#allocation15], 16
    %2721 = vst [vmem:[%s2720] sm:$0xff] %v2716
    %2722 = vst [vmem:[%s2720 + $0x8] sm:$0xff] %v2717
    // Predicated region
    $region74: #{tpu_custom_call.1} parent=1 // pred_check
      _
    $region75: #{tpu_custom_call.1} parent=1 // pred_check_branch
      %2724 = sbr.rel (0) target = $region77
    $region76: #{tpu_custom_call.1} parent=1 // pred_region
      %s2726 = ssub.s32 512, 512
      %2727 = vsyncadd [#allocation6], %s2726
      %s2728 = sshll.u32 [#allocation15], 4
      %s2729 = int_to_ptr.vmem [resolvable:$true] %s2728
      %2734 = dma.vmem_to_hbm [thread:$0]  %s2729, 512, %s12, [#allocation6], 128, 128, 8
    $region77: #{tpu_custom_call.1} parent=1 // pred_fallthru
      _
    // Predicated region
    $region78: #{tpu_custom_call.1} parent=1 // pred_check
      _
    $region79: #{tpu_custom_call.1} parent=1 // pred_check_branch
      %2736 = sbr.rel (0) target = $region81
    $region80: #{tpu_custom_call.1} parent=1 // pred_region
      %2737 = dma.done [#allocation6], 512
    $region81: #{tpu_custom_call.1} parent=1 // pred_fallthru
      _
    %2738 = vsyncpa [#allocation5], 1
    %2739 = vsyncpa [#allocation8], 1
    %2740 = vsyncpa [#allocation11], 1
    %2741 = vsyncpa [#allocation14], 1
    %2742 = vsyncpa [#allocation6], 1

</llo_original>
